<compile_context>
chip_gen: v7x
topology: tpu7x:2x2x1
jax: 0.10.0
libtpu: 0.0.40
codegen_flags: <defaults>
</compile_context>

<pallas_src>
import functools

import numpy as np
import jax
import jax.numpy as jnp
from jax.experimental import pallas as pl
from jax.experimental.pallas import tpu as pltpu


_SLOPE = 0.01                     # torch LeakyReLU default negative_slope
_EPS = 1e-5                       # torch BatchNorm2d default eps
_VMEM_LIMIT = 48 * 1024 * 1024    # fits v7x's 64 MiB VMEM with headroom


# ----------------------------------------------------------------------------
# In-kernel helpers
# ----------------------------------------------------------------------------
def _leaky(z, slope):
    return jnp.where(z >= 0.0, z, z * slope)


def _mat_fma(w, x):
    """(N, K) @ (K, M) as K broadcast-FMAs on the VPU (N, K <= 20 here)."""
    acc = w[:, 0:1] * x[0:1, :]
    for kk in range(1, w.shape[1]):
        acc = acc + w[:, kk:kk + 1] * x[kk:kk + 1, :]
    return acc


def _bn(y, gamma, beta, cnt, eps):
    """torch BatchNorm2d training-mode: batch stats over (N,H,W), biased var."""
    mean = jnp.sum(y, axis=1, keepdims=True) * (1.0 / cnt)
    ex2 = jnp.sum(y * y, axis=1, keepdims=True) * (1.0 / cnt)
    var = jnp.maximum(ex2 - mean * mean, 0.0)       # clamp tiny negative drift
    scale = gamma * jax.lax.rsqrt(var + eps)
    return y * scale + (beta - mean * scale)


def _bn_act(y, gamma, beta, cnt, eps, slope):
    return _leaky(_bn(y, gamma, beta, cnt, eps), slope)


# ----------------------------------------------------------------------------
# The single fused kernel
# ----------------------------------------------------------------------------
def _pcblock_kernel(x_ref, tab_ref, w1_ref, pa_ref, a_ref, w2_ref, pb_ref,
                    wf3_ref, w3_ref, pc_ref, se1_ref, wfc2_ref, o_ref,
                    *, B, W, HW, slope, eps):
    cin = x_ref.shape[0]
    cout = o_ref.shape[0]
    M = x_ref.shape[1]
    cnt = float(M)

    x = x_ref[...]                       # (Cin, M) original block input
    tab = tab_ref[...]                   # (11, M): 9 tap masks, h_even, w_even
    pa = pa_ref[...]                     # (C1, 3): b1, g1, be1
    pb = pb_ref[...]                     # (Cin, 8): b2,g2,be2,bf,gf,bef,gn,ben
    pc = pc_ref[...]                     # (Cout,6): b3,g3,be3,bfc2,gse,bese

    # ---- conv1 (1x1) + BN1 + LeakyReLU ------------------------------------
    y = _bn_act(_mat_fma(w1_ref[...], x) + pa[:, 0:1],
                pa[:, 1:2], pa[:, 2:3], cnt, eps, slope)      # (C1, M)

    # ---- channel shuffle average (fixed mixing matrix) --------------------
    u = _mat_fma(a_ref[...], y)                               # (Cin, M)

    # ---- depthwise 3x3 (zero pad=1) via lane rolls + masks + BN2 + act ----
    w2 = w2_ref[...]                                          # (Cin, 9)
    acc = None
    tap = 0
    for dh in (-1, 0, 1):
        for dw in (-1, 0, 1):
            d = dh * W + dw
            t = u if d == 0 else pltpu.roll(u, shift=(-d) % M, axis=1)
            if d != 0:
                t = t * tab[tap:tap + 1, :]     # zero-pad + cross-image guard
            term = w2[:, tap:tap + 1] * t
            acc = term if acc is None else acc + term
            tap += 1
    v = _bn_act(acc + pb[:, 0:1], pb[:, 1:2], pb[:, 2:3], cnt, eps, slope)

    # ---- FEC = PCLayer(k=3): branches + 1x1 conv + BNf + LeakyReLU --------
    # Branch set [z, Up(AvgPool2(z)), z, Up(MaxPool2(z)), z] (AvgPool(Up(z)) ==
    # MaxPool(Up(z)) == z for nearest 2x); the 5x concat is never materialized,
    # its 1x1 weight was pre-split per branch in the wrapper.
    h_par = tab[9:10, :]                          # 1.0 where h is even
    w_par = tab[10:11, :]                         # 1.0 where w is even
    right = pltpu.roll(v, shift=M - 1, axis=1)    # v[:, l + 1]
    left = pltpu.roll(v, shift=1, axis=1)         # v[:, l - 1]
    nbr = w_par * right + (1.0 - w_par) * left    # 2x2 w-pair partner
    ps = v + nbr
    pm = jnp.maximum(v, nbr)
    dn_s = pltpu.roll(ps, shift=M - W, axis=1)    # ps[:, l + W]
    up_s = pltpu.roll(ps, shift=W, axis=1)        # ps[:, l - W]
    avg_up = 0.25 * (ps + h_par * dn_s + (1.0 - h_par) * up_s)
    dn_m = pltpu.roll(pm, shift=M - W, axis=1)
    up_m = pltpu.roll(pm, shift=W, axis=1)
    max_up = jnp.maximum(pm, h_par * dn_m + (1.0 - h_par) * up_m)
    wf3 = wf3_ref[...]                            # (Cin, 3*Cin): [wz|wa|wm]
    y4 = (_mat_fma(wf3[:, 0:cin], v)
          + _mat_fma(wf3[:, cin:2 * cin], avg_up)
          + _mat_fma(wf3[:, 2 * cin:3 * cin], max_up) + pb[:, 3:4])
    y4 = _bn_act(y4, pb[:, 4:5], pb[:, 5:6], cnt, eps, slope)

    # ---- residual add + BN (no activation) --------------------------------
    x5 = _bn(y4 + x, pb[:, 6:7], pb[:, 7:8], cnt, eps)

    # ---- conv3 (1x1) + BN3 + LeakyReLU ------------------------------------
    x6 = _bn_act(_mat_fma(w3_ref[...], x5) + pc[:, 0:1],
                 pc[:, 1:2], pc[:, 2:3], cnt, eps, slope)     # (Cout, M)

    # ---- SE: per-image GAP -> fc1 -> act -> fc2 -> exact sigmoid ----------
    se1 = se1_ref[...]                            # (Cr, Cout+1): [wfc1 | bfc1]
    wfc1 = se1[:, 0:cout]
    bfc1 = se1[:, cout:cout + 1]
    wfc2 = wfc2_ref[...]                          # (Cout, Cr)
    gates = []
    s_g = jnp.zeros((cout, 1), jnp.float32)       # sum_b gate_b   * sum_hw x6
    q_g = jnp.zeros((cout, 1), jnp.float32)       # sum_b gate_b^2 * sum_hw x6^2
    for b in range(B):                            # B is small & static
        xb = x6[:, b * HW:(b + 1) * HW]           # lane-aligned slice
        s_b = jnp.sum(xb, axis=1, keepdims=True)
        q_b = jnp.sum(xb * xb, axis=1, keepdims=True)
        gap_b = s_b * (1.0 / HW)
        h_b = _leaky(_mat_fma(wfc1, gap_b) + bfc1, slope)
        g_b = _mat_fma(wfc2, h_b) + pc[:, 3:4]
        g_b = 1.0 / (1.0 + jnp.exp(-g_b))         # exact sigmoid
        gates.append(g_b)
        s_g = s_g + g_b * s_b
        q_g = q_g + g_b * g_b * q_b

    # ---- SE BatchNorm of (x6 * gate): analytic batch stats ----------------
    mean = s_g * (1.0 / cnt)
    var = jnp.maximum(q_g * (1.0 / cnt) - mean * mean, 0.0)
    scale = pc[:, 4:5] * jax.lax.rsqrt(var + eps)
    shift = pc[:, 5:6] - mean * scale

    # ---- final: (x6 * gate) * bn_scale + bn_shift -> LeakyReLU -------------
    for b in range(B):
        cs = gates[b] * scale                     # gate folded into BN scale
        o_ref[:, pl.ds(b * HW, HW)] = _leaky(
            x6[:, b * HW:(b + 1) * HW] * cs + shift, slope)


# ----------------------------------------------------------------------------
# Trace-time constant tables
# ----------------------------------------------------------------------------
def shuffle_avg_matrix(n_filts, cpg):
    # Chanel_shuffle_ave as a fixed (n_filts, n_filts*cpg) mixing matrix
    # (channel-major: out = A @ in); exact index trace of the torch
    # view/transpose/view/mean sequence.
    c = n_filts * cpg
    a = np.zeros((n_filts, c), dtype=np.float32)
    for out_ch in range(n_filts):
        for j in range(cpg):
            idx = out_ch * cpg + j
            g, m = idx % n_filts, idx // n_filts
            a[out_ch, g * cpg + m] += 1.0 / cpg
    return jnp.asarray(a)


def spatial_table(B, H, W):
    # Rows 0..8: in-bounds masks for the zero-padded depthwise 3x3 taps
    # (dh-major tap order, matching conv2.weight.reshape(C, 9)).
    # Row 9: 1.0 where h is even; row 10: 1.0 where w is even.
    # Tiled across B since the column ordering of (C, B*H*W) is (b, h, w).
    hh, ww = np.meshgrid(np.arange(H), np.arange(W), indexing="ij")
    hh = hh.reshape(-1)
    ww = ww.reshape(-1)
    rows = []
    for dh in (-1, 0, 1):
        for dw in (-1, 0, 1):
            m = ((hh + dh >= 0) & (hh + dh < H) & (ww + dw >= 0) & (ww + dw < W))
            rows.append(m.astype(np.float32))
    rows.append((hh % 2 == 0).astype(np.float32))
    rows.append((ww % 2 == 0).astype(np.float32))
    tab = np.stack(rows, axis=0)                  # (11, H*W)
    return jnp.asarray(np.tile(tab, (1, B)))      # (11, B*H*W)


# ----------------------------------------------------------------------------
# Parameters + forward pass
# ----------------------------------------------------------------------------
def _f32(a):
    return jnp.asarray(a, jnp.float32)


def _full_spec(shape):            # full-array VMEM block (single grid step)
    return pl.BlockSpec(shape, lambda i: (0, 0))


def init_params(key, n_filts, out_channels, inv_fctr):
    # Conv/Linear weights in torch (out_ch, in_ch) layout; the depthwise weight
    # is (C, 9) = torch conv2.weight.reshape(C, 9); the FEC weight uses input
    # channel order c*5 + s (torch cat-on-H then view).
    c1 = n_filts * inv_fctr
    cred = max(out_channels // 8, 1)
    ks = jax.random.split(key, 12)

    def rnd(k, shape):
        return jax.random.normal(k, shape, jnp.float32) * 0.1

    return dict(
        w1=rnd(ks[0], (c1, n_filts)), b1=rnd(ks[1], (c1,)),
        w2=rnd(ks[2], (n_filts, 9)), b2=rnd(ks[3], (n_filts,)),
        wf=rnd(ks[4], (n_filts, 5 * n_filts)), bf=rnd(ks[5], (n_filts,)),
        w3=rnd(ks[6], (out_channels, n_filts)), b3=rnd(ks[7], (out_channels,)),
        wfc1=rnd(ks[8], (cred, out_channels)), bfc1=rnd(ks[9], (cred,)),
        wfc2=rnd(ks[10], (out_channels, cred)), bfc2=rnd(ks[11], (out_channels,)),
        g1=jnp.ones((c1,)), be1=jnp.zeros((c1,)),
        g2=jnp.ones((n_filts,)), be2=jnp.zeros((n_filts,)),
        gf=jnp.ones((n_filts,)), bef=jnp.zeros((n_filts,)),
        gn=jnp.ones((n_filts,)), ben=jnp.zeros((n_filts,)),
        g3=jnp.ones((out_channels,)), be3=jnp.zeros((out_channels,)),
        gse=jnp.ones((out_channels,)), bese=jnp.zeros((out_channels,)),
    )


def pcblock_forward(x_nchw, p, *, n_filts, out_channels, k=3, inv_fctr=3):
    assert k == 3, "only k=3 (the PCBlock default) is implemented"
    B, cin, H, W = x_nchw.shape
    assert cin == n_filts
    assert H % 2 == 0 and W % 2 == 0, "2x2 pool/upsample branches need even H, W"
    HW = H * W
    M = B * HW
    assert HW % 128 == 0 or B == 1, "per-image lane slices need H*W % 128 == 0"

    c1 = n_filts * inv_fctr
    cred = max(out_channels // 8, 1)

    # Layout plumbing (outside the kernel): NCHW -> channel-major (C, B*H*W),
    # columns ordered (b, h, w) so the big spatial axis is lane-dense.
    x_cm = jnp.transpose(x_nchw, (1, 0, 2, 3)).reshape(cin, M).astype(jnp.float32)

    a_cm = shuffle_avg_matrix(n_filts, inv_fctr)
    tab = spatial_table(B, H, W)

    # Pack per-channel vectors into a few lane-dense parameter matrices.
    pA = jnp.stack([_f32(p["b1"]), _f32(p["g1"]), _f32(p["be1"])], axis=1)
    pB = jnp.stack([_f32(p["b2"]), _f32(p["g2"]), _f32(p["be2"]),
                    _f32(p["bf"]), _f32(p["gf"]), _f32(p["bef"]),
                    _f32(p["gn"]), _f32(p["ben"])], axis=1)
    pC = jnp.stack([_f32(p["b3"]), _f32(p["g3"]), _f32(p["be3"]),
                    _f32(p["bfc2"]), _f32(p["gse"]), _f32(p["bese"])], axis=1)
    # FEC 1x1 weight split per branch: input-channel order is c*5 + s;
    # s = 0,2,4 multiply x itself, s = 1 -> Up(AvgPool(x)), s = 3 -> Up(MaxPool(x)).
    wf5 = _f32(p["wf"]).reshape(n_filts, n_filts, 5)
    wf3 = jnp.concatenate([wf5[:, :, 0] + wf5[:, :, 2] + wf5[:, :, 4],
                           wf5[:, :, 1], wf5[:, :, 3]], axis=1)
    se1 = jnp.concatenate([_f32(p["wfc1"]), _f32(p["bfc1"]).reshape(-1, 1)],
                          axis=1)

    kern = functools.partial(_pcblock_kernel, B=B, W=W, HW=HW,
                             slope=_SLOPE, eps=_EPS)
    out_cm = pl.pallas_call(
        kern,
        grid=(1,),
        out_shape=jax.ShapeDtypeStruct((out_channels, M), jnp.float32),
        in_specs=[
            _full_spec((cin, M)),                  # x  (channel-major input)
            _full_spec((11, M)),                   # boundary/parity table
            _full_spec((c1, cin)),                 # w1
            _full_spec((c1, 3)),                   # b1, g1, be1
            _full_spec((cin, c1)),                 # channel-shuffle-avg matrix
            _full_spec((cin, 9)),                  # depthwise 3x3 taps
            _full_spec((cin, 8)),                  # b2,g2,be2,bf,gf,bef,gn,ben
            _full_spec((cin, 3 * cin)),            # FEC 1x1 weight [wz|wa|wm]
            _full_spec((out_channels, cin)),       # w3
            _full_spec((out_channels, 6)),         # b3,g3,be3,bfc2,gse,bese
            _full_spec((cred, out_channels + 1)),  # [wfc1 | bfc1]
            _full_spec((out_channels, cred)),      # wfc2
        ],
        out_specs=_full_spec((out_channels, M)),
        compiler_params=pltpu.CompilerParams(
            dimension_semantics=("arbitrary",),
            vmem_limit_bytes=_VMEM_LIMIT),
    )(x_cm, tab, _f32(p["w1"]), pA, a_cm, _f32(p["w2"]), pB, wf3,
      _f32(p["w3"]), pC, se1, _f32(p["wfc2"]))

    return out_cm.reshape(out_channels, B, H, W).transpose(1, 0, 2, 3)   # NCHW


if __name__ == "__main__":
    n_filts, out_channels, k, inv_fctr = 4, 8, 3, 3
    B, H, W = 2, 16, 16

    key = jax.random.PRNGKey(0)
    kx, kp = jax.random.split(key)
    x = jax.random.normal(kx, (B, n_filts, H, W), jnp.float32)
    params = init_params(kp, n_filts, out_channels, inv_fctr)

    fwd = jax.jit(functools.partial(pcblock_forward, n_filts=n_filts,
                                    out_channels=out_channels, k=k,
                                    inv_fctr=inv_fctr))
    out = jax.block_until_ready(fwd(x, params))

    assert out.shape == (B, out_channels, H, W), out.shape
    assert bool(jnp.all(jnp.isfinite(out)))
    print("KERNEL_OK")
</pallas_src>

<mosaic_0001>
module attributes {stable_mosaic.version = 11 : i64} {
  func.func @_pcblock_kernel(%arg0: i32, %arg1: memref<4x512xf32, #tpu.memory_space<vmem>>, %arg2: memref<11x512xf32, #tpu.memory_space<vmem>>, %arg3: memref<12x4xf32, #tpu.memory_space<vmem>>, %arg4: memref<12x3xf32, #tpu.memory_space<vmem>>, %arg5: memref<4x12xf32, #tpu.memory_space<vmem>>, %arg6: memref<4x9xf32, #tpu.memory_space<vmem>>, %arg7: memref<4x8xf32, #tpu.memory_space<vmem>>, %arg8: memref<4x12xf32, #tpu.memory_space<vmem>>, %arg9: memref<8x4xf32, #tpu.memory_space<vmem>>, %arg10: memref<8x6xf32, #tpu.memory_space<vmem>>, %arg11: memref<1x9xf32, #tpu.memory_space<vmem>>, %arg12: memref<8x1xf32, #tpu.memory_space<vmem>>, %arg13: memref<8x512xf32, #tpu.memory_space<vmem>>) attributes {dimension_semantics = [#tpu.dimension_semantics<arbitrary>], iteration_bounds = array<i64: 1>, scalar_prefetch = 0 : i64, scratch_operands = 0 : i64, tpu.core_type = #tpu.core_type<tc>, window_params = [{pipeline_mode = #tpu.pipeline_mode<synchronous>, transform_indices = @transform_0, window_bounds = array<i64: 4, 512>}, {pipeline_mode = #tpu.pipeline_mode<synchronous>, transform_indices = @transform_1, window_bounds = array<i64: 11, 512>}, {pipeline_mode = #tpu.pipeline_mode<synchronous>, transform_indices = @transform_2, window_bounds = array<i64: 12, 4>}, {pipeline_mode = #tpu.pipeline_mode<synchronous>, transform_indices = @transform_3, window_bounds = array<i64: 12, 3>}, {pipeline_mode = #tpu.pipeline_mode<synchronous>, transform_indices = @transform_4, window_bounds = array<i64: 4, 12>}, {pipeline_mode = #tpu.pipeline_mode<synchronous>, transform_indices = @transform_5, window_bounds = array<i64: 4, 9>}, {pipeline_mode = #tpu.pipeline_mode<synchronous>, transform_indices = @transform_6, window_bounds = array<i64: 4, 8>}, {pipeline_mode = #tpu.pipeline_mode<synchronous>, transform_indices = @transform_7, window_bounds = array<i64: 4, 12>}, {pipeline_mode = #tpu.pipeline_mode<synchronous>, transform_indices = @transform_8, window_bounds = array<i64: 8, 4>}, {pipeline_mode = #tpu.pipeline_mode<synchronous>, transform_indices = @transform_9, window_bounds = array<i64: 8, 6>}, {pipeline_mode = #tpu.pipeline_mode<synchronous>, transform_indices = @transform_10, window_bounds = array<i64: 1, 9>}, {pipeline_mode = #tpu.pipeline_mode<synchronous>, transform_indices = @transform_11, window_bounds = array<i64: 8, 1>}, {pipeline_mode = #tpu.pipeline_mode<synchronous>, transform_indices = @transform_12, window_bounds = array<i64: 8, 512>}]} {
    %c0 = arith.constant 0 : index
    %c0_0 = arith.constant 0 : index
    %0 = vector.load %arg1[%c0, %c0_0] : memref<4x512xf32, #tpu.memory_space<vmem>>, vector<4x512xf32>
    %c0_1 = arith.constant 0 : index
    %c0_2 = arith.constant 0 : index
    %1 = vector.load %arg2[%c0_1, %c0_2] : memref<11x512xf32, #tpu.memory_space<vmem>>, vector<11x512xf32>
    %c0_3 = arith.constant 0 : index
    %c0_4 = arith.constant 0 : index
    %2 = vector.load %arg4[%c0_3, %c0_4] : memref<12x3xf32, #tpu.memory_space<vmem>>, vector<12x3xf32>
    %c0_5 = arith.constant 0 : index
    %c0_6 = arith.constant 0 : index
    %3 = vector.load %arg7[%c0_5, %c0_6] : memref<4x8xf32, #tpu.memory_space<vmem>>, vector<4x8xf32>
    %c0_7 = arith.constant 0 : index
    %c0_8 = arith.constant 0 : index
    %4 = vector.load %arg10[%c0_7, %c0_8] : memref<8x6xf32, #tpu.memory_space<vmem>>, vector<8x6xf32>
    %c0_9 = arith.constant 0 : index
    %c0_10 = arith.constant 0 : index
    %5 = vector.load %arg3[%c0_9, %c0_10] : memref<12x4xf32, #tpu.memory_space<vmem>>, vector<12x4xf32>
    %6 = vector.extract_strided_slice %5 {offsets = [0, 0], sizes = [12, 1], strides = [1, 1]} : vector<12x4xf32> to vector<12x1xf32>
    %7 = vector.extract_strided_slice %0 {offsets = [0, 0], sizes = [1, 512], strides = [1, 1]} : vector<4x512xf32> to vector<1x512xf32>
    %8 = vector.broadcast %6 : vector<12x1xf32> to vector<12x512xf32>
    %9 = vector.broadcast %7 : vector<1x512xf32> to vector<12x512xf32>
    %10 = arith.mulf %8, %9 : vector<12x512xf32>
    %11 = vector.extract_strided_slice %5 {offsets = [0, 1], sizes = [12, 1], strides = [1, 1]} : vector<12x4xf32> to vector<12x1xf32>
    %12 = vector.extract_strided_slice %0 {offsets = [1, 0], sizes = [1, 512], strides = [1, 1]} : vector<4x512xf32> to vector<1x512xf32>
    %13 = vector.broadcast %11 : vector<12x1xf32> to vector<12x512xf32>
    %14 = vector.broadcast %12 : vector<1x512xf32> to vector<12x512xf32>
    %15 = arith.mulf %13, %14 : vector<12x512xf32>
    %16 = arith.addf %10, %15 : vector<12x512xf32>
    %17 = vector.extract_strided_slice %5 {offsets = [0, 2], sizes = [12, 1], strides = [1, 1]} : vector<12x4xf32> to vector<12x1xf32>
    %18 = vector.extract_strided_slice %0 {offsets = [2, 0], sizes = [1, 512], strides = [1, 1]} : vector<4x512xf32> to vector<1x512xf32>
    %19 = vector.broadcast %17 : vector<12x1xf32> to vector<12x512xf32>
    %20 = vector.broadcast %18 : vector<1x512xf32> to vector<12x512xf32>
    %21 = arith.mulf %19, %20 : vector<12x512xf32>
    %22 = arith.addf %16, %21 : vector<12x512xf32>
    %23 = vector.extract_strided_slice %5 {offsets = [0, 3], sizes = [12, 1], strides = [1, 1]} : vector<12x4xf32> to vector<12x1xf32>
    %24 = vector.extract_strided_slice %0 {offsets = [3, 0], sizes = [1, 512], strides = [1, 1]} : vector<4x512xf32> to vector<1x512xf32>
    %25 = vector.broadcast %23 : vector<12x1xf32> to vector<12x512xf32>
    %26 = vector.broadcast %24 : vector<1x512xf32> to vector<12x512xf32>
    %27 = arith.mulf %25, %26 : vector<12x512xf32>
    %28 = arith.addf %22, %27 : vector<12x512xf32>
    %29 = vector.extract_strided_slice %2 {offsets = [0, 0], sizes = [12, 1], strides = [1, 1]} : vector<12x3xf32> to vector<12x1xf32>
    %30 = vector.broadcast %29 : vector<12x1xf32> to vector<12x512xf32>
    %31 = arith.addf %28, %30 : vector<12x512xf32>
    %32 = vector.extract_strided_slice %2 {offsets = [0, 1], sizes = [12, 1], strides = [1, 1]} : vector<12x3xf32> to vector<12x1xf32>
    %33 = vector.extract_strided_slice %2 {offsets = [0, 2], sizes = [12, 1], strides = [1, 1]} : vector<12x3xf32> to vector<12x1xf32>
    %cst = arith.constant dense<0.000000e+00> : vector<12xf32>
    %34 = vector.multi_reduction <add>, %31, %cst [1] : vector<12x512xf32> to vector<12xf32>
    %35 = vector.shape_cast %34 : vector<12xf32> to vector<12x1xf32>
    %cst_11 = arith.constant 0.001953125 : f32
    %36 = vector.broadcast %cst_11 : f32 to vector<12x1xf32>
    %37 = arith.mulf %35, %36 : vector<12x1xf32>
    %38 = arith.mulf %31, %31 : vector<12x512xf32>
    %cst_12 = arith.constant dense<0.000000e+00> : vector<12xf32>
    %39 = vector.multi_reduction <add>, %38, %cst_12 [1] : vector<12x512xf32> to vector<12xf32>
    %40 = vector.shape_cast %39 : vector<12xf32> to vector<12x1xf32>
    %cst_13 = arith.constant 0.001953125 : f32
    %41 = vector.broadcast %cst_13 : f32 to vector<12x1xf32>
    %42 = arith.mulf %40, %41 : vector<12x1xf32>
    %43 = arith.mulf %37, %37 : vector<12x1xf32>
    %44 = arith.subf %42, %43 : vector<12x1xf32>
    %cst_14 = arith.constant 0.000000e+00 : f32
    %45 = vector.broadcast %cst_14 : f32 to vector<12x1xf32>
    %46 = arith.maximumf %44, %45 : vector<12x1xf32>
    %cst_15 = arith.constant 9.99999974E-6 : f32
    %47 = vector.broadcast %cst_15 : f32 to vector<12x1xf32>
    %48 = arith.addf %46, %47 : vector<12x1xf32>
    %49 = math.rsqrt %48 : vector<12x1xf32>
    %50 = arith.mulf %32, %49 : vector<12x1xf32>
    %51 = vector.broadcast %50 : vector<12x1xf32> to vector<12x512xf32>
    %52 = arith.mulf %31, %51 : vector<12x512xf32>
    %53 = arith.mulf %37, %50 : vector<12x1xf32>
    %54 = arith.subf %33, %53 : vector<12x1xf32>
    %55 = vector.broadcast %54 : vector<12x1xf32> to vector<12x512xf32>
    %56 = arith.addf %52, %55 : vector<12x512xf32>
    %cst_16 = arith.constant 0.000000e+00 : f32
    %57 = vector.broadcast %cst_16 : f32 to vector<12x512xf32>
    %58 = arith.cmpf oge, %56, %57 : vector<12x512xf32>
    %cst_17 = arith.constant 0.00999999977 : f32
    %59 = vector.broadcast %cst_17 : f32 to vector<12x512xf32>
    %60 = arith.mulf %56, %59 : vector<12x512xf32>
    %61 = arith.select %58, %56, %60 : vector<12x512xi1>, vector<12x512xf32>
    %c0_18 = arith.constant 0 : index
    %c0_19 = arith.constant 0 : index
    %62 = vector.load %arg5[%c0_18, %c0_19] : memref<4x12xf32, #tpu.memory_space<vmem>>, vector<4x12xf32>
    %63 = vector.extract_strided_slice %62 {offsets = [0, 0], sizes = [4, 1], strides = [1, 1]} : vector<4x12xf32> to vector<4x1xf32>
    %64 = vector.extract_strided_slice %61 {offsets = [0, 0], sizes = [1, 512], strides = [1, 1]} : vector<12x512xf32> to vector<1x512xf32>
    %65 = vector.broadcast %63 : vector<4x1xf32> to vector<4x512xf32>
    %66 = vector.broadcast %64 : vector<1x512xf32> to vector<4x512xf32>
    %67 = arith.mulf %65, %66 : vector<4x512xf32>
    %68 = vector.extract_strided_slice %62 {offsets = [0, 1], sizes = [4, 1], strides = [1, 1]} : vector<4x12xf32> to vector<4x1xf32>
    %69 = vector.extract_strided_slice %61 {offsets = [1, 0], sizes = [1, 512], strides = [1, 1]} : vector<12x512xf32> to vector<1x512xf32>
    %70 = vector.broadcast %68 : vector<4x1xf32> to vector<4x512xf32>
    %71 = vector.broadcast %69 : vector<1x512xf32> to vector<4x512xf32>
    %72 = arith.mulf %70, %71 : vector<4x512xf32>
    %73 = arith.addf %67, %72 : vector<4x512xf32>
    %74 = vector.extract_strided_slice %62 {offsets = [0, 2], sizes = [4, 1], strides = [1, 1]} : vector<4x12xf32> to vector<4x1xf32>
    %75 = vector.extract_strided_slice %61 {offsets = [2, 0], sizes = [1, 512], strides = [1, 1]} : vector<12x512xf32> to vector<1x512xf32>
    %76 = vector.broadcast %74 : vector<4x1xf32> to vector<4x512xf32>
    %77 = vector.broadcast %75 : vector<1x512xf32> to vector<4x512xf32>
    %78 = arith.mulf %76, %77 : vector<4x512xf32>
    %79 = arith.addf %73, %78 : vector<4x512xf32>
    %80 = vector.extract_strided_slice %62 {offsets = [0, 3], sizes = [4, 1], strides = [1, 1]} : vector<4x12xf32> to vector<4x1xf32>
    %81 = vector.extract_strided_slice %61 {offsets = [3, 0], sizes = [1, 512], strides = [1, 1]} : vector<12x512xf32> to vector<1x512xf32>
    %82 = vector.broadcast %80 : vector<4x1xf32> to vector<4x512xf32>
    %83 = vector.broadcast %81 : vector<1x512xf32> to vector<4x512xf32>
    %84 = arith.mulf %82, %83 : vector<4x512xf32>
    %85 = arith.addf %79, %84 : vector<4x512xf32>
    %86 = vector.extract_strided_slice %62 {offsets = [0, 4], sizes = [4, 1], strides = [1, 1]} : vector<4x12xf32> to vector<4x1xf32>
    %87 = vector.extract_strided_slice %61 {offsets = [4, 0], sizes = [1, 512], strides = [1, 1]} : vector<12x512xf32> to vector<1x512xf32>
    %88 = vector.broadcast %86 : vector<4x1xf32> to vector<4x512xf32>
    %89 = vector.broadcast %87 : vector<1x512xf32> to vector<4x512xf32>
    %90 = arith.mulf %88, %89 : vector<4x512xf32>
    %91 = arith.addf %85, %90 : vector<4x512xf32>
    %92 = vector.extract_strided_slice %62 {offsets = [0, 5], sizes = [4, 1], strides = [1, 1]} : vector<4x12xf32> to vector<4x1xf32>
    %93 = vector.extract_strided_slice %61 {offsets = [5, 0], sizes = [1, 512], strides = [1, 1]} : vector<12x512xf32> to vector<1x512xf32>
    %94 = vector.broadcast %92 : vector<4x1xf32> to vector<4x512xf32>
    %95 = vector.broadcast %93 : vector<1x512xf32> to vector<4x512xf32>
    %96 = arith.mulf %94, %95 : vector<4x512xf32>
    %97 = arith.addf %91, %96 : vector<4x512xf32>
    %98 = vector.extract_strided_slice %62 {offsets = [0, 6], sizes = [4, 1], strides = [1, 1]} : vector<4x12xf32> to vector<4x1xf32>
    %99 = vector.extract_strided_slice %61 {offsets = [6, 0], sizes = [1, 512], strides = [1, 1]} : vector<12x512xf32> to vector<1x512xf32>
    %100 = vector.broadcast %98 : vector<4x1xf32> to vector<4x512xf32>
    %101 = vector.broadcast %99 : vector<1x512xf32> to vector<4x512xf32>
    %102 = arith.mulf %100, %101 : vector<4x512xf32>
    %103 = arith.addf %97, %102 : vector<4x512xf32>
    %104 = vector.extract_strided_slice %62 {offsets = [0, 7], sizes = [4, 1], strides = [1, 1]} : vector<4x12xf32> to vector<4x1xf32>
    %105 = vector.extract_strided_slice %61 {offsets = [7, 0], sizes = [1, 512], strides = [1, 1]} : vector<12x512xf32> to vector<1x512xf32>
    %106 = vector.broadcast %104 : vector<4x1xf32> to vector<4x512xf32>
    %107 = vector.broadcast %105 : vector<1x512xf32> to vector<4x512xf32>
    %108 = arith.mulf %106, %107 : vector<4x512xf32>
    %109 = arith.addf %103, %108 : vector<4x512xf32>
    %110 = vector.extract_strided_slice %62 {offsets = [0, 8], sizes = [4, 1], strides = [1, 1]} : vector<4x12xf32> to vector<4x1xf32>
    %111 = vector.extract_strided_slice %61 {offsets = [8, 0], sizes = [1, 512], strides = [1, 1]} : vector<12x512xf32> to vector<1x512xf32>
    %112 = vector.broadcast %110 : vector<4x1xf32> to vector<4x512xf32>
    %113 = vector.broadcast %111 : vector<1x512xf32> to vector<4x512xf32>
    %114 = arith.mulf %112, %113 : vector<4x512xf32>
    %115 = arith.addf %109, %114 : vector<4x512xf32>
    %116 = vector.extract_strided_slice %62 {offsets = [0, 9], sizes = [4, 1], strides = [1, 1]} : vector<4x12xf32> to vector<4x1xf32>
    %117 = vector.extract_strided_slice %61 {offsets = [9, 0], sizes = [1, 512], strides = [1, 1]} : vector<12x512xf32> to vector<1x512xf32>
    %118 = vector.broadcast %116 : vector<4x1xf32> to vector<4x512xf32>
    %119 = vector.broadcast %117 : vector<1x512xf32> to vector<4x512xf32>
    %120 = arith.mulf %118, %119 : vector<4x512xf32>
    %121 = arith.addf %115, %120 : vector<4x512xf32>
    %122 = vector.extract_strided_slice %62 {offsets = [0, 10], sizes = [4, 1], strides = [1, 1]} : vector<4x12xf32> to vector<4x1xf32>
    %123 = vector.extract_strided_slice %61 {offsets = [10, 0], sizes = [1, 512], strides = [1, 1]} : vector<12x512xf32> to vector<1x512xf32>
    %124 = vector.broadcast %122 : vector<4x1xf32> to vector<4x512xf32>
    %125 = vector.broadcast %123 : vector<1x512xf32> to vector<4x512xf32>
    %126 = arith.mulf %124, %125 : vector<4x512xf32>
    %127 = arith.addf %121, %126 : vector<4x512xf32>
    %128 = vector.extract_strided_slice %62 {offsets = [0, 11], sizes = [4, 1], strides = [1, 1]} : vector<4x12xf32> to vector<4x1xf32>
    %129 = vector.extract_strided_slice %61 {offsets = [11, 0], sizes = [1, 512], strides = [1, 1]} : vector<12x512xf32> to vector<1x512xf32>
    %130 = vector.broadcast %128 : vector<4x1xf32> to vector<4x512xf32>
    %131 = vector.broadcast %129 : vector<1x512xf32> to vector<4x512xf32>
    %132 = arith.mulf %130, %131 : vector<4x512xf32>
    %133 = arith.addf %127, %132 : vector<4x512xf32>
    %c0_20 = arith.constant 0 : index
    %c0_21 = arith.constant 0 : index
    %134 = vector.load %arg6[%c0_20, %c0_21] : memref<4x9xf32, #tpu.memory_space<vmem>>, vector<4x9xf32>
    %c17_i32 = arith.constant 17 : i32
    %135 = tpu.dynamic_rotate %133 by %c17_i32 dim 1 : vector<4x512xf32>, i32 -> vector<4x512xf32>
    %136 = vector.extract_strided_slice %1 {offsets = [0, 0], sizes = [1, 512], strides = [1, 1]} : vector<11x512xf32> to vector<1x512xf32>
    %137 = vector.broadcast %136 : vector<1x512xf32> to vector<4x512xf32>
    %138 = arith.mulf %135, %137 : vector<4x512xf32>
    %139 = vector.extract_strided_slice %134 {offsets = [0, 0], sizes = [4, 1], strides = [1, 1]} : vector<4x9xf32> to vector<4x1xf32>
    %140 = vector.broadcast %139 : vector<4x1xf32> to vector<4x512xf32>
    %141 = arith.mulf %140, %138 : vector<4x512xf32>
    %c16_i32 = arith.constant 16 : i32
    %142 = tpu.dynamic_rotate %133 by %c16_i32 dim 1 : vector<4x512xf32>, i32 -> vector<4x512xf32>
    %143 = vector.extract_strided_slice %1 {offsets = [1, 0], sizes = [1, 512], strides = [1, 1]} : vector<11x512xf32> to vector<1x512xf32>
    %144 = vector.broadcast %143 : vector<1x512xf32> to vector<4x512xf32>
    %145 = arith.mulf %142, %144 : vector<4x512xf32>
    %146 = vector.extract_strided_slice %134 {offsets = [0, 1], sizes = [4, 1], strides = [1, 1]} : vector<4x9xf32> to vector<4x1xf32>
    %147 = vector.broadcast %146 : vector<4x1xf32> to vector<4x512xf32>
    %148 = arith.mulf %147, %145 : vector<4x512xf32>
    %149 = arith.addf %141, %148 : vector<4x512xf32>
    %c15_i32 = arith.constant 15 : i32
    %150 = tpu.dynamic_rotate %133 by %c15_i32 dim 1 : vector<4x512xf32>, i32 -> vector<4x512xf32>
    %151 = vector.extract_strided_slice %1 {offsets = [2, 0], sizes = [1, 512], strides = [1, 1]} : vector<11x512xf32> to vector<1x512xf32>
    %152 = vector.broadcast %151 : vector<1x512xf32> to vector<4x512xf32>
    %153 = arith.mulf %150, %152 : vector<4x512xf32>
    %154 = vector.extract_strided_slice %134 {offsets = [0, 2], sizes = [4, 1], strides = [1, 1]} : vector<4x9xf32> to vector<4x1xf32>
    %155 = vector.broadcast %154 : vector<4x1xf32> to vector<4x512xf32>
    %156 = arith.mulf %155, %153 : vector<4x512xf32>
    %157 = arith.addf %149, %156 : vector<4x512xf32>
    %c1_i32 = arith.constant 1 : i32
    %158 = tpu.dynamic_rotate %133 by %c1_i32 dim 1 : vector<4x512xf32>, i32 -> vector<4x512xf32>
    %159 = vector.extract_strided_slice %1 {offsets = [3, 0], sizes = [1, 512], strides = [1, 1]} : vector<11x512xf32> to vector<1x512xf32>
    %160 = vector.broadcast %159 : vector<1x512xf32> to vector<4x512xf32>
    %161 = arith.mulf %158, %160 : vector<4x512xf32>
    %162 = vector.extract_strided_slice %134 {offsets = [0, 3], sizes = [4, 1], strides = [1, 1]} : vector<4x9xf32> to vector<4x1xf32>
    %163 = vector.broadcast %162 : vector<4x1xf32> to vector<4x512xf32>
    %164 = arith.mulf %163, %161 : vector<4x512xf32>
    %165 = arith.addf %157, %164 : vector<4x512xf32>
    %166 = vector.extract_strided_slice %134 {offsets = [0, 4], sizes = [4, 1], strides = [1, 1]} : vector<4x9xf32> to vector<4x1xf32>
    %167 = vector.broadcast %166 : vector<4x1xf32> to vector<4x512xf32>
    %168 = arith.mulf %167, %133 : vector<4x512xf32>
    %169 = arith.addf %165, %168 : vector<4x512xf32>
    %c511_i32 = arith.constant 511 : i32
    %170 = tpu.dynamic_rotate %133 by %c511_i32 dim 1 : vector<4x512xf32>, i32 -> vector<4x512xf32>
    %171 = vector.extract_strided_slice %1 {offsets = [5, 0], sizes = [1, 512], strides = [1, 1]} : vector<11x512xf32> to vector<1x512xf32>
    %172 = vector.broadcast %171 : vector<1x512xf32> to vector<4x512xf32>
    %173 = arith.mulf %170, %172 : vector<4x512xf32>
    %174 = vector.extract_strided_slice %134 {offsets = [0, 5], sizes = [4, 1], strides = [1, 1]} : vector<4x9xf32> to vector<4x1xf32>
    %175 = vector.broadcast %174 : vector<4x1xf32> to vector<4x512xf32>
    %176 = arith.mulf %175, %173 : vector<4x512xf32>
    %177 = arith.addf %169, %176 : vector<4x512xf32>
    %c497_i32 = arith.constant 497 : i32
    %178 = tpu.dynamic_rotate %133 by %c497_i32 dim 1 : vector<4x512xf32>, i32 -> vector<4x512xf32>
    %179 = vector.extract_strided_slice %1 {offsets = [6, 0], sizes = [1, 512], strides = [1, 1]} : vector<11x512xf32> to vector<1x512xf32>
    %180 = vector.broadcast %179 : vector<1x512xf32> to vector<4x512xf32>
    %181 = arith.mulf %178, %180 : vector<4x512xf32>
    %182 = vector.extract_strided_slice %134 {offsets = [0, 6], sizes = [4, 1], strides = [1, 1]} : vector<4x9xf32> to vector<4x1xf32>
    %183 = vector.broadcast %182 : vector<4x1xf32> to vector<4x512xf32>
    %184 = arith.mulf %183, %181 : vector<4x512xf32>
    %185 = arith.addf %177, %184 : vector<4x512xf32>
    %c496_i32 = arith.constant 496 : i32
    %186 = tpu.dynamic_rotate %133 by %c496_i32 dim 1 : vector<4x512xf32>, i32 -> vector<4x512xf32>
    %187 = vector.extract_strided_slice %1 {offsets = [7, 0], sizes = [1, 512], strides = [1, 1]} : vector<11x512xf32> to vector<1x512xf32>
    %188 = vector.broadcast %187 : vector<1x512xf32> to vector<4x512xf32>
    %189 = arith.mulf %186, %188 : vector<4x512xf32>
    %190 = vector.extract_strided_slice %134 {offsets = [0, 7], sizes = [4, 1], strides = [1, 1]} : vector<4x9xf32> to vector<4x1xf32>
    %191 = vector.broadcast %190 : vector<4x1xf32> to vector<4x512xf32>
    %192 = arith.mulf %191, %189 : vector<4x512xf32>
    %193 = arith.addf %185, %192 : vector<4x512xf32>
    %c495_i32 = arith.constant 495 : i32
    %194 = tpu.dynamic_rotate %133 by %c495_i32 dim 1 : vector<4x512xf32>, i32 -> vector<4x512xf32>
    %195 = vector.extract_strided_slice %1 {offsets = [8, 0], sizes = [1, 512], strides = [1, 1]} : vector<11x512xf32> to vector<1x512xf32>
    %196 = vector.broadcast %195 : vector<1x512xf32> to vector<4x512xf32>
    %197 = arith.mulf %194, %196 : vector<4x512xf32>
    %198 = vector.extract_strided_slice %134 {offsets = [0, 8], sizes = [4, 1], strides = [1, 1]} : vector<4x9xf32> to vector<4x1xf32>
    %199 = vector.broadcast %198 : vector<4x1xf32> to vector<4x512xf32>
    %200 = arith.mulf %199, %197 : vector<4x512xf32>
    %201 = arith.addf %193, %200 : vector<4x512xf32>
    %202 = vector.extract_strided_slice %3 {offsets = [0, 0], sizes = [4, 1], strides = [1, 1]} : vector<4x8xf32> to vector<4x1xf32>
    %203 = vector.broadcast %202 : vector<4x1xf32> to vector<4x512xf32>
    %204 = arith.addf %201, %203 : vector<4x512xf32>
    %205 = vector.extract_strided_slice %3 {offsets = [0, 1], sizes = [4, 1], strides = [1, 1]} : vector<4x8xf32> to vector<4x1xf32>
    %206 = vector.extract_strided_slice %3 {offsets = [0, 2], sizes = [4, 1], strides = [1, 1]} : vector<4x8xf32> to vector<4x1xf32>
    %cst_22 = arith.constant dense<0.000000e+00> : vector<4xf32>
    %207 = vector.multi_reduction <add>, %204, %cst_22 [1] : vector<4x512xf32> to vector<4xf32>
    %208 = vector.shape_cast %207 : vector<4xf32> to vector<4x1xf32>
    %cst_23 = arith.constant 0.001953125 : f32
    %209 = vector.broadcast %cst_23 : f32 to vector<4x1xf32>
    %210 = arith.mulf %208, %209 : vector<4x1xf32>
    %211 = arith.mulf %204, %204 : vector<4x512xf32>
    %cst_24 = arith.constant dense<0.000000e+00> : vector<4xf32>
    %212 = vector.multi_reduction <add>, %211, %cst_24 [1] : vector<4x512xf32> to vector<4xf32>
    %213 = vector.shape_cast %212 : vector<4xf32> to vector<4x1xf32>
    %cst_25 = arith.constant 0.001953125 : f32
    %214 = vector.broadcast %cst_25 : f32 to vector<4x1xf32>
    %215 = arith.mulf %213, %214 : vector<4x1xf32>
    %216 = arith.mulf %210, %210 : vector<4x1xf32>
    %217 = arith.subf %215, %216 : vector<4x1xf32>
    %cst_26 = arith.constant 0.000000e+00 : f32
    %218 = vector.broadcast %cst_26 : f32 to vector<4x1xf32>
    %219 = arith.maximumf %217, %218 : vector<4x1xf32>
    %cst_27 = arith.constant 9.99999974E-6 : f32
    %220 = vector.broadcast %cst_27 : f32 to vector<4x1xf32>
    %221 = arith.addf %219, %220 : vector<4x1xf32>
    %222 = math.rsqrt %221 : vector<4x1xf32>
    %223 = arith.mulf %205, %222 : vector<4x1xf32>
    %224 = vector.broadcast %223 : vector<4x1xf32> to vector<4x512xf32>
    %225 = arith.mulf %204, %224 : vector<4x512xf32>
    %226 = arith.mulf %210, %223 : vector<4x1xf32>
    %227 = arith.subf %206, %226 : vector<4x1xf32>
    %228 = vector.broadcast %227 : vector<4x1xf32> to vector<4x512xf32>
    %229 = arith.addf %225, %228 : vector<4x512xf32>
    %cst_28 = arith.constant 0.000000e+00 : f32
    %230 = vector.broadcast %cst_28 : f32 to vector<4x512xf32>
    %231 = arith.cmpf oge, %229, %230 : vector<4x512xf32>
    %cst_29 = arith.constant 0.00999999977 : f32
    %232 = vector.broadcast %cst_29 : f32 to vector<4x512xf32>
    %233 = arith.mulf %229, %232 : vector<4x512xf32>
    %234 = arith.select %231, %229, %233 : vector<4x512xi1>, vector<4x512xf32>
    %235 = vector.extract_strided_slice %1 {offsets = [9, 0], sizes = [1, 512], strides = [1, 1]} : vector<11x512xf32> to vector<1x512xf32>
    %236 = vector.extract_strided_slice %1 {offsets = [10, 0], sizes = [1, 512], strides = [1, 1]} : vector<11x512xf32> to vector<1x512xf32>
    %c511_i32_30 = arith.constant 511 : i32
    %237 = tpu.dynamic_rotate %234 by %c511_i32_30 dim 1 : vector<4x512xf32>, i32 -> vector<4x512xf32>
    %c1_i32_31 = arith.constant 1 : i32
    %238 = tpu.dynamic_rotate %234 by %c1_i32_31 dim 1 : vector<4x512xf32>, i32 -> vector<4x512xf32>
    %239 = vector.broadcast %236 : vector<1x512xf32> to vector<4x512xf32>
    %240 = arith.mulf %239, %237 : vector<4x512xf32>
    %cst_32 = arith.constant 1.000000e+00 : f32
    %241 = vector.broadcast %cst_32 : f32 to vector<1x512xf32>
    %242 = arith.subf %241, %236 : vector<1x512xf32>
    %243 = vector.broadcast %242 : vector<1x512xf32> to vector<4x512xf32>
    %244 = arith.mulf %243, %238 : vector<4x512xf32>
    %245 = arith.addf %240, %244 : vector<4x512xf32>
    %246 = arith.addf %234, %245 : vector<4x512xf32>
    %247 = arith.maximumf %234, %245 : vector<4x512xf32>
    %c496_i32_33 = arith.constant 496 : i32
    %248 = tpu.dynamic_rotate %246 by %c496_i32_33 dim 1 : vector<4x512xf32>, i32 -> vector<4x512xf32>
    %c16_i32_34 = arith.constant 16 : i32
    %249 = tpu.dynamic_rotate %246 by %c16_i32_34 dim 1 : vector<4x512xf32>, i32 -> vector<4x512xf32>
    %250 = vector.broadcast %235 : vector<1x512xf32> to vector<4x512xf32>
    %251 = arith.mulf %250, %248 : vector<4x512xf32>
    %252 = arith.addf %246, %251 : vector<4x512xf32>
    %cst_35 = arith.constant 1.000000e+00 : f32
    %253 = vector.broadcast %cst_35 : f32 to vector<1x512xf32>
    %254 = arith.subf %253, %235 : vector<1x512xf32>
    %255 = vector.broadcast %254 : vector<1x512xf32> to vector<4x512xf32>
    %256 = arith.mulf %255, %249 : vector<4x512xf32>
    %257 = arith.addf %252, %256 : vector<4x512xf32>
    %cst_36 = arith.constant 2.500000e-01 : f32
    %258 = vector.broadcast %cst_36 : f32 to vector<4x512xf32>
    %259 = arith.mulf %258, %257 : vector<4x512xf32>
    %c496_i32_37 = arith.constant 496 : i32
    %260 = tpu.dynamic_rotate %247 by %c496_i32_37 dim 1 : vector<4x512xf32>, i32 -> vector<4x512xf32>
    %c16_i32_38 = arith.constant 16 : i32
    %261 = tpu.dynamic_rotate %247 by %c16_i32_38 dim 1 : vector<4x512xf32>, i32 -> vector<4x512xf32>
    %262 = vector.broadcast %235 : vector<1x512xf32> to vector<4x512xf32>
    %263 = arith.mulf %262, %260 : vector<4x512xf32>
    %cst_39 = arith.constant 1.000000e+00 : f32
    %264 = vector.broadcast %cst_39 : f32 to vector<1x512xf32>
    %265 = arith.subf %264, %235 : vector<1x512xf32>
    %266 = vector.broadcast %265 : vector<1x512xf32> to vector<4x512xf32>
    %267 = arith.mulf %266, %261 : vector<4x512xf32>
    %268 = arith.addf %263, %267 : vector<4x512xf32>
    %269 = arith.maximumf %247, %268 : vector<4x512xf32>
    %c0_40 = arith.constant 0 : index
    %c0_41 = arith.constant 0 : index
    %270 = vector.load %arg8[%c0_40, %c0_41] : memref<4x12xf32, #tpu.memory_space<vmem>>, vector<4x12xf32>
    %271 = vector.extract_strided_slice %270 {offsets = [0, 0], sizes = [4, 4], strides = [1, 1]} : vector<4x12xf32> to vector<4x4xf32>
    %272 = vector.extract_strided_slice %271 {offsets = [0, 0], sizes = [4, 1], strides = [1, 1]} : vector<4x4xf32> to vector<4x1xf32>
    %273 = vector.extract_strided_slice %234 {offsets = [0, 0], sizes = [1, 512], strides = [1, 1]} : vector<4x512xf32> to vector<1x512xf32>
    %274 = vector.broadcast %272 : vector<4x1xf32> to vector<4x512xf32>
    %275 = vector.broadcast %273 : vector<1x512xf32> to vector<4x512xf32>
    %276 = arith.mulf %274, %275 : vector<4x512xf32>
    %277 = vector.extract_strided_slice %271 {offsets = [0, 1], sizes = [4, 1], strides = [1, 1]} : vector<4x4xf32> to vector<4x1xf32>
    %278 = vector.extract_strided_slice %234 {offsets = [1, 0], sizes = [1, 512], strides = [1, 1]} : vector<4x512xf32> to vector<1x512xf32>
    %279 = vector.broadcast %277 : vector<4x1xf32> to vector<4x512xf32>
    %280 = vector.broadcast %278 : vector<1x512xf32> to vector<4x512xf32>
    %281 = arith.mulf %279, %280 : vector<4x512xf32>
    %282 = arith.addf %276, %281 : vector<4x512xf32>
    %283 = vector.extract_strided_slice %271 {offsets = [0, 2], sizes = [4, 1], strides = [1, 1]} : vector<4x4xf32> to vector<4x1xf32>
    %284 = vector.extract_strided_slice %234 {offsets = [2, 0], sizes = [1, 512], strides = [1, 1]} : vector<4x512xf32> to vector<1x512xf32>
    %285 = vector.broadcast %283 : vector<4x1xf32> to vector<4x512xf32>
    %286 = vector.broadcast %284 : vector<1x512xf32> to vector<4x512xf32>
    %287 = arith.mulf %285, %286 : vector<4x512xf32>
    %288 = arith.addf %282, %287 : vector<4x512xf32>
    %289 = vector.extract_strided_slice %271 {offsets = [0, 3], sizes = [4, 1], strides = [1, 1]} : vector<4x4xf32> to vector<4x1xf32>
    %290 = vector.extract_strided_slice %234 {offsets = [3, 0], sizes = [1, 512], strides = [1, 1]} : vector<4x512xf32> to vector<1x512xf32>
    %291 = vector.broadcast %289 : vector<4x1xf32> to vector<4x512xf32>
    %292 = vector.broadcast %290 : vector<1x512xf32> to vector<4x512xf32>
    %293 = arith.mulf %291, %292 : vector<4x512xf32>
    %294 = arith.addf %288, %293 : vector<4x512xf32>
    %295 = vector.extract_strided_slice %270 {offsets = [0, 4], sizes = [4, 4], strides = [1, 1]} : vector<4x12xf32> to vector<4x4xf32>
    %296 = vector.extract_strided_slice %295 {offsets = [0, 0], sizes = [4, 1], strides = [1, 1]} : vector<4x4xf32> to vector<4x1xf32>
    %297 = vector.extract_strided_slice %259 {offsets = [0, 0], sizes = [1, 512], strides = [1, 1]} : vector<4x512xf32> to vector<1x512xf32>
    %298 = vector.broadcast %296 : vector<4x1xf32> to vector<4x512xf32>
    %299 = vector.broadcast %297 : vector<1x512xf32> to vector<4x512xf32>
    %300 = arith.mulf %298, %299 : vector<4x512xf32>
    %301 = vector.extract_strided_slice %295 {offsets = [0, 1], sizes = [4, 1], strides = [1, 1]} : vector<4x4xf32> to vector<4x1xf32>
    %302 = vector.extract_strided_slice %259 {offsets = [1, 0], sizes = [1, 512], strides = [1, 1]} : vector<4x512xf32> to vector<1x512xf32>
    %303 = vector.broadcast %301 : vector<4x1xf32> to vector<4x512xf32>
    %304 = vector.broadcast %302 : vector<1x512xf32> to vector<4x512xf32>
    %305 = arith.mulf %303, %304 : vector<4x512xf32>
    %306 = arith.addf %300, %305 : vector<4x512xf32>
    %307 = vector.extract_strided_slice %295 {offsets = [0, 2], sizes = [4, 1], strides = [1, 1]} : vector<4x4xf32> to vector<4x1xf32>
    %308 = vector.extract_strided_slice %259 {offsets = [2, 0], sizes = [1, 512], strides = [1, 1]} : vector<4x512xf32> to vector<1x512xf32>
    %309 = vector.broadcast %307 : vector<4x1xf32> to vector<4x512xf32>
    %310 = vector.broadcast %308 : vector<1x512xf32> to vector<4x512xf32>
    %311 = arith.mulf %309, %310 : vector<4x512xf32>
    %312 = arith.addf %306, %311 : vector<4x512xf32>
    %313 = vector.extract_strided_slice %295 {offsets = [0, 3], sizes = [4, 1], strides = [1, 1]} : vector<4x4xf32> to vector<4x1xf32>
    %314 = vector.extract_strided_slice %259 {offsets = [3, 0], sizes = [1, 512], strides = [1, 1]} : vector<4x512xf32> to vector<1x512xf32>
    %315 = vector.broadcast %313 : vector<4x1xf32> to vector<4x512xf32>
    %316 = vector.broadcast %314 : vector<1x512xf32> to vector<4x512xf32>
    %317 = arith.mulf %315, %316 : vector<4x512xf32>
    %318 = arith.addf %312, %317 : vector<4x512xf32>
    %319 = arith.addf %294, %318 : vector<4x512xf32>
    %320 = vector.extract_strided_slice %270 {offsets = [0, 8], sizes = [4, 4], strides = [1, 1]} : vector<4x12xf32> to vector<4x4xf32>
    %321 = vector.extract_strided_slice %320 {offsets = [0, 0], sizes = [4, 1], strides = [1, 1]} : vector<4x4xf32> to vector<4x1xf32>
    %322 = vector.extract_strided_slice %269 {offsets = [0, 0], sizes = [1, 512], strides = [1, 1]} : vector<4x512xf32> to vector<1x512xf32>
    %323 = vector.broadcast %321 : vector<4x1xf32> to vector<4x512xf32>
    %324 = vector.broadcast %322 : vector<1x512xf32> to vector<4x512xf32>
    %325 = arith.mulf %323, %324 : vector<4x512xf32>
    %326 = vector.extract_strided_slice %320 {offsets = [0, 1], sizes = [4, 1], strides = [1, 1]} : vector<4x4xf32> to vector<4x1xf32>
    %327 = vector.extract_strided_slice %269 {offsets = [1, 0], sizes = [1, 512], strides = [1, 1]} : vector<4x512xf32> to vector<1x512xf32>
    %328 = vector.broadcast %326 : vector<4x1xf32> to vector<4x512xf32>
    %329 = vector.broadcast %327 : vector<1x512xf32> to vector<4x512xf32>
    %330 = arith.mulf %328, %329 : vector<4x512xf32>
    %331 = arith.addf %325, %330 : vector<4x512xf32>
    %332 = vector.extract_strided_slice %320 {offsets = [0, 2], sizes = [4, 1], strides = [1, 1]} : vector<4x4xf32> to vector<4x1xf32>
    %333 = vector.extract_strided_slice %269 {offsets = [2, 0], sizes = [1, 512], strides = [1, 1]} : vector<4x512xf32> to vector<1x512xf32>
    %334 = vector.broadcast %332 : vector<4x1xf32> to vector<4x512xf32>
    %335 = vector.broadcast %333 : vector<1x512xf32> to vector<4x512xf32>
    %336 = arith.mulf %334, %335 : vector<4x512xf32>
    %337 = arith.addf %331, %336 : vector<4x512xf32>
    %338 = vector.extract_strided_slice %320 {offsets = [0, 3], sizes = [4, 1], strides = [1, 1]} : vector<4x4xf32> to vector<4x1xf32>
    %339 = vector.extract_strided_slice %269 {offsets = [3, 0], sizes = [1, 512], strides = [1, 1]} : vector<4x512xf32> to vector<1x512xf32>
    %340 = vector.broadcast %338 : vector<4x1xf32> to vector<4x512xf32>
    %341 = vector.broadcast %339 : vector<1x512xf32> to vector<4x512xf32>
    %342 = arith.mulf %340, %341 : vector<4x512xf32>
    %343 = arith.addf %337, %342 : vector<4x512xf32>
    %344 = arith.addf %319, %343 : vector<4x512xf32>
    %345 = vector.extract_strided_slice %3 {offsets = [0, 3], sizes = [4, 1], strides = [1, 1]} : vector<4x8xf32> to vector<4x1xf32>
    %346 = vector.broadcast %345 : vector<4x1xf32> to vector<4x512xf32>
    %347 = arith.addf %344, %346 : vector<4x512xf32>
    %348 = vector.extract_strided_slice %3 {offsets = [0, 4], sizes = [4, 1], strides = [1, 1]} : vector<4x8xf32> to vector<4x1xf32>
    %349 = vector.extract_strided_slice %3 {offsets = [0, 5], sizes = [4, 1], strides = [1, 1]} : vector<4x8xf32> to vector<4x1xf32>
    %cst_42 = arith.constant dense<0.000000e+00> : vector<4xf32>
    %350 = vector.multi_reduction <add>, %347, %cst_42 [1] : vector<4x512xf32> to vector<4xf32>
    %351 = vector.shape_cast %350 : vector<4xf32> to vector<4x1xf32>
    %cst_43 = arith.constant 0.001953125 : f32
    %352 = vector.broadcast %cst_43 : f32 to vector<4x1xf32>
    %353 = arith.mulf %351, %352 : vector<4x1xf32>
    %354 = arith.mulf %347, %347 : vector<4x512xf32>
    %cst_44 = arith.constant dense<0.000000e+00> : vector<4xf32>
    %355 = vector.multi_reduction <add>, %354, %cst_44 [1] : vector<4x512xf32> to vector<4xf32>
    %356 = vector.shape_cast %355 : vector<4xf32> to vector<4x1xf32>
    %cst_45 = arith.constant 0.001953125 : f32
    %357 = vector.broadcast %cst_45 : f32 to vector<4x1xf32>
    %358 = arith.mulf %356, %357 : vector<4x1xf32>
    %359 = arith.mulf %353, %353 : vector<4x1xf32>
    %360 = arith.subf %358, %359 : vector<4x1xf32>
    %cst_46 = arith.constant 0.000000e+00 : f32
    %361 = vector.broadcast %cst_46 : f32 to vector<4x1xf32>
    %362 = arith.maximumf %360, %361 : vector<4x1xf32>
    %cst_47 = arith.constant 9.99999974E-6 : f32
    %363 = vector.broadcast %cst_47 : f32 to vector<4x1xf32>
    %364 = arith.addf %362, %363 : vector<4x1xf32>
    %365 = math.rsqrt %364 : vector<4x1xf32>
    %366 = arith.mulf %348, %365 : vector<4x1xf32>
    %367 = vector.broadcast %366 : vector<4x1xf32> to vector<4x512xf32>
    %368 = arith.mulf %347, %367 : vector<4x512xf32>
    %369 = arith.mulf %353, %366 : vector<4x1xf32>
    %370 = arith.subf %349, %369 : vector<4x1xf32>
    %371 = vector.broadcast %370 : vector<4x1xf32> to vector<4x512xf32>
    %372 = arith.addf %368, %371 : vector<4x512xf32>
    %cst_48 = arith.constant 0.000000e+00 : f32
    %373 = vector.broadcast %cst_48 : f32 to vector<4x512xf32>
    %374 = arith.cmpf oge, %372, %373 : vector<4x512xf32>
    %cst_49 = arith.constant 0.00999999977 : f32
    %375 = vector.broadcast %cst_49 : f32 to vector<4x512xf32>
    %376 = arith.mulf %372, %375 : vector<4x512xf32>
    %377 = arith.select %374, %372, %376 : vector<4x512xi1>, vector<4x512xf32>
    %378 = arith.addf %377, %0 : vector<4x512xf32>
    %379 = vector.extract_strided_slice %3 {offsets = [0, 6], sizes = [4, 1], strides = [1, 1]} : vector<4x8xf32> to vector<4x1xf32>
    %380 = vector.extract_strided_slice %3 {offsets = [0, 7], sizes = [4, 1], strides = [1, 1]} : vector<4x8xf32> to vector<4x1xf32>
    %cst_50 = arith.constant dense<0.000000e+00> : vector<4xf32>
    %381 = vector.multi_reduction <add>, %378, %cst_50 [1] : vector<4x512xf32> to vector<4xf32>
    %382 = vector.shape_cast %381 : vector<4xf32> to vector<4x1xf32>
    %cst_51 = arith.constant 0.001953125 : f32
    %383 = vector.broadcast %cst_51 : f32 to vector<4x1xf32>
    %384 = arith.mulf %382, %383 : vector<4x1xf32>
    %385 = arith.mulf %378, %378 : vector<4x512xf32>
    %cst_52 = arith.constant dense<0.000000e+00> : vector<4xf32>
    %386 = vector.multi_reduction <add>, %385, %cst_52 [1] : vector<4x512xf32> to vector<4xf32>
    %387 = vector.shape_cast %386 : vector<4xf32> to vector<4x1xf32>
    %cst_53 = arith.constant 0.001953125 : f32
    %388 = vector.broadcast %cst_53 : f32 to vector<4x1xf32>
    %389 = arith.mulf %387, %388 : vector<4x1xf32>
    %390 = arith.mulf %384, %384 : vector<4x1xf32>
    %391 = arith.subf %389, %390 : vector<4x1xf32>
    %cst_54 = arith.constant 0.000000e+00 : f32
    %392 = vector.broadcast %cst_54 : f32 to vector<4x1xf32>
    %393 = arith.maximumf %391, %392 : vector<4x1xf32>
    %cst_55 = arith.constant 9.99999974E-6 : f32
    %394 = vector.broadcast %cst_55 : f32 to vector<4x1xf32>
    %395 = arith.addf %393, %394 : vector<4x1xf32>
    %396 = math.rsqrt %395 : vector<4x1xf32>
    %397 = arith.mulf %379, %396 : vector<4x1xf32>
    %398 = vector.broadcast %397 : vector<4x1xf32> to vector<4x512xf32>
    %399 = arith.mulf %378, %398 : vector<4x512xf32>
    %400 = arith.mulf %384, %397 : vector<4x1xf32>
    %401 = arith.subf %380, %400 : vector<4x1xf32>
    %402 = vector.broadcast %401 : vector<4x1xf32> to vector<4x512xf32>
    %403 = arith.addf %399, %402 : vector<4x512xf32>
    %c0_56 = arith.constant 0 : index
    %c0_57 = arith.constant 0 : index
    %404 = vector.load %arg9[%c0_56, %c0_57] : memref<8x4xf32, #tpu.memory_space<vmem>>, vector<8x4xf32>
    %405 = vector.extract_strided_slice %404 {offsets = [0, 0], sizes = [8, 1], strides = [1, 1]} : vector<8x4xf32> to vector<8x1xf32>
    %406 = vector.extract_strided_slice %403 {offsets = [0, 0], sizes = [1, 512], strides = [1, 1]} : vector<4x512xf32> to vector<1x512xf32>
    %407 = vector.broadcast %405 : vector<8x1xf32> to vector<8x512xf32>
    %408 = vector.broadcast %406 : vector<1x512xf32> to vector<8x512xf32>
    %409 = arith.mulf %407, %408 : vector<8x512xf32>
    %410 = vector.extract_strided_slice %404 {offsets = [0, 1], sizes = [8, 1], strides = [1, 1]} : vector<8x4xf32> to vector<8x1xf32>
    %411 = vector.extract_strided_slice %403 {offsets = [1, 0], sizes = [1, 512], strides = [1, 1]} : vector<4x512xf32> to vector<1x512xf32>
    %412 = vector.broadcast %410 : vector<8x1xf32> to vector<8x512xf32>
    %413 = vector.broadcast %411 : vector<1x512xf32> to vector<8x512xf32>
    %414 = arith.mulf %412, %413 : vector<8x512xf32>
    %415 = arith.addf %409, %414 : vector<8x512xf32>
    %416 = vector.extract_strided_slice %404 {offsets = [0, 2], sizes = [8, 1], strides = [1, 1]} : vector<8x4xf32> to vector<8x1xf32>
    %417 = vector.extract_strided_slice %403 {offsets = [2, 0], sizes = [1, 512], strides = [1, 1]} : vector<4x512xf32> to vector<1x512xf32>
    %418 = vector.broadcast %416 : vector<8x1xf32> to vector<8x512xf32>
    %419 = vector.broadcast %417 : vector<1x512xf32> to vector<8x512xf32>
    %420 = arith.mulf %418, %419 : vector<8x512xf32>
    %421 = arith.addf %415, %420 : vector<8x512xf32>
    %422 = vector.extract_strided_slice %404 {offsets = [0, 3], sizes = [8, 1], strides = [1, 1]} : vector<8x4xf32> to vector<8x1xf32>
    %423 = vector.extract_strided_slice %403 {offsets = [3, 0], sizes = [1, 512], strides = [1, 1]} : vector<4x512xf32> to vector<1x512xf32>
    %424 = vector.broadcast %422 : vector<8x1xf32> to vector<8x512xf32>
    %425 = vector.broadcast %423 : vector<1x512xf32> to vector<8x512xf32>
    %426 = arith.mulf %424, %425 : vector<8x512xf32>
    %427 = arith.addf %421, %426 : vector<8x512xf32>
    %428 = vector.extract_strided_slice %4 {offsets = [0, 0], sizes = [8, 1], strides = [1, 1]} : vector<8x6xf32> to vector<8x1xf32>
    %429 = vector.broadcast %428 : vector<8x1xf32> to vector<8x512xf32>
    %430 = arith.addf %427, %429 : vector<8x512xf32>
    %431 = vector.extract_strided_slice %4 {offsets = [0, 1], sizes = [8, 1], strides = [1, 1]} : vector<8x6xf32> to vector<8x1xf32>
    %432 = vector.extract_strided_slice %4 {offsets = [0, 2], sizes = [8, 1], strides = [1, 1]} : vector<8x6xf32> to vector<8x1xf32>
    %cst_58 = arith.constant dense<0.000000e+00> : vector<8xf32>
    %433 = vector.multi_reduction <add>, %430, %cst_58 [1] : vector<8x512xf32> to vector<8xf32>
    %434 = vector.shape_cast %433 : vector<8xf32> to vector<8x1xf32>
    %cst_59 = arith.constant 0.001953125 : f32
    %435 = vector.broadcast %cst_59 : f32 to vector<8x1xf32>
    %436 = arith.mulf %434, %435 : vector<8x1xf32>
    %437 = arith.mulf %430, %430 : vector<8x512xf32>
    %cst_60 = arith.constant dense<0.000000e+00> : vector<8xf32>
    %438 = vector.multi_reduction <add>, %437, %cst_60 [1] : vector<8x512xf32> to vector<8xf32>
    %439 = vector.shape_cast %438 : vector<8xf32> to vector<8x1xf32>
    %cst_61 = arith.constant 0.001953125 : f32
    %440 = vector.broadcast %cst_61 : f32 to vector<8x1xf32>
    %441 = arith.mulf %439, %440 : vector<8x1xf32>
    %442 = arith.mulf %436, %436 : vector<8x1xf32>
    %443 = arith.subf %441, %442 : vector<8x1xf32>
    %cst_62 = arith.constant 0.000000e+00 : f32
    %444 = vector.broadcast %cst_62 : f32 to vector<8x1xf32>
    %445 = arith.maximumf %443, %444 : vector<8x1xf32>
    %cst_63 = arith.constant 9.99999974E-6 : f32
    %446 = vector.broadcast %cst_63 : f32 to vector<8x1xf32>
    %447 = arith.addf %445, %446 : vector<8x1xf32>
    %448 = math.rsqrt %447 : vector<8x1xf32>
    %449 = arith.mulf %431, %448 : vector<8x1xf32>
    %450 = vector.broadcast %449 : vector<8x1xf32> to vector<8x512xf32>
    %451 = arith.mulf %430, %450 : vector<8x512xf32>
    %452 = arith.mulf %436, %449 : vector<8x1xf32>
    %453 = arith.subf %432, %452 : vector<8x1xf32>
    %454 = vector.broadcast %453 : vector<8x1xf32> to vector<8x512xf32>
    %455 = arith.addf %451, %454 : vector<8x512xf32>
    %cst_64 = arith.constant 0.000000e+00 : f32
    %456 = vector.broadcast %cst_64 : f32 to vector<8x512xf32>
    %457 = arith.cmpf oge, %455, %456 : vector<8x512xf32>
    %cst_65 = arith.constant 0.00999999977 : f32
    %458 = vector.broadcast %cst_65 : f32 to vector<8x512xf32>
    %459 = arith.mulf %455, %458 : vector<8x512xf32>
    %460 = arith.select %457, %455, %459 : vector<8x512xi1>, vector<8x512xf32>
    %c0_66 = arith.constant 0 : index
    %c0_67 = arith.constant 0 : index
    %461 = vector.load %arg11[%c0_66, %c0_67] : memref<1x9xf32, #tpu.memory_space<vmem>>, vector<1x9xf32>
    %462 = vector.extract_strided_slice %461 {offsets = [0, 0], sizes = [1, 8], strides = [1, 1]} : vector<1x9xf32> to vector<1x8xf32>
    %463 = vector.extract_strided_slice %461 {offsets = [0, 8], sizes = [1, 1], strides = [1, 1]} : vector<1x9xf32> to vector<1x1xf32>
    %c0_68 = arith.constant 0 : index
    %c0_69 = arith.constant 0 : index
    %464 = vector.load %arg12[%c0_68, %c0_69] : memref<8x1xf32, #tpu.memory_space<vmem>>, vector<8x1xf32>
    %cst_70 = arith.constant 0.000000e+00 : f32
    %465 = vector.broadcast %cst_70 : f32 to vector<8x1xf32>
    %cst_71 = arith.constant 0.000000e+00 : f32
    %466 = vector.broadcast %cst_71 : f32 to vector<8x1xf32>
    %467 = vector.extract_strided_slice %460 {offsets = [0, 0], sizes = [8, 256], strides = [1, 1]} : vector<8x512xf32> to vector<8x256xf32>
    %cst_72 = arith.constant dense<0.000000e+00> : vector<8xf32>
    %468 = vector.multi_reduction <add>, %467, %cst_72 [1] : vector<8x256xf32> to vector<8xf32>
    %469 = vector.shape_cast %468 : vector<8xf32> to vector<8x1xf32>
    %470 = arith.mulf %467, %467 : vector<8x256xf32>
    %cst_73 = arith.constant dense<0.000000e+00> : vector<8xf32>
    %471 = vector.multi_reduction <add>, %470, %cst_73 [1] : vector<8x256xf32> to vector<8xf32>
    %472 = vector.shape_cast %471 : vector<8xf32> to vector<8x1xf32>
    %cst_74 = arith.constant 3.906250e-03 : f32
    %473 = vector.broadcast %cst_74 : f32 to vector<8x1xf32>
    %474 = arith.mulf %469, %473 : vector<8x1xf32>
    %475 = vector.extract_strided_slice %462 {offsets = [0, 0], sizes = [1, 1], strides = [1, 1]} : vector<1x8xf32> to vector<1x1xf32>
    %476 = vector.extract_strided_slice %474 {offsets = [0, 0], sizes = [1, 1], strides = [1, 1]} : vector<8x1xf32> to vector<1x1xf32>
    %477 = arith.mulf %475, %476 : vector<1x1xf32>
    %478 = vector.extract_strided_slice %462 {offsets = [0, 1], sizes = [1, 1], strides = [1, 1]} : vector<1x8xf32> to vector<1x1xf32>
    %479 = vector.extract_strided_slice %474 {offsets = [1, 0], sizes = [1, 1], strides = [1, 1]} : vector<8x1xf32> to vector<1x1xf32>
    %480 = arith.mulf %478, %479 : vector<1x1xf32>
    %481 = arith.addf %477, %480 : vector<1x1xf32>
    %482 = vector.extract_strided_slice %462 {offsets = [0, 2], sizes = [1, 1], strides = [1, 1]} : vector<1x8xf32> to vector<1x1xf32>
    %483 = vector.extract_strided_slice %474 {offsets = [2, 0], sizes = [1, 1], strides = [1, 1]} : vector<8x1xf32> to vector<1x1xf32>
    %484 = arith.mulf %482, %483 : vector<1x1xf32>
    %485 = arith.addf %481, %484 : vector<1x1xf32>
    %486 = vector.extract_strided_slice %462 {offsets = [0, 3], sizes = [1, 1], strides = [1, 1]} : vector<1x8xf32> to vector<1x1xf32>
    %487 = vector.extract_strided_slice %474 {offsets = [3, 0], sizes = [1, 1], strides = [1, 1]} : vector<8x1xf32> to vector<1x1xf32>
    %488 = arith.mulf %486, %487 : vector<1x1xf32>
    %489 = arith.addf %485, %488 : vector<1x1xf32>
    %490 = vector.extract_strided_slice %462 {offsets = [0, 4], sizes = [1, 1], strides = [1, 1]} : vector<1x8xf32> to vector<1x1xf32>
    %491 = vector.extract_strided_slice %474 {offsets = [4, 0], sizes = [1, 1], strides = [1, 1]} : vector<8x1xf32> to vector<1x1xf32>
    %492 = arith.mulf %490, %491 : vector<1x1xf32>
    %493 = arith.addf %489, %492 : vector<1x1xf32>
    %494 = vector.extract_strided_slice %462 {offsets = [0, 5], sizes = [1, 1], strides = [1, 1]} : vector<1x8xf32> to vector<1x1xf32>
    %495 = vector.extract_strided_slice %474 {offsets = [5, 0], sizes = [1, 1], strides = [1, 1]} : vector<8x1xf32> to vector<1x1xf32>
    %496 = arith.mulf %494, %495 : vector<1x1xf32>
    %497 = arith.addf %493, %496 : vector<1x1xf32>
    %498 = vector.extract_strided_slice %462 {offsets = [0, 6], sizes = [1, 1], strides = [1, 1]} : vector<1x8xf32> to vector<1x1xf32>
    %499 = vector.extract_strided_slice %474 {offsets = [6, 0], sizes = [1, 1], strides = [1, 1]} : vector<8x1xf32> to vector<1x1xf32>
    %500 = arith.mulf %498, %499 : vector<1x1xf32>
    %501 = arith.addf %497, %500 : vector<1x1xf32>
    %502 = vector.extract_strided_slice %462 {offsets = [0, 7], sizes = [1, 1], strides = [1, 1]} : vector<1x8xf32> to vector<1x1xf32>
    %503 = vector.extract_strided_slice %474 {offsets = [7, 0], sizes = [1, 1], strides = [1, 1]} : vector<8x1xf32> to vector<1x1xf32>
    %504 = arith.mulf %502, %503 : vector<1x1xf32>
    %505 = arith.addf %501, %504 : vector<1x1xf32>
    %506 = arith.addf %505, %463 : vector<1x1xf32>
    %cst_75 = arith.constant 0.000000e+00 : f32
    %507 = vector.broadcast %cst_75 : f32 to vector<1x1xf32>
    %508 = arith.cmpf oge, %506, %507 : vector<1x1xf32>
    %cst_76 = arith.constant 0.00999999977 : f32
    %509 = vector.broadcast %cst_76 : f32 to vector<1x1xf32>
    %510 = arith.mulf %506, %509 : vector<1x1xf32>
    %511 = arith.select %508, %506, %510 : vector<1x1xi1>, vector<1x1xf32>
    %512 = vector.broadcast %511 : vector<1x1xf32> to vector<8x1xf32>
    %513 = arith.mulf %464, %512 : vector<8x1xf32>
    %514 = vector.extract_strided_slice %4 {offsets = [0, 3], sizes = [8, 1], strides = [1, 1]} : vector<8x6xf32> to vector<8x1xf32>
    %515 = arith.addf %513, %514 : vector<8x1xf32>
    %cst_77 = arith.constant 0.000000e+00 : f32
    %516 = vector.broadcast %cst_77 : f32 to vector<8x1xf32>
    %517 = arith.subf %516, %515 : vector<8x1xf32>
    %518 = math.exp %517 : vector<8x1xf32>
    %cst_78 = arith.constant 1.000000e+00 : f32
    %519 = vector.broadcast %cst_78 : f32 to vector<8x1xf32>
    %520 = arith.addf %519, %518 : vector<8x1xf32>
    %cst_79 = arith.constant 1.000000e+00 : f32
    %521 = vector.broadcast %cst_79 : f32 to vector<8x1xf32>
    %522 = arith.divf %521, %520 : vector<8x1xf32>
    %523 = arith.mulf %522, %469 : vector<8x1xf32>
    %524 = arith.addf %465, %523 : vector<8x1xf32>
    %525 = arith.mulf %522, %522 : vector<8x1xf32>
    %526 = arith.mulf %525, %472 : vector<8x1xf32>
    %527 = arith.addf %466, %526 : vector<8x1xf32>
    %528 = vector.extract_strided_slice %460 {offsets = [0, 256], sizes = [8, 256], strides = [1, 1]} : vector<8x512xf32> to vector<8x256xf32>
    %cst_80 = arith.constant dense<0.000000e+00> : vector<8xf32>
    %529 = vector.multi_reduction <add>, %528, %cst_80 [1] : vector<8x256xf32> to vector<8xf32>
    %530 = vector.shape_cast %529 : vector<8xf32> to vector<8x1xf32>
    %531 = arith.mulf %528, %528 : vector<8x256xf32>
    %cst_81 = arith.constant dense<0.000000e+00> : vector<8xf32>
    %532 = vector.multi_reduction <add>, %531, %cst_81 [1] : vector<8x256xf32> to vector<8xf32>
    %533 = vector.shape_cast %532 : vector<8xf32> to vector<8x1xf32>
    %cst_82 = arith.constant 3.906250e-03 : f32
    %534 = vector.broadcast %cst_82 : f32 to vector<8x1xf32>
    %535 = arith.mulf %530, %534 : vector<8x1xf32>
    %536 = vector.extract_strided_slice %462 {offsets = [0, 0], sizes = [1, 1], strides = [1, 1]} : vector<1x8xf32> to vector<1x1xf32>
    %537 = vector.extract_strided_slice %535 {offsets = [0, 0], sizes = [1, 1], strides = [1, 1]} : vector<8x1xf32> to vector<1x1xf32>
    %538 = arith.mulf %536, %537 : vector<1x1xf32>
    %539 = vector.extract_strided_slice %462 {offsets = [0, 1], sizes = [1, 1], strides = [1, 1]} : vector<1x8xf32> to vector<1x1xf32>
    %540 = vector.extract_strided_slice %535 {offsets = [1, 0], sizes = [1, 1], strides = [1, 1]} : vector<8x1xf32> to vector<1x1xf32>
    %541 = arith.mulf %539, %540 : vector<1x1xf32>
    %542 = arith.addf %538, %541 : vector<1x1xf32>
    %543 = vector.extract_strided_slice %462 {offsets = [0, 2], sizes = [1, 1], strides = [1, 1]} : vector<1x8xf32> to vector<1x1xf32>
    %544 = vector.extract_strided_slice %535 {offsets = [2, 0], sizes = [1, 1], strides = [1, 1]} : vector<8x1xf32> to vector<1x1xf32>
    %545 = arith.mulf %543, %544 : vector<1x1xf32>
    %546 = arith.addf %542, %545 : vector<1x1xf32>
    %547 = vector.extract_strided_slice %462 {offsets = [0, 3], sizes = [1, 1], strides = [1, 1]} : vector<1x8xf32> to vector<1x1xf32>
    %548 = vector.extract_strided_slice %535 {offsets = [3, 0], sizes = [1, 1], strides = [1, 1]} : vector<8x1xf32> to vector<1x1xf32>
    %549 = arith.mulf %547, %548 : vector<1x1xf32>
    %550 = arith.addf %546, %549 : vector<1x1xf32>
    %551 = vector.extract_strided_slice %462 {offsets = [0, 4], sizes = [1, 1], strides = [1, 1]} : vector<1x8xf32> to vector<1x1xf32>
    %552 = vector.extract_strided_slice %535 {offsets = [4, 0], sizes = [1, 1], strides = [1, 1]} : vector<8x1xf32> to vector<1x1xf32>
    %553 = arith.mulf %551, %552 : vector<1x1xf32>
    %554 = arith.addf %550, %553 : vector<1x1xf32>
    %555 = vector.extract_strided_slice %462 {offsets = [0, 5], sizes = [1, 1], strides = [1, 1]} : vector<1x8xf32> to vector<1x1xf32>
    %556 = vector.extract_strided_slice %535 {offsets = [5, 0], sizes = [1, 1], strides = [1, 1]} : vector<8x1xf32> to vector<1x1xf32>
    %557 = arith.mulf %555, %556 : vector<1x1xf32>
    %558 = arith.addf %554, %557 : vector<1x1xf32>
    %559 = vector.extract_strided_slice %462 {offsets = [0, 6], sizes = [1, 1], strides = [1, 1]} : vector<1x8xf32> to vector<1x1xf32>
    %560 = vector.extract_strided_slice %535 {offsets = [6, 0], sizes = [1, 1], strides = [1, 1]} : vector<8x1xf32> to vector<1x1xf32>
    %561 = arith.mulf %559, %560 : vector<1x1xf32>
    %562 = arith.addf %558, %561 : vector<1x1xf32>
    %563 = vector.extract_strided_slice %462 {offsets = [0, 7], sizes = [1, 1], strides = [1, 1]} : vector<1x8xf32> to vector<1x1xf32>
    %564 = vector.extract_strided_slice %535 {offsets = [7, 0], sizes = [1, 1], strides = [1, 1]} : vector<8x1xf32> to vector<1x1xf32>
    %565 = arith.mulf %563, %564 : vector<1x1xf32>
    %566 = arith.addf %562, %565 : vector<1x1xf32>
    %567 = arith.addf %566, %463 : vector<1x1xf32>
    %cst_83 = arith.constant 0.000000e+00 : f32
    %568 = vector.broadcast %cst_83 : f32 to vector<1x1xf32>
    %569 = arith.cmpf oge, %567, %568 : vector<1x1xf32>
    %cst_84 = arith.constant 0.00999999977 : f32
    %570 = vector.broadcast %cst_84 : f32 to vector<1x1xf32>
    %571 = arith.mulf %567, %570 : vector<1x1xf32>
    %572 = arith.select %569, %567, %571 : vector<1x1xi1>, vector<1x1xf32>
    %573 = vector.broadcast %572 : vector<1x1xf32> to vector<8x1xf32>
    %574 = arith.mulf %464, %573 : vector<8x1xf32>
    %575 = vector.extract_strided_slice %4 {offsets = [0, 3], sizes = [8, 1], strides = [1, 1]} : vector<8x6xf32> to vector<8x1xf32>
    %576 = arith.addf %574, %575 : vector<8x1xf32>
    %cst_85 = arith.constant 0.000000e+00 : f32
    %577 = vector.broadcast %cst_85 : f32 to vector<8x1xf32>
    %578 = arith.subf %577, %576 : vector<8x1xf32>
    %579 = math.exp %578 : vector<8x1xf32>
    %cst_86 = arith.constant 1.000000e+00 : f32
    %580 = vector.broadcast %cst_86 : f32 to vector<8x1xf32>
    %581 = arith.addf %580, %579 : vector<8x1xf32>
    %cst_87 = arith.constant 1.000000e+00 : f32
    %582 = vector.broadcast %cst_87 : f32 to vector<8x1xf32>
    %583 = arith.divf %582, %581 : vector<8x1xf32>
    %584 = arith.mulf %583, %530 : vector<8x1xf32>
    %585 = arith.addf %524, %584 : vector<8x1xf32>
    %586 = arith.mulf %583, %583 : vector<8x1xf32>
    %587 = arith.mulf %586, %533 : vector<8x1xf32>
    %588 = arith.addf %527, %587 : vector<8x1xf32>
    %cst_88 = arith.constant 0.001953125 : f32
    %589 = vector.broadcast %cst_88 : f32 to vector<8x1xf32>
    %590 = arith.mulf %585, %589 : vector<8x1xf32>
    %cst_89 = arith.constant 0.001953125 : f32
    %591 = vector.broadcast %cst_89 : f32 to vector<8x1xf32>
    %592 = arith.mulf %588, %591 : vector<8x1xf32>
    %593 = arith.mulf %590, %590 : vector<8x1xf32>
    %594 = arith.subf %592, %593 : vector<8x1xf32>
    %cst_90 = arith.constant 0.000000e+00 : f32
    %595 = vector.broadcast %cst_90 : f32 to vector<8x1xf32>
    %596 = arith.maximumf %594, %595 : vector<8x1xf32>
    %597 = vector.extract_strided_slice %4 {offsets = [0, 4], sizes = [8, 1], strides = [1, 1]} : vector<8x6xf32> to vector<8x1xf32>
    %cst_91 = arith.constant 9.99999974E-6 : f32
    %598 = vector.broadcast %cst_91 : f32 to vector<8x1xf32>
    %599 = arith.addf %596, %598 : vector<8x1xf32>
    %600 = math.rsqrt %599 : vector<8x1xf32>
    %601 = arith.mulf %597, %600 : vector<8x1xf32>
    %602 = vector.extract_strided_slice %4 {offsets = [0, 5], sizes = [8, 1], strides = [1, 1]} : vector<8x6xf32> to vector<8x1xf32>
    %603 = arith.mulf %590, %601 : vector<8x1xf32>
    %604 = arith.subf %602, %603 : vector<8x1xf32>
    %605 = arith.mulf %522, %601 : vector<8x1xf32>
    %606 = vector.extract_strided_slice %460 {offsets = [0, 0], sizes = [8, 256], strides = [1, 1]} : vector<8x512xf32> to vector<8x256xf32>
    %607 = vector.broadcast %605 : vector<8x1xf32> to vector<8x256xf32>
    %608 = arith.mulf %606, %607 : vector<8x256xf32>
    %609 = vector.broadcast %604 : vector<8x1xf32> to vector<8x256xf32>
    %610 = arith.addf %608, %609 : vector<8x256xf32>
    %cst_92 = arith.constant 0.000000e+00 : f32
    %611 = vector.broadcast %cst_92 : f32 to vector<8x256xf32>
    %612 = arith.cmpf oge, %610, %611 : vector<8x256xf32>
    %cst_93 = arith.constant 0.00999999977 : f32
    %613 = vector.broadcast %cst_93 : f32 to vector<8x256xf32>
    %614 = arith.mulf %610, %613 : vector<8x256xf32>
    %615 = arith.select %612, %610, %614 : vector<8x256xi1>, vector<8x256xf32>
    %c0_94 = arith.constant 0 : index
    %c0_95 = arith.constant 0 : index
    %616 = vector.load %arg13[%c0_94, %c0_95] : memref<8x512xf32, #tpu.memory_space<vmem>>, vector<8x256xf32>
    tpu.vector_store %arg13[%c0_94, %c0_95], %615 {strides = array<i32>} : memref<8x512xf32, #tpu.memory_space<vmem>>, vector<8x256xf32>,
    %617 = arith.mulf %583, %601 : vector<8x1xf32>
    %618 = vector.extract_strided_slice %460 {offsets = [0, 256], sizes = [8, 256], strides = [1, 1]} : vector<8x512xf32> to vector<8x256xf32>
    %619 = vector.broadcast %617 : vector<8x1xf32> to vector<8x256xf32>
    %620 = arith.mulf %618, %619 : vector<8x256xf32>
    %621 = vector.broadcast %604 : vector<8x1xf32> to vector<8x256xf32>
    %622 = arith.addf %620, %621 : vector<8x256xf32>
    %cst_96 = arith.constant 0.000000e+00 : f32
    %623 = vector.broadcast %cst_96 : f32 to vector<8x256xf32>
    %624 = arith.cmpf oge, %622, %623 : vector<8x256xf32>
    %cst_97 = arith.constant 0.00999999977 : f32
    %625 = vector.broadcast %cst_97 : f32 to vector<8x256xf32>
    %626 = arith.mulf %622, %625 : vector<8x256xf32>
    %627 = arith.select %624, %622, %626 : vector<8x256xi1>, vector<8x256xf32>
    %c0_98 = arith.constant 0 : index
    %c256 = arith.constant 256 : index
    %628 = vector.load %arg13[%c0_98, %c256] : memref<8x512xf32, #tpu.memory_space<vmem>>, vector<8x256xf32>
    tpu.vector_store %arg13[%c0_98, %c256], %627 {strides = array<i32>} : memref<8x512xf32, #tpu.memory_space<vmem>>, vector<8x256xf32>,
    return
  }
  func.func @transform_0(%arg0: i32) -> (i32, i32) {
    %c0_i32 = arith.constant 0 : i32
    %c0_i32_0 = arith.constant 0 : i32
    %c0_i32_1 = arith.constant 0 : i32
    return %c0_i32, %c0_i32_0 : i32, i32
  }
  func.func @transform_1(%arg0: i32) -> (i32, i32) {
    %c0_i32 = arith.constant 0 : i32
    %c0_i32_0 = arith.constant 0 : i32
    %c0_i32_1 = arith.constant 0 : i32
    return %c0_i32, %c0_i32_0 : i32, i32
  }
  func.func @transform_2(%arg0: i32) -> (i32, i32) {
    %c0_i32 = arith.constant 0 : i32
    %c0_i32_0 = arith.constant 0 : i32
    %c0_i32_1 = arith.constant 0 : i32
    return %c0_i32, %c0_i32_0 : i32, i32
  }
  func.func @transform_3(%arg0: i32) -> (i32, i32) {
    %c0_i32 = arith.constant 0 : i32
    %c0_i32_0 = arith.constant 0 : i32
    %c0_i32_1 = arith.constant 0 : i32
    return %c0_i32, %c0_i32_0 : i32, i32
  }
  func.func @transform_4(%arg0: i32) -> (i32, i32) {
    %c0_i32 = arith.constant 0 : i32
    %c0_i32_0 = arith.constant 0 : i32
    %c0_i32_1 = arith.constant 0 : i32
    return %c0_i32, %c0_i32_0 : i32, i32
  }
  func.func @transform_5(%arg0: i32) -> (i32, i32) {
    %c0_i32 = arith.constant 0 : i32
    %c0_i32_0 = arith.constant 0 : i32
    %c0_i32_1 = arith.constant 0 : i32
    return %c0_i32, %c0_i32_0 : i32, i32
  }
  func.func @transform_6(%arg0: i32) -> (i32, i32) {
    %c0_i32 = arith.constant 0 : i32
    %c0_i32_0 = arith.constant 0 : i32
    %c0_i32_1 = arith.constant 0 : i32
    return %c0_i32, %c0_i32_0 : i32, i32
  }
  func.func @transform_7(%arg0: i32) -> (i32, i32) {
    %c0_i32 = arith.constant 0 : i32
    %c0_i32_0 = arith.constant 0 : i32
    %c0_i32_1 = arith.constant 0 : i32
    return %c0_i32, %c0_i32_0 : i32, i32
  }
  func.func @transform_8(%arg0: i32) -> (i32, i32) {
    %c0_i32 = arith.constant 0 : i32
    %c0_i32_0 = arith.constant 0 : i32
    %c0_i32_1 = arith.constant 0 : i32
    return %c0_i32, %c0_i32_0 : i32, i32
  }
  func.func @transform_9(%arg0: i32) -> (i32, i32) {
    %c0_i32 = arith.constant 0 : i32
    %c0_i32_0 = arith.constant 0 : i32
    %c0_i32_1 = arith.constant 0 : i32
    return %c0_i32, %c0_i32_0 : i32, i32
  }
  func.func @transform_10(%arg0: i32) -> (i32, i32) {
    %c0_i32 = arith.constant 0 : i32
    %c0_i32_0 = arith.constant 0 : i32
    %c0_i32_1 = arith.constant 0 : i32
    return %c0_i32, %c0_i32_0 : i32, i32
  }
  func.func @transform_11(%arg0: i32) -> (i32, i32) {
    %c0_i32 = arith.constant 0 : i32
    %c0_i32_0 = arith.constant 0 : i32
    %c0_i32_1 = arith.constant 0 : i32
    return %c0_i32, %c0_i32_0 : i32, i32
  }
  func.func @transform_12(%arg0: i32) -> (i32, i32) {
    %c0_i32 = arith.constant 0 : i32
    %c0_i32_0 = arith.constant 0 : i32
    %c0_i32_1 = arith.constant 0 : i32
    return %c0_i32, %c0_i32_0 : i32, i32
  }
}

</mosaic_0001>

<llo_original>
// kernel: pcblock_forward.1
$region0: #{pcblock_forward.1}
  #allocation0 [shape = 'u32[]', space=smem, size = 0x4, offset = 0x4, fixed_abs, tag = 'smem constant byte address 0x4 - core index']
  #allocation1 [shape = 'u32[144,128]{1,0:T(1,128)}', space=vmem, size = 0x12000, scoped, tag = 'internal scratch']
  %s0 = inlined_call_operand.vmem [shape: f32[4,512], index: 0, kind: input, shape index: {}]
  %s1 = inlined_call_operand.vmem [shape: f32[11,512], index: 1, kind: input, shape index: {}]
  %s2 = inlined_call_operand.vmem [shape: f32[12,4], index: 2, kind: input, shape index: {}]
  %s3 = inlined_call_operand.vmem [shape: f32[12,3], index: 3, kind: input, shape index: {}]
  %s4 = inlined_call_operand.vmem [shape: f32[4,12], index: 4, kind: input, shape index: {}]
  %s5 = inlined_call_operand.vmem [shape: f32[4,9], index: 5, kind: input, shape index: {}]
  %s6 = inlined_call_operand.vmem [shape: f32[4,8], index: 6, kind: input, shape index: {}]
  %s7 = inlined_call_operand.vmem [shape: f32[4,12], index: 7, kind: input, shape index: {}]
  %s8 = inlined_call_operand.vmem [shape: f32[8,4], index: 8, kind: input, shape index: {}]
  %s9 = inlined_call_operand.vmem [shape: f32[8,6], index: 9, kind: input, shape index: {}]
  %s10 = inlined_call_operand.vmem [shape: f32[1,9], index: 10, kind: input, shape index: {}]
  %s11 = inlined_call_operand.vmem [shape: f32[8,1], index: 11, kind: input, shape index: {}]
  %s12 = inlined_call_operand.vmem [shape: f32[8,512], index: 12, kind: output, shape index: {}]
  %s13 = sld [smem:[#allocation0]]
  $region58: #{pcblock_forward.1} parent=0
    _
  %s15 = ssub.s32 1, %s13
  %s16 = scalar_select 0, %s15, %s13
  // Predicated region
  $region2: #{pcblock_forward.1} parent=0 // pred_check
    _
  $region3: #{pcblock_forward.1} parent=0 // pred_check_branch
    %18 = sbr.rel (0) target = $region5
  $region4: #{pcblock_forward.1} parent=0 // pred_region
    _
  $region5: #{pcblock_forward.1} parent=0 // pred_fallthru
    _
  // Predicated region
  $region6: #{pcblock_forward.1} parent=0 // pred_check
    _
  $region7: #{pcblock_forward.1} parent=0 // pred_check_branch
    %20 = sbr.rel (0) target = $region9
  $region8: #{pcblock_forward.1} parent=0 // pred_region
    _
  $region9: #{pcblock_forward.1} parent=0 // pred_fallthru
    _
  // Predicated region
  $region10: #{pcblock_forward.1} parent=0 // pred_check
    _
  $region11: #{pcblock_forward.1} parent=0 // pred_check_branch
    %22 = sbr.rel (0) target = $region13
  $region12: #{pcblock_forward.1} parent=0 // pred_region
    _
  $region13: #{pcblock_forward.1} parent=0 // pred_fallthru
    _
  // Predicated region
  $region14: #{pcblock_forward.1} parent=0 // pred_check
    _
  $region15: #{pcblock_forward.1} parent=0 // pred_check_branch
    %24 = sbr.rel (0) target = $region17
  $region16: #{pcblock_forward.1} parent=0 // pred_region
    _
  $region17: #{pcblock_forward.1} parent=0 // pred_fallthru
    _
  // Predicated region
  $region18: #{pcblock_forward.1} parent=0 // pred_check
    _
  $region19: #{pcblock_forward.1} parent=0 // pred_check_branch
    %26 = sbr.rel (0) target = $region21
  $region20: #{pcblock_forward.1} parent=0 // pred_region
    _
  $region21: #{pcblock_forward.1} parent=0 // pred_fallthru
    _
  // Predicated region
  $region22: #{pcblock_forward.1} parent=0 // pred_check
    _
  $region23: #{pcblock_forward.1} parent=0 // pred_check_branch
    %28 = sbr.rel (0) target = $region25
  $region24: #{pcblock_forward.1} parent=0 // pred_region
    _
  $region25: #{pcblock_forward.1} parent=0 // pred_fallthru
    _
  // Predicated region
  $region26: #{pcblock_forward.1} parent=0 // pred_check
    _
  $region27: #{pcblock_forward.1} parent=0 // pred_check_branch
    %30 = sbr.rel (0) target = $region29
  $region28: #{pcblock_forward.1} parent=0 // pred_region
    _
  $region29: #{pcblock_forward.1} parent=0 // pred_fallthru
    _
  // Predicated region
  $region30: #{pcblock_forward.1} parent=0 // pred_check
    _
  $region31: #{pcblock_forward.1} parent=0 // pred_check_branch
    %32 = sbr.rel (0) target = $region33
  $region32: #{pcblock_forward.1} parent=0 // pred_region
    _
  $region33: #{pcblock_forward.1} parent=0 // pred_fallthru
    _
  // Predicated region
  $region34: #{pcblock_forward.1} parent=0 // pred_check
    _
  $region35: #{pcblock_forward.1} parent=0 // pred_check_branch
    %34 = sbr.rel (0) target = $region37
  $region36: #{pcblock_forward.1} parent=0 // pred_region
    _
  $region37: #{pcblock_forward.1} parent=0 // pred_fallthru
    _
  // Predicated region
  $region38: #{pcblock_forward.1} parent=0 // pred_check
    _
  $region39: #{pcblock_forward.1} parent=0 // pred_check_branch
    %36 = sbr.rel (0) target = $region41
  $region40: #{pcblock_forward.1} parent=0 // pred_region
    _
  $region41: #{pcblock_forward.1} parent=0 // pred_fallthru
    _
  // Predicated region
  $region42: #{pcblock_forward.1} parent=0 // pred_check
    _
  $region43: #{pcblock_forward.1} parent=0 // pred_check_branch
    %38 = sbr.rel (0) target = $region45
  $region44: #{pcblock_forward.1} parent=0 // pred_region
    _
  $region45: #{pcblock_forward.1} parent=0 // pred_fallthru
    _
  // Predicated region
  $region46: #{pcblock_forward.1} parent=0 // pred_check
    _
  $region47: #{pcblock_forward.1} parent=0 // pred_check_branch
    %40 = sbr.rel (0) target = $region49
  $region48: #{pcblock_forward.1} parent=0 // pred_region
    _
  $region49: #{pcblock_forward.1} parent=0 // pred_fallthru
    _
  %v41 = vld [vmem:[%s0] sm:$0xff]
  %v42 = vld [vmem:[%s0 + $0x8] sm:$0xff]
  %v43 = vld [vmem:[%s1] sm:$0xff]
  %v44 = vld [vmem:[%s1 + $0x8] sm:$0xff]
  %v45 = vld [vmem:[%s1 + $0x10] sm:$0xff]
  %v46 = vld [vmem:[%s1 + $0x18] sm:$0xff]
  %v47 = vld [vmem:[%s1 + $0x20] sm:$0x7]
  %v48 = vld [vmem:[%s1 + $0x28] sm:$0x7]
  %v49 = vld [vmem:[%s1 + $0x30] sm:$0x7]
  %v50 = vld [vmem:[%s1 + $0x38] sm:$0x7]
  %v51 = vld [vmem:[%s3] sm:$0xff]
  %v52 = vld [vmem:[%s3 + $0x8] sm:$0xf]
  %v53 = vld [vmem:[%s6] sm:$0xf]
  %v54 = vld [vmem:[%s9] sm:$0xff]
  %v55 = vld [vmem:[%s2] sm:$0xff]
  %v56 = vld [vmem:[%s2 + $0x8] sm:$0xf]
  %58 = vset.pattern.permute.xlu0 0
  %59 = vperm.xlu0 %58, %v55
  %v60 = vpop.permute.xlu0 %59
  %63 = vset.pattern.permute.xlu0 0
  %64 = vperm.xlu0 %63, %v56
  %v65 = vpop.permute.xlu0 %64
  %v69 = vlaneseq
  %v70 = vshrl.u32 %v69, 7
  %v71 = vsub.s32 0, %v70
  %v72 = vrot.slane %v41, %v71
  %v73 = vlaneseq
  %v74 = vshrl.u32 %v73, 7
  %v75 = vsub.s32 4, %v74
  %v76 = vrot.slane %v41, %v75
  %v77 = vlaneseq
  %v78 = vshrl.u32 %v77, 7
  %v79 = vsub.s32 0, %v78
  %v80 = vrot.slane %v42, %v79
  %v81 = vlaneseq
  %v82 = vshrl.u32 %v81, 7
  %v83 = vsub.s32 4, %v82
  %v84 = vrot.slane %v42, %v83
  %v89 = vlaneseq
  %v90 = vshrl.u32 %v89, 7
  %v91 = vsub.s32 0, %v90
  %v92 = vrot.slane %v72, %v91
  %v93 = vlaneseq
  %v94 = vshrl.u32 %v93, 7
  %v95 = vsub.s32 0, %v94
  %v96 = vrot.slane %v76, %v95
  %v97 = vlaneseq
  %v98 = vshrl.u32 %v97, 7
  %v99 = vsub.s32 0, %v98
  %v100 = vrot.slane %v80, %v99
  %v101 = vlaneseq
  %v102 = vshrl.u32 %v101, 7
  %v103 = vsub.s32 0, %v102
  %v104 = vrot.slane %v84, %v103
  %v105 = vmul.f32 %v60, %v92
  %v106 = vmul.f32 %v60, %v96
  %v107 = vmul.f32 %v60, %v100
  %v108 = vmul.f32 %v60, %v104
  %v109 = vmul.f32 %v65, %v92
  %v110 = vmul.f32 %v65, %v96
  %v111 = vmul.f32 %v65, %v100
  %v112 = vmul.f32 %v65, %v104
  %113 = vset.pattern.permute.xlu0 1
  %114 = vperm.xlu0 %113, %v55
  %v115 = vpop.permute.xlu0 %114
  %117 = vset.pattern.permute.xlu0 1
  %118 = vperm.xlu0 %117, %v56
  %v119 = vpop.permute.xlu0 %118
  %v121 = vlaneseq
  %v122 = vshrl.u32 %v121, 7
  %v123 = vsub.s32 1, %v122
  %v124 = vrot.slane %v41, %v123
  %v125 = vlaneseq
  %v126 = vshrl.u32 %v125, 7
  %v127 = vsub.s32 5, %v126
  %v128 = vrot.slane %v41, %v127
  %v129 = vlaneseq
  %v130 = vshrl.u32 %v129, 7
  %v131 = vsub.s32 1, %v130
  %v132 = vrot.slane %v42, %v131
  %v133 = vlaneseq
  %v134 = vshrl.u32 %v133, 7
  %v135 = vsub.s32 5, %v134
  %v136 = vrot.slane %v42, %v135
  %v141 = vlaneseq
  %v142 = vshrl.u32 %v141, 7
  %v143 = vsub.s32 1, %v142
  %v144 = vrot.slane %v124, %v143
  %v145 = vlaneseq
  %v146 = vshrl.u32 %v145, 7
  %v147 = vsub.s32 1, %v146
  %v148 = vrot.slane %v128, %v147
  %v149 = vlaneseq
  %v150 = vshrl.u32 %v149, 7
  %v151 = vsub.s32 1, %v150
  %v152 = vrot.slane %v132, %v151
  %v153 = vlaneseq
  %v154 = vshrl.u32 %v153, 7
  %v155 = vsub.s32 1, %v154
  %v156 = vrot.slane %v136, %v155
  %v157 = vmul.f32 %v115, %v144
  %v158 = vmul.f32 %v115, %v148
  %v159 = vmul.f32 %v115, %v152
  %v160 = vmul.f32 %v115, %v156
  %v161 = vmul.f32 %v119, %v144
  %v162 = vmul.f32 %v119, %v148
  %v163 = vmul.f32 %v119, %v152
  %v164 = vmul.f32 %v119, %v156
  %v165 = vadd.f32 %v105, %v157
  %v166 = vadd.f32 %v106, %v158
  %v167 = vadd.f32 %v107, %v159
  %v168 = vadd.f32 %v108, %v160
  %v169 = vadd.f32 %v109, %v161
  %v170 = vadd.f32 %v110, %v162
  %v171 = vadd.f32 %v111, %v163
  %v172 = vadd.f32 %v112, %v164
  %173 = vset.pattern.permute.xlu0 2
  %174 = vperm.xlu0 %173, %v55
  %v175 = vpop.permute.xlu0 %174
  %177 = vset.pattern.permute.xlu0 2
  %178 = vperm.xlu0 %177, %v56
  %v179 = vpop.permute.xlu0 %178
  %v181 = vlaneseq
  %v182 = vshrl.u32 %v181, 7
  %v183 = vsub.s32 2, %v182
  %v184 = vrot.slane %v41, %v183
  %v185 = vlaneseq
  %v186 = vshrl.u32 %v185, 7
  %v187 = vsub.s32 6, %v186
  %v188 = vrot.slane %v41, %v187
  %v189 = vlaneseq
  %v190 = vshrl.u32 %v189, 7
  %v191 = vsub.s32 2, %v190
  %v192 = vrot.slane %v42, %v191
  %v193 = vlaneseq
  %v194 = vshrl.u32 %v193, 7
  %v195 = vsub.s32 6, %v194
  %v196 = vrot.slane %v42, %v195
  %v201 = vlaneseq
  %v202 = vshrl.u32 %v201, 7
  %v203 = vsub.s32 2, %v202
  %v204 = vrot.slane %v184, %v203
  %v205 = vlaneseq
  %v206 = vshrl.u32 %v205, 7
  %v207 = vsub.s32 2, %v206
  %v208 = vrot.slane %v188, %v207
  %v209 = vlaneseq
  %v210 = vshrl.u32 %v209, 7
  %v211 = vsub.s32 2, %v210
  %v212 = vrot.slane %v192, %v211
  %v213 = vlaneseq
  %v214 = vshrl.u32 %v213, 7
  %v215 = vsub.s32 2, %v214
  %v216 = vrot.slane %v196, %v215
  %v217 = vmul.f32 %v175, %v204
  %v218 = vmul.f32 %v175, %v208
  %v219 = vmul.f32 %v175, %v212
  %v220 = vmul.f32 %v175, %v216
  %v221 = vmul.f32 %v179, %v204
  %v222 = vmul.f32 %v179, %v208
  %v223 = vmul.f32 %v179, %v212
  %v224 = vmul.f32 %v179, %v216
  %v225 = vadd.f32 %v165, %v217
  %v226 = vadd.f32 %v166, %v218
  %v227 = vadd.f32 %v167, %v219
  %v228 = vadd.f32 %v168, %v220
  %v229 = vadd.f32 %v169, %v221
  %v230 = vadd.f32 %v170, %v222
  %v231 = vadd.f32 %v171, %v223
  %v232 = vadd.f32 %v172, %v224
  %233 = vset.pattern.permute.xlu0 3
  %234 = vperm.xlu0 %233, %v55
  %v235 = vpop.permute.xlu0 %234
  %237 = vset.pattern.permute.xlu0 3
  %238 = vperm.xlu0 %237, %v56
  %v239 = vpop.permute.xlu0 %238
  %v241 = vlaneseq
  %v242 = vshrl.u32 %v241, 7
  %v243 = vsub.s32 3, %v242
  %v244 = vrot.slane %v41, %v243
  %v245 = vlaneseq
  %v246 = vshrl.u32 %v245, 7
  %v247 = vsub.s32 7, %v246
  %v248 = vrot.slane %v41, %v247
  %v249 = vlaneseq
  %v250 = vshrl.u32 %v249, 7
  %v251 = vsub.s32 3, %v250
  %v252 = vrot.slane %v42, %v251
  %v253 = vlaneseq
  %v254 = vshrl.u32 %v253, 7
  %v255 = vsub.s32 7, %v254
  %v256 = vrot.slane %v42, %v255
  %v261 = vlaneseq
  %v262 = vshrl.u32 %v261, 7
  %v263 = vsub.s32 3, %v262
  %v264 = vrot.slane %v244, %v263
  %v265 = vlaneseq
  %v266 = vshrl.u32 %v265, 7
  %v267 = vsub.s32 3, %v266
  %v268 = vrot.slane %v248, %v267
  %v269 = vlaneseq
  %v270 = vshrl.u32 %v269, 7
  %v271 = vsub.s32 3, %v270
  %v272 = vrot.slane %v252, %v271
  %v273 = vlaneseq
  %v274 = vshrl.u32 %v273, 7
  %v275 = vsub.s32 3, %v274
  %v276 = vrot.slane %v256, %v275
  %v277 = vmul.f32 %v235, %v264
  %v278 = vmul.f32 %v235, %v268
  %v279 = vmul.f32 %v235, %v272
  %v280 = vmul.f32 %v235, %v276
  %v281 = vmul.f32 %v239, %v264
  %v282 = vmul.f32 %v239, %v268
  %v283 = vmul.f32 %v239, %v272
  %v284 = vmul.f32 %v239, %v276
  %v285 = vadd.f32 %v225, %v277
  %v286 = vadd.f32 %v226, %v278
  %v287 = vadd.f32 %v227, %v279
  %v288 = vadd.f32 %v228, %v280
  %v289 = vadd.f32 %v229, %v281
  %v290 = vadd.f32 %v230, %v282
  %v291 = vadd.f32 %v231, %v283
  %v292 = vadd.f32 %v232, %v284
  %294 = vset.pattern.permute.xlu0 0
  %295 = vperm.xlu0 %294, %v51
  %v296 = vpop.permute.xlu0 %295
  %299 = vset.pattern.permute.xlu0 0
  %300 = vperm.xlu0 %299, %v52
  %v301 = vpop.permute.xlu0 %300
  %v303 = vadd.f32 %v285, %v296
  %v304 = vadd.f32 %v286, %v296
  %v305 = vadd.f32 %v287, %v296
  %v306 = vadd.f32 %v288, %v296
  %v307 = vadd.f32 %v289, %v301
  %v308 = vadd.f32 %v290, %v301
  %v309 = vadd.f32 %v291, %v301
  %v310 = vadd.f32 %v292, %v301
  %v311 = vadd.f32 %v303, %v304
  %v312 = vadd.f32 %v311, %v305
  %v313 = vadd.f32 %v312, %v306
  %314 = vadd.xlane.f32.xlu0 %v313
  %v315 = vpop.xlane.xlu0 %314
  %vm316 = vcmask 1043456
  %v317 = vsel %vm316, %v307, 0.0
  %v318 = vsel %vm316, %v308, 0.0
  %v319 = vadd.f32 %v317, %v318
  %v320 = vsel %vm316, %v309, 0.0
  %v321 = vadd.f32 %v319, %v320
  %v322 = vsel %vm316, %v310, 0.0
  %v323 = vadd.f32 %v321, %v322
  %324 = vadd.xlane.f32.xlu0 %v323
  %v325 = vpop.xlane.xlu0 %324
  %v326 = vmul.f32 %v315, 0.001953125
  %v327 = vmul.f32 %v325, 0.001953125
  %v328 = vmul.f32 %v303, %v303
  %v329 = vmul.f32 %v304, %v304
  %v330 = vmul.f32 %v305, %v305
  %v331 = vmul.f32 %v306, %v306
  %v332 = vmul.f32 %v307, %v307
  %v333 = vmul.f32 %v308, %v308
  %v334 = vmul.f32 %v309, %v309
  %v335 = vmul.f32 %v310, %v310
  %v336 = vadd.f32 %v328, %v329
  %v337 = vadd.f32 %v336, %v330
  %v338 = vadd.f32 %v337, %v331
  %339 = vadd.xlane.f32.xlu0 %v338
  %v340 = vpop.xlane.xlu0 %339
  %v341 = vsel %vm316, %v332, 0.0
  %v342 = vsel %vm316, %v333, 0.0
  %v343 = vadd.f32 %v341, %v342
  %v344 = vsel %vm316, %v334, 0.0
  %v345 = vadd.f32 %v343, %v344
  %v346 = vsel %vm316, %v335, 0.0
  %v347 = vadd.f32 %v345, %v346
  %348 = vadd.xlane.f32.xlu0 %v347
  %v349 = vpop.xlane.xlu0 %348
  %v350 = vmul.f32 %v340, 0.001953125
  %v351 = vmul.f32 %v349, 0.001953125
  %v352 = vmul.f32 %v326, %v326
  %v353 = vmul.f32 %v327, %v327
  %v354 = vsub.f32 %v350, %v352
  %v355 = vsub.f32 %v351, %v353
  %v356 = vmax.f32 %v354, 0.0
  %v357 = vmax.f32 %v355, 0.0
  %v358 = vadd.f32 %v356, 1e-05
  %v359 = vadd.f32 %v357, 1e-05
  %v360 = vrsqrt.pop %v358
  %v361 = vrsqrt.pop %v359
  %v362 = vmul.f32 %v51, %v360
  %v363 = vmul.f32 %v52, %v361
  %365 = vset.pattern.permute.xlu0 1
  %366 = vperm.xlu0 %365, %v362
  %v367 = vpop.permute.xlu0 %366
  %370 = vset.pattern.permute.xlu0 1
  %371 = vperm.xlu0 %370, %v363
  %v372 = vpop.permute.xlu0 %371
  %v374 = vmul.f32 %v303, %v367
  %v375 = vmul.f32 %v304, %v367
  %v376 = vmul.f32 %v305, %v367
  %v377 = vmul.f32 %v306, %v367
  %v378 = vmul.f32 %v307, %v372
  %v379 = vmul.f32 %v308, %v372
  %v380 = vmul.f32 %v309, %v372
  %v381 = vmul.f32 %v310, %v372
  %v382 = vmul.f32 %v326, %v362
  %v383 = vmul.f32 %v327, %v363
  %386 = vrot.lane.b32.xlu0 %v382, 1
  %v387 = vpop.permute.xlu0 %386
  %388 = vrot.lane.b32.xlu0 %v383, 1
  %v389 = vpop.permute.xlu0 %388
  %v392 = vsub.f32 %v51, %v387
  %v393 = vsub.f32 %v52, %v389
  %395 = vset.pattern.permute.xlu0 2
  %396 = vperm.xlu0 %395, %v392
  %v397 = vpop.permute.xlu0 %396
  %400 = vset.pattern.permute.xlu0 2
  %401 = vperm.xlu0 %400, %v393
  %v402 = vpop.permute.xlu0 %401
  %v404 = vadd.f32 %v374, %v397
  %v405 = vadd.f32 %v375, %v397
  %v406 = vadd.f32 %v376, %v397
  %v407 = vadd.f32 %v377, %v397
  %v408 = vadd.f32 %v378, %v402
  %v409 = vadd.f32 %v379, %v402
  %v410 = vadd.f32 %v380, %v402
  %v411 = vadd.f32 %v381, %v402
  %vm412 = vcmp.ge.f32.partialorder %v404, 0.0
  %vm413 = vcmp.ge.f32.partialorder %v405, 0.0
  %vm414 = vcmp.ge.f32.partialorder %v406, 0.0
  %vm415 = vcmp.ge.f32.partialorder %v407, 0.0
  %vm416 = vcmp.ge.f32.partialorder %v408, 0.0
  %vm417 = vcmp.ge.f32.partialorder %v409, 0.0
  %vm418 = vcmp.ge.f32.partialorder %v410, 0.0
  %vm419 = vcmp.ge.f32.partialorder %v411, 0.0
  %v420 = vmul.f32 %v404, 0.01
  %v421 = vmul.f32 %v405, 0.01
  %v422 = vmul.f32 %v406, 0.01
  %v423 = vmul.f32 %v407, 0.01
  %v424 = vmul.f32 %v408, 0.01
  %v425 = vmul.f32 %v409, 0.01
  %v426 = vmul.f32 %v410, 0.01
  %v427 = vmul.f32 %v411, 0.01
  %v428 = vsel %vm412, %v404, %v420
  %v429 = vsel %vm413, %v405, %v421
  %v430 = vsel %vm414, %v406, %v422
  %v431 = vsel %vm415, %v407, %v423
  %v432 = vsel %vm416, %v408, %v424
  %v433 = vsel %vm417, %v409, %v425
  %v434 = vsel %vm418, %v410, %v426
  %v435 = vsel %vm419, %v411, %v427
  %v436 = vld [vmem:[%s4] sm:$0xf]
  %438 = vset.pattern.permute.xlu0 0
  %439 = vperm.xlu0 %438, %v436
  %v440 = vpop.permute.xlu0 %439
  %v442 = vlaneseq
  %v443 = vshrl.u32 %v442, 7
  %v444 = vsub.s32 0, %v443
  %v445 = vrot.slane %v428, %v444
  %v446 = vlaneseq
  %v447 = vshrl.u32 %v446, 7
  %v448 = vsub.s32 0, %v447
  %v449 = vrot.slane %v429, %v448
  %v450 = vlaneseq
  %v451 = vshrl.u32 %v450, 7
  %v452 = vsub.s32 0, %v451
  %v453 = vrot.slane %v430, %v452
  %v454 = vlaneseq
  %v455 = vshrl.u32 %v454, 7
  %v456 = vsub.s32 0, %v455
  %v457 = vrot.slane %v431, %v456
  %v458 = vmul.f32 %v440, %v445
  %v459 = vmul.f32 %v440, %v449
  %v460 = vmul.f32 %v440, %v453
  %v461 = vmul.f32 %v440, %v457
  %462 = vset.pattern.permute.xlu0 1
  %463 = vperm.xlu0 %462, %v436
  %v464 = vpop.permute.xlu0 %463
  %v466 = vlaneseq
  %v467 = vshrl.u32 %v466, 7
  %v468 = vsub.s32 1, %v467
  %v469 = vrot.slane %v428, %v468
  %v470 = vlaneseq
  %v471 = vshrl.u32 %v470, 7
  %v472 = vsub.s32 1, %v471
  %v473 = vrot.slane %v429, %v472
  %v474 = vlaneseq
  %v475 = vshrl.u32 %v474, 7
  %v476 = vsub.s32 1, %v475
  %v477 = vrot.slane %v430, %v476
  %v478 = vlaneseq
  %v479 = vshrl.u32 %v478, 7
  %v480 = vsub.s32 1, %v479
  %v481 = vrot.slane %v431, %v480
  %v482 = vmul.f32 %v464, %v469
  %v483 = vmul.f32 %v464, %v473
  %v484 = vmul.f32 %v464, %v477
  %v485 = vmul.f32 %v464, %v481
  %v486 = vadd.f32 %v458, %v482
  %v487 = vadd.f32 %v459, %v483
  %v488 = vadd.f32 %v460, %v484
  %v489 = vadd.f32 %v461, %v485
  %490 = vset.pattern.permute.xlu0 2
  %491 = vperm.xlu0 %490, %v436
  %v492 = vpop.permute.xlu0 %491
  %v494 = vlaneseq
  %v495 = vshrl.u32 %v494, 7
  %v496 = vsub.s32 2, %v495
  %v497 = vrot.slane %v428, %v496
  %v498 = vlaneseq
  %v499 = vshrl.u32 %v498, 7
  %v500 = vsub.s32 2, %v499
  %v501 = vrot.slane %v429, %v500
  %v502 = vlaneseq
  %v503 = vshrl.u32 %v502, 7
  %v504 = vsub.s32 2, %v503
  %v505 = vrot.slane %v430, %v504
  %v506 = vlaneseq
  %v507 = vshrl.u32 %v506, 7
  %v508 = vsub.s32 2, %v507
  %v509 = vrot.slane %v431, %v508
  %v510 = vmul.f32 %v492, %v497
  %v511 = vmul.f32 %v492, %v501
  %v512 = vmul.f32 %v492, %v505
  %v513 = vmul.f32 %v492, %v509
  %v514 = vadd.f32 %v486, %v510
  %v515 = vadd.f32 %v487, %v511
  %v516 = vadd.f32 %v488, %v512
  %v517 = vadd.f32 %v489, %v513
  %518 = vset.pattern.permute.xlu0 3
  %519 = vperm.xlu0 %518, %v436
  %v520 = vpop.permute.xlu0 %519
  %v522 = vlaneseq
  %v523 = vshrl.u32 %v522, 7
  %v524 = vsub.s32 3, %v523
  %v525 = vrot.slane %v428, %v524
  %v526 = vlaneseq
  %v527 = vshrl.u32 %v526, 7
  %v528 = vsub.s32 3, %v527
  %v529 = vrot.slane %v429, %v528
  %v530 = vlaneseq
  %v531 = vshrl.u32 %v530, 7
  %v532 = vsub.s32 3, %v531
  %v533 = vrot.slane %v430, %v532
  %v534 = vlaneseq
  %v535 = vshrl.u32 %v534, 7
  %v536 = vsub.s32 3, %v535
  %v537 = vrot.slane %v431, %v536
  %v538 = vmul.f32 %v520, %v525
  %v539 = vmul.f32 %v520, %v529
  %v540 = vmul.f32 %v520, %v533
  %v541 = vmul.f32 %v520, %v537
  %v542 = vadd.f32 %v514, %v538
  %v543 = vadd.f32 %v515, %v539
  %v544 = vadd.f32 %v516, %v540
  %v545 = vadd.f32 %v517, %v541
  %546 = vset.pattern.permute.xlu0 4
  %547 = vperm.xlu0 %546, %v436
  %v548 = vpop.permute.xlu0 %547
  %v550 = vlaneseq
  %v551 = vshrl.u32 %v550, 7
  %v552 = vsub.s32 4, %v551
  %v553 = vrot.slane %v428, %v552
  %v554 = vlaneseq
  %v555 = vshrl.u32 %v554, 7
  %v556 = vsub.s32 4, %v555
  %v557 = vrot.slane %v429, %v556
  %v558 = vlaneseq
  %v559 = vshrl.u32 %v558, 7
  %v560 = vsub.s32 4, %v559
  %v561 = vrot.slane %v430, %v560
  %v562 = vlaneseq
  %v563 = vshrl.u32 %v562, 7
  %v564 = vsub.s32 4, %v563
  %v565 = vrot.slane %v431, %v564
  %v566 = vmul.f32 %v548, %v553
  %v567 = vmul.f32 %v548, %v557
  %v568 = vmul.f32 %v548, %v561
  %v569 = vmul.f32 %v548, %v565
  %v570 = vadd.f32 %v542, %v566
  %v571 = vadd.f32 %v543, %v567
  %v572 = vadd.f32 %v544, %v568
  %v573 = vadd.f32 %v545, %v569
  %574 = vset.pattern.permute.xlu0 5
  %575 = vperm.xlu0 %574, %v436
  %v576 = vpop.permute.xlu0 %575
  %v578 = vlaneseq
  %v579 = vshrl.u32 %v578, 7
  %v580 = vsub.s32 5, %v579
  %v581 = vrot.slane %v428, %v580
  %v582 = vlaneseq
  %v583 = vshrl.u32 %v582, 7
  %v584 = vsub.s32 5, %v583
  %v585 = vrot.slane %v429, %v584
  %v586 = vlaneseq
  %v587 = vshrl.u32 %v586, 7
  %v588 = vsub.s32 5, %v587
  %v589 = vrot.slane %v430, %v588
  %v590 = vlaneseq
  %v591 = vshrl.u32 %v590, 7
  %v592 = vsub.s32 5, %v591
  %v593 = vrot.slane %v431, %v592
  %v594 = vmul.f32 %v576, %v581
  %v595 = vmul.f32 %v576, %v585
  %v596 = vmul.f32 %v576, %v589
  %v597 = vmul.f32 %v576, %v593
  %v598 = vadd.f32 %v570, %v594
  %v599 = vadd.f32 %v571, %v595
  %v600 = vadd.f32 %v572, %v596
  %v601 = vadd.f32 %v573, %v597
  %602 = vset.pattern.permute.xlu0 6
  %603 = vperm.xlu0 %602, %v436
  %v604 = vpop.permute.xlu0 %603
  %v606 = vlaneseq
  %v607 = vshrl.u32 %v606, 7
  %v608 = vsub.s32 6, %v607
  %v609 = vrot.slane %v428, %v608
  %v610 = vlaneseq
  %v611 = vshrl.u32 %v610, 7
  %v612 = vsub.s32 6, %v611
  %v613 = vrot.slane %v429, %v612
  %v614 = vlaneseq
  %v615 = vshrl.u32 %v614, 7
  %v616 = vsub.s32 6, %v615
  %v617 = vrot.slane %v430, %v616
  %v618 = vlaneseq
  %v619 = vshrl.u32 %v618, 7
  %v620 = vsub.s32 6, %v619
  %v621 = vrot.slane %v431, %v620
  %v622 = vmul.f32 %v604, %v609
  %v623 = vmul.f32 %v604, %v613
  %v624 = vmul.f32 %v604, %v617
  %v625 = vmul.f32 %v604, %v621
  %v626 = vadd.f32 %v598, %v622
  %v627 = vadd.f32 %v599, %v623
  %v628 = vadd.f32 %v600, %v624
  %v629 = vadd.f32 %v601, %v625
  %630 = vset.pattern.permute.xlu0 7
  %631 = vperm.xlu0 %630, %v436
  %v632 = vpop.permute.xlu0 %631
  %v634 = vlaneseq
  %v635 = vshrl.u32 %v634, 7
  %v636 = vsub.s32 7, %v635
  %v637 = vrot.slane %v428, %v636
  %v638 = vlaneseq
  %v639 = vshrl.u32 %v638, 7
  %v640 = vsub.s32 7, %v639
  %v641 = vrot.slane %v429, %v640
  %v642 = vlaneseq
  %v643 = vshrl.u32 %v642, 7
  %v644 = vsub.s32 7, %v643
  %v645 = vrot.slane %v430, %v644
  %v646 = vlaneseq
  %v647 = vshrl.u32 %v646, 7
  %v648 = vsub.s32 7, %v647
  %v649 = vrot.slane %v431, %v648
  %v650 = vmul.f32 %v632, %v637
  %v651 = vmul.f32 %v632, %v641
  %v652 = vmul.f32 %v632, %v645
  %v653 = vmul.f32 %v632, %v649
  %v654 = vadd.f32 %v626, %v650
  %v655 = vadd.f32 %v627, %v651
  %v656 = vadd.f32 %v628, %v652
  %v657 = vadd.f32 %v629, %v653
  %658 = vset.pattern.permute.xlu0 8
  %659 = vperm.xlu0 %658, %v436
  %v660 = vpop.permute.xlu0 %659
  %v662 = vlaneseq
  %v663 = vshrl.u32 %v662, 7
  %v664 = vsub.s32 0, %v663
  %v665 = vrot.slane %v432, %v664
  %v666 = vlaneseq
  %v667 = vshrl.u32 %v666, 7
  %v668 = vsub.s32 0, %v667
  %v669 = vrot.slane %v433, %v668
  %v670 = vlaneseq
  %v671 = vshrl.u32 %v670, 7
  %v672 = vsub.s32 0, %v671
  %v673 = vrot.slane %v434, %v672
  %v674 = vlaneseq
  %v675 = vshrl.u32 %v674, 7
  %v676 = vsub.s32 0, %v675
  %v677 = vrot.slane %v435, %v676
  %v678 = vmul.f32 %v660, %v665
  %v679 = vmul.f32 %v660, %v669
  %v680 = vmul.f32 %v660, %v673
  %v681 = vmul.f32 %v660, %v677
  %v682 = vadd.f32 %v654, %v678
  %v683 = vadd.f32 %v655, %v679
  %v684 = vadd.f32 %v656, %v680
  %v685 = vadd.f32 %v657, %v681
  %686 = vset.pattern.permute.xlu0 9
  %687 = vperm.xlu0 %686, %v436
  %v688 = vpop.permute.xlu0 %687
  %v690 = vlaneseq
  %v691 = vshrl.u32 %v690, 7
  %v692 = vsub.s32 1, %v691
  %v693 = vrot.slane %v432, %v692
  %v694 = vlaneseq
  %v695 = vshrl.u32 %v694, 7
  %v696 = vsub.s32 1, %v695
  %v697 = vrot.slane %v433, %v696
  %v698 = vlaneseq
  %v699 = vshrl.u32 %v698, 7
  %v700 = vsub.s32 1, %v699
  %v701 = vrot.slane %v434, %v700
  %v702 = vlaneseq
  %v703 = vshrl.u32 %v702, 7
  %v704 = vsub.s32 1, %v703
  %v705 = vrot.slane %v435, %v704
  %v706 = vmul.f32 %v688, %v693
  %v707 = vmul.f32 %v688, %v697
  %v708 = vmul.f32 %v688, %v701
  %v709 = vmul.f32 %v688, %v705
  %v710 = vadd.f32 %v682, %v706
  %v711 = vadd.f32 %v683, %v707
  %v712 = vadd.f32 %v684, %v708
  %v713 = vadd.f32 %v685, %v709
  %714 = vset.pattern.permute.xlu0 10
  %715 = vperm.xlu0 %714, %v436
  %v716 = vpop.permute.xlu0 %715
  %v718 = vlaneseq
  %v719 = vshrl.u32 %v718, 7
  %v720 = vsub.s32 2, %v719
  %v721 = vrot.slane %v432, %v720
  %v722 = vlaneseq
  %v723 = vshrl.u32 %v722, 7
  %v724 = vsub.s32 2, %v723
  %v725 = vrot.slane %v433, %v724
  %v726 = vlaneseq
  %v727 = vshrl.u32 %v726, 7
  %v728 = vsub.s32 2, %v727
  %v729 = vrot.slane %v434, %v728
  %v730 = vlaneseq
  %v731 = vshrl.u32 %v730, 7
  %v732 = vsub.s32 2, %v731
  %v733 = vrot.slane %v435, %v732
  %v734 = vmul.f32 %v716, %v721
  %v735 = vmul.f32 %v716, %v725
  %v736 = vmul.f32 %v716, %v729
  %v737 = vmul.f32 %v716, %v733
  %v738 = vadd.f32 %v710, %v734
  %v739 = vadd.f32 %v711, %v735
  %v740 = vadd.f32 %v712, %v736
  %v741 = vadd.f32 %v713, %v737
  %742 = vset.pattern.permute.xlu0 11
  %743 = vperm.xlu0 %742, %v436
  %v744 = vpop.permute.xlu0 %743
  %v746 = vlaneseq
  %v747 = vshrl.u32 %v746, 7
  %v748 = vsub.s32 3, %v747
  %v749 = vrot.slane %v432, %v748
  %v750 = vlaneseq
  %v751 = vshrl.u32 %v750, 7
  %v752 = vsub.s32 3, %v751
  %v753 = vrot.slane %v433, %v752
  %v754 = vlaneseq
  %v755 = vshrl.u32 %v754, 7
  %v756 = vsub.s32 3, %v755
  %v757 = vrot.slane %v434, %v756
  %v758 = vlaneseq
  %v759 = vshrl.u32 %v758, 7
  %v760 = vsub.s32 3, %v759
  %v761 = vrot.slane %v435, %v760
  %v762 = vmul.f32 %v744, %v749
  %v763 = vmul.f32 %v744, %v753
  %v764 = vmul.f32 %v744, %v757
  %v765 = vmul.f32 %v744, %v761
  %v766 = vadd.f32 %v738, %v762
  %v767 = vadd.f32 %v739, %v763
  %v768 = vadd.f32 %v740, %v764
  %v769 = vadd.f32 %v741, %v765
  %v770 = vld [vmem:[%s5] sm:$0xf]
  %771 = vrot.lane.b32.xlu0 %v766, 17
  %v772 = vpop.permute.xlu0 %771
  %773 = vrot.lane.b32.xlu0 %v767, 17
  %v774 = vpop.permute.xlu0 %773
  %775 = vrot.lane.b32.xlu0 %v768, 17
  %v776 = vpop.permute.xlu0 %775
  %777 = vrot.lane.b32.xlu0 %v769, 17
  %v778 = vpop.permute.xlu0 %777
  %v779 = vlaneseq
  %v780 = vand.u32 %v779, 127
  %vm781 = vcmp.lt.s32.totalorder %v780, 17
  %v782 = vsel %vm781, %v776, %v778
  %v783 = vsel %vm781, %v774, %v776
  %v784 = vsel %vm781, %v772, %v774
  %v785 = vsel %vm781, %v778, %v772
  %v786 = vlaneseq
  %v787 = vshrl.u32 %v786, 7
  %v788 = vsub.s32 0, %v787
  %v789 = vrot.slane %v43, %v788
  %v790 = vlaneseq
  %v791 = vshrl.u32 %v790, 7
  %v792 = vsub.s32 0, %v791
  %v793 = vrot.slane %v44, %v792
  %v794 = vlaneseq
  %v795 = vshrl.u32 %v794, 7
  %v796 = vsub.s32 0, %v795
  %v797 = vrot.slane %v45, %v796
  %v798 = vlaneseq
  %v799 = vshrl.u32 %v798, 7
  %v800 = vsub.s32 0, %v799
  %v801 = vrot.slane %v46, %v800
  %v802 = vmul.f32 %v785, %v789
  %v803 = vmul.f32 %v784, %v793
  %v804 = vmul.f32 %v783, %v797
  %v805 = vmul.f32 %v782, %v801
  %807 = vset.pattern.permute.xlu0 0
  %808 = vperm.xlu0 %807, %v770
  %v809 = vpop.permute.xlu0 %808
  %v811 = vmul.f32 %v809, %v802
  %v812 = vmul.f32 %v809, %v803
  %v813 = vmul.f32 %v809, %v804
  %v814 = vmul.f32 %v809, %v805
  %815 = vrot.lane.b32.xlu0 %v766, 16
  %v816 = vpop.permute.xlu0 %815
  %817 = vrot.lane.b32.xlu0 %v767, 16
  %v818 = vpop.permute.xlu0 %817
  %819 = vrot.lane.b32.xlu0 %v768, 16
  %v820 = vpop.permute.xlu0 %819
  %821 = vrot.lane.b32.xlu0 %v769, 16
  %v822 = vpop.permute.xlu0 %821
  %vm823 = vcmp.lt.s32.totalorder %v780, 16
  %v824 = vsel %vm823, %v820, %v822
  %v825 = vsel %vm823, %v818, %v820
  %v826 = vsel %vm823, %v816, %v818
  %v827 = vsel %vm823, %v822, %v816
  %v828 = vlaneseq
  %v829 = vshrl.u32 %v828, 7
  %v830 = vsub.s32 1, %v829
  %v831 = vrot.slane %v43, %v830
  %v832 = vlaneseq
  %v833 = vshrl.u32 %v832, 7
  %v834 = vsub.s32 1, %v833
  %v835 = vrot.slane %v44, %v834
  %v836 = vlaneseq
  %v837 = vshrl.u32 %v836, 7
  %v838 = vsub.s32 1, %v837
  %v839 = vrot.slane %v45, %v838
  %v840 = vlaneseq
  %v841 = vshrl.u32 %v840, 7
  %v842 = vsub.s32 1, %v841
  %v843 = vrot.slane %v46, %v842
  %v844 = vmul.f32 %v827, %v831
  %v845 = vmul.f32 %v826, %v835
  %v846 = vmul.f32 %v825, %v839
  %v847 = vmul.f32 %v824, %v843
  %848 = vset.pattern.permute.xlu0 1
  %849 = vperm.xlu0 %848, %v770
  %v850 = vpop.permute.xlu0 %849
  %v852 = vmul.f32 %v850, %v844
  %v853 = vmul.f32 %v850, %v845
  %v854 = vmul.f32 %v850, %v846
  %v855 = vmul.f32 %v850, %v847
  %v856 = vadd.f32 %v811, %v852
  %v857 = vadd.f32 %v812, %v853
  %v858 = vadd.f32 %v813, %v854
  %v859 = vadd.f32 %v814, %v855
  %860 = vrot.lane.b32.xlu0 %v766, 15
  %v861 = vpop.permute.xlu0 %860
  %862 = vrot.lane.b32.xlu0 %v767, 15
  %v863 = vpop.permute.xlu0 %862
  %864 = vrot.lane.b32.xlu0 %v768, 15
  %v865 = vpop.permute.xlu0 %864
  %866 = vrot.lane.b32.xlu0 %v769, 15
  %v867 = vpop.permute.xlu0 %866
  %vm868 = vcmp.lt.s32.totalorder %v780, 15
  %v869 = vsel %vm868, %v865, %v867
  %v870 = vsel %vm868, %v863, %v865
  %v871 = vsel %vm868, %v861, %v863
  %v872 = vsel %vm868, %v867, %v861
  %v873 = vlaneseq
  %v874 = vshrl.u32 %v873, 7
  %v875 = vsub.s32 2, %v874
  %v876 = vrot.slane %v43, %v875
  %v877 = vlaneseq
  %v878 = vshrl.u32 %v877, 7
  %v879 = vsub.s32 2, %v878
  %v880 = vrot.slane %v44, %v879
  %v881 = vlaneseq
  %v882 = vshrl.u32 %v881, 7
  %v883 = vsub.s32 2, %v882
  %v884 = vrot.slane %v45, %v883
  %v885 = vlaneseq
  %v886 = vshrl.u32 %v885, 7
  %v887 = vsub.s32 2, %v886
  %v888 = vrot.slane %v46, %v887
  %v889 = vmul.f32 %v872, %v876
  %v890 = vmul.f32 %v871, %v880
  %v891 = vmul.f32 %v870, %v884
  %v892 = vmul.f32 %v869, %v888
  %893 = vset.pattern.permute.xlu0 2
  %894 = vperm.xlu0 %893, %v770
  %v895 = vpop.permute.xlu0 %894
  %v897 = vmul.f32 %v895, %v889
  %v898 = vmul.f32 %v895, %v890
  %v899 = vmul.f32 %v895, %v891
  %v900 = vmul.f32 %v895, %v892
  %v901 = vadd.f32 %v856, %v897
  %v902 = vadd.f32 %v857, %v898
  %v903 = vadd.f32 %v858, %v899
  %v904 = vadd.f32 %v859, %v900
  %905 = vrot.lane.b32.xlu0 %v766, 1
  %v906 = vpop.permute.xlu0 %905
  %907 = vrot.lane.b32.xlu0 %v767, 1
  %v908 = vpop.permute.xlu0 %907
  %909 = vrot.lane.b32.xlu0 %v768, 1
  %v910 = vpop.permute.xlu0 %909
  %911 = vrot.lane.b32.xlu0 %v769, 1
  %v912 = vpop.permute.xlu0 %911
  %vm913 = vcmp.lt.s32.totalorder %v780, 1
  %v914 = vsel %vm913, %v910, %v912
  %v915 = vsel %vm913, %v908, %v910
  %v916 = vsel %vm913, %v906, %v908
  %v917 = vsel %vm913, %v912, %v906
  %v918 = vlaneseq
  %v919 = vshrl.u32 %v918, 7
  %v920 = vsub.s32 3, %v919
  %v921 = vrot.slane %v43, %v920
  %v922 = vlaneseq
  %v923 = vshrl.u32 %v922, 7
  %v924 = vsub.s32 3, %v923
  %v925 = vrot.slane %v44, %v924
  %v926 = vlaneseq
  %v927 = vshrl.u32 %v926, 7
  %v928 = vsub.s32 3, %v927
  %v929 = vrot.slane %v45, %v928
  %v930 = vlaneseq
  %v931 = vshrl.u32 %v930, 7
  %v932 = vsub.s32 3, %v931
  %v933 = vrot.slane %v46, %v932
  %v934 = vmul.f32 %v917, %v921
  %v935 = vmul.f32 %v916, %v925
  %v936 = vmul.f32 %v915, %v929
  %v937 = vmul.f32 %v914, %v933
  %938 = vset.pattern.permute.xlu0 3
  %939 = vperm.xlu0 %938, %v770
  %v940 = vpop.permute.xlu0 %939
  %v942 = vmul.f32 %v940, %v934
  %v943 = vmul.f32 %v940, %v935
  %v944 = vmul.f32 %v940, %v936
  %v945 = vmul.f32 %v940, %v937
  %v946 = vadd.f32 %v901, %v942
  %v947 = vadd.f32 %v902, %v943
  %v948 = vadd.f32 %v903, %v944
  %v949 = vadd.f32 %v904, %v945
  %950 = vset.pattern.permute.xlu0 4
  %951 = vperm.xlu0 %950, %v770
  %v952 = vpop.permute.xlu0 %951
  %v954 = vmul.f32 %v952, %v766
  %v955 = vmul.f32 %v952, %v767
  %v956 = vmul.f32 %v952, %v768
  %v957 = vmul.f32 %v952, %v769
  %v958 = vadd.f32 %v946, %v954
  %v959 = vadd.f32 %v947, %v955
  %v960 = vadd.f32 %v948, %v956
  %v961 = vadd.f32 %v949, %v957
  %962 = vrot.lane.b32.xlu0 %v766, 127
  %v963 = vpop.permute.xlu0 %962
  %964 = vrot.lane.b32.xlu0 %v767, 127
  %v965 = vpop.permute.xlu0 %964
  %966 = vrot.lane.b32.xlu0 %v768, 127
  %v967 = vpop.permute.xlu0 %966
  %968 = vrot.lane.b32.xlu0 %v769, 127
  %v969 = vpop.permute.xlu0 %968
  %vm970 = vcmp.lt.s32.totalorder %v780, 127
  %v971 = vsel %vm970, %v967, %v969
  %v972 = vsel %vm970, %v965, %v967
  %v973 = vsel %vm970, %v963, %v965
  %v974 = vsel %vm970, %v969, %v963
  %v975 = vlaneseq
  %v976 = vshrl.u32 %v975, 7
  %v977 = vsub.s32 5, %v976
  %v978 = vrot.slane %v43, %v977
  %v979 = vlaneseq
  %v980 = vshrl.u32 %v979, 7
  %v981 = vsub.s32 5, %v980
  %v982 = vrot.slane %v44, %v981
  %v983 = vlaneseq
  %v984 = vshrl.u32 %v983, 7
  %v985 = vsub.s32 5, %v984
  %v986 = vrot.slane %v45, %v985
  %v987 = vlaneseq
  %v988 = vshrl.u32 %v987, 7
  %v989 = vsub.s32 5, %v988
  %v990 = vrot.slane %v46, %v989
  %v991 = vmul.f32 %v973, %v978
  %v992 = vmul.f32 %v972, %v982
  %v993 = vmul.f32 %v971, %v986
  %v994 = vmul.f32 %v974, %v990
  %995 = vset.pattern.permute.xlu0 5
  %996 = vperm.xlu0 %995, %v770
  %v997 = vpop.permute.xlu0 %996
  %v999 = vmul.f32 %v997, %v991
  %v1000 = vmul.f32 %v997, %v992
  %v1001 = vmul.f32 %v997, %v993
  %v1002 = vmul.f32 %v997, %v994
  %v1003 = vadd.f32 %v958, %v999
  %v1004 = vadd.f32 %v959, %v1000
  %v1005 = vadd.f32 %v960, %v1001
  %v1006 = vadd.f32 %v961, %v1002
  %1007 = vrot.lane.b32.xlu0 %v766, 113
  %v1008 = vpop.permute.xlu0 %1007
  %1009 = vrot.lane.b32.xlu0 %v767, 113
  %v1010 = vpop.permute.xlu0 %1009
  %1011 = vrot.lane.b32.xlu0 %v768, 113
  %v1012 = vpop.permute.xlu0 %1011
  %1013 = vrot.lane.b32.xlu0 %v769, 113
  %v1014 = vpop.permute.xlu0 %1013
  %vm1015 = vcmp.lt.s32.totalorder %v780, 113
  %v1016 = vsel %vm1015, %v1012, %v1014
  %v1017 = vsel %vm1015, %v1010, %v1012
  %v1018 = vsel %vm1015, %v1008, %v1010
  %v1019 = vsel %vm1015, %v1014, %v1008
  %v1020 = vlaneseq
  %v1021 = vshrl.u32 %v1020, 7
  %v1022 = vsub.s32 6, %v1021
  %v1023 = vrot.slane %v43, %v1022
  %v1024 = vlaneseq
  %v1025 = vshrl.u32 %v1024, 7
  %v1026 = vsub.s32 6, %v1025
  %v1027 = vrot.slane %v44, %v1026
  %v1028 = vlaneseq
  %v1029 = vshrl.u32 %v1028, 7
  %v1030 = vsub.s32 6, %v1029
  %v1031 = vrot.slane %v45, %v1030
  %v1032 = vlaneseq
  %v1033 = vshrl.u32 %v1032, 7
  %v1034 = vsub.s32 6, %v1033
  %v1035 = vrot.slane %v46, %v1034
  %v1036 = vmul.f32 %v1018, %v1023
  %v1037 = vmul.f32 %v1017, %v1027
  %v1038 = vmul.f32 %v1016, %v1031
  %v1039 = vmul.f32 %v1019, %v1035
  %1040 = vset.pattern.permute.xlu0 6
  %1041 = vperm.xlu0 %1040, %v770
  %v1042 = vpop.permute.xlu0 %1041
  %v1044 = vmul.f32 %v1042, %v1036
  %v1045 = vmul.f32 %v1042, %v1037
  %v1046 = vmul.f32 %v1042, %v1038
  %v1047 = vmul.f32 %v1042, %v1039
  %v1048 = vadd.f32 %v1003, %v1044
  %v1049 = vadd.f32 %v1004, %v1045
  %v1050 = vadd.f32 %v1005, %v1046
  %v1051 = vadd.f32 %v1006, %v1047
  %1052 = vrot.lane.b32.xlu0 %v766, 112
  %v1053 = vpop.permute.xlu0 %1052
  %1054 = vrot.lane.b32.xlu0 %v767, 112
  %v1055 = vpop.permute.xlu0 %1054
  %1056 = vrot.lane.b32.xlu0 %v768, 112
  %v1057 = vpop.permute.xlu0 %1056
  %1058 = vrot.lane.b32.xlu0 %v769, 112
  %v1059 = vpop.permute.xlu0 %1058
  %vm1060 = vcmp.lt.s32.totalorder %v780, 112
  %v1061 = vsel %vm1060, %v1057, %v1059
  %v1062 = vsel %vm1060, %v1055, %v1057
  %v1063 = vsel %vm1060, %v1053, %v1055
  %v1064 = vsel %vm1060, %v1059, %v1053
  %v1065 = vlaneseq
  %v1066 = vshrl.u32 %v1065, 7
  %v1067 = vsub.s32 7, %v1066
  %v1068 = vrot.slane %v43, %v1067
  %v1069 = vlaneseq
  %v1070 = vshrl.u32 %v1069, 7
  %v1071 = vsub.s32 7, %v1070
  %v1072 = vrot.slane %v44, %v1071
  %v1073 = vlaneseq
  %v1074 = vshrl.u32 %v1073, 7
  %v1075 = vsub.s32 7, %v1074
  %v1076 = vrot.slane %v45, %v1075
  %v1077 = vlaneseq
  %v1078 = vshrl.u32 %v1077, 7
  %v1079 = vsub.s32 7, %v1078
  %v1080 = vrot.slane %v46, %v1079
  %v1081 = vmul.f32 %v1063, %v1068
  %v1082 = vmul.f32 %v1062, %v1072
  %v1083 = vmul.f32 %v1061, %v1076
  %v1084 = vmul.f32 %v1064, %v1080
  %1085 = vset.pattern.permute.xlu0 7
  %1086 = vperm.xlu0 %1085, %v770
  %v1087 = vpop.permute.xlu0 %1086
  %v1089 = vmul.f32 %v1087, %v1081
  %v1090 = vmul.f32 %v1087, %v1082
  %v1091 = vmul.f32 %v1087, %v1083
  %v1092 = vmul.f32 %v1087, %v1084
  %v1093 = vadd.f32 %v1048, %v1089
  %v1094 = vadd.f32 %v1049, %v1090
  %v1095 = vadd.f32 %v1050, %v1091
  %v1096 = vadd.f32 %v1051, %v1092
  %1097 = vrot.lane.b32.xlu0 %v766, 111
  %v1098 = vpop.permute.xlu0 %1097
  %1099 = vrot.lane.b32.xlu0 %v767, 111
  %v1100 = vpop.permute.xlu0 %1099
  %1101 = vrot.lane.b32.xlu0 %v768, 111
  %v1102 = vpop.permute.xlu0 %1101
  %1103 = vrot.lane.b32.xlu0 %v769, 111
  %v1104 = vpop.permute.xlu0 %1103
  %vm1105 = vcmp.lt.s32.totalorder %v780, 111
  %v1106 = vsel %vm1105, %v1102, %v1104
  %v1107 = vsel %vm1105, %v1100, %v1102
  %v1108 = vsel %vm1105, %v1098, %v1100
  %v1109 = vsel %vm1105, %v1104, %v1098
  %v1110 = vlaneseq
  %v1111 = vshrl.u32 %v1110, 7
  %v1112 = vsub.s32 0, %v1111
  %v1113 = vrot.slane %v47, %v1112
  %v1114 = vlaneseq
  %v1115 = vshrl.u32 %v1114, 7
  %v1116 = vsub.s32 0, %v1115
  %v1117 = vrot.slane %v48, %v1116
  %v1118 = vlaneseq
  %v1119 = vshrl.u32 %v1118, 7
  %v1120 = vsub.s32 0, %v1119
  %v1121 = vrot.slane %v49, %v1120
  %v1122 = vlaneseq
  %v1123 = vshrl.u32 %v1122, 7
  %v1124 = vsub.s32 0, %v1123
  %v1125 = vrot.slane %v50, %v1124
  %v1126 = vmul.f32 %v1108, %v1113
  %v1127 = vmul.f32 %v1107, %v1117
  %v1128 = vmul.f32 %v1106, %v1121
  %v1129 = vmul.f32 %v1109, %v1125
  %1130 = vset.pattern.permute.xlu0 8
  %1131 = vperm.xlu0 %1130, %v770
  %v1132 = vpop.permute.xlu0 %1131
  %v1134 = vmul.f32 %v1132, %v1126
  %v1135 = vmul.f32 %v1132, %v1127
  %v1136 = vmul.f32 %v1132, %v1128
  %v1137 = vmul.f32 %v1132, %v1129
  %v1138 = vadd.f32 %v1093, %v1134
  %v1139 = vadd.f32 %v1094, %v1135
  %v1140 = vadd.f32 %v1095, %v1136
  %v1141 = vadd.f32 %v1096, %v1137
  %1143 = vset.pattern.permute.xlu0 0
  %1144 = vperm.xlu0 %1143, %v53
  %v1145 = vpop.permute.xlu0 %1144
  %v1147 = vadd.f32 %v1138, %v1145
  %v1148 = vadd.f32 %v1139, %v1145
  %v1149 = vadd.f32 %v1140, %v1145
  %v1150 = vadd.f32 %v1141, %v1145
  %v1151 = vsel %vm316, %v1147, 0.0
  %v1152 = vsel %vm316, %v1148, 0.0
  %v1153 = vadd.f32 %v1151, %v1152
  %v1154 = vsel %vm316, %v1149, 0.0
  %v1155 = vadd.f32 %v1153, %v1154
  %v1156 = vsel %vm316, %v1150, 0.0
  %v1157 = vadd.f32 %v1155, %v1156
  %1158 = vadd.xlane.f32.xlu0 %v1157
  %v1159 = vpop.xlane.xlu0 %1158
  %v1160 = vmul.f32 %v1159, 0.001953125
  %v1161 = vmul.f32 %v1147, %v1147
  %v1162 = vmul.f32 %v1148, %v1148
  %v1163 = vmul.f32 %v1149, %v1149
  %v1164 = vmul.f32 %v1150, %v1150
  %v1165 = vsel %vm316, %v1161, 0.0
  %v1166 = vsel %vm316, %v1162, 0.0
  %v1167 = vadd.f32 %v1165, %v1166
  %v1168 = vsel %vm316, %v1163, 0.0
  %v1169 = vadd.f32 %v1167, %v1168
  %v1170 = vsel %vm316, %v1164, 0.0
  %v1171 = vadd.f32 %v1169, %v1170
  %1172 = vadd.xlane.f32.xlu0 %v1171
  %v1173 = vpop.xlane.xlu0 %1172
  %v1174 = vmul.f32 %v1173, 0.001953125
  %v1175 = vmul.f32 %v1160, %v1160
  %v1176 = vsub.f32 %v1174, %v1175
  %v1177 = vmax.f32 %v1176, 0.0
  %v1178 = vadd.f32 %v1177, 1e-05
  %v1179 = vrsqrt.pop %v1178
  %v1180 = vmul.f32 %v53, %v1179
  %1182 = vset.pattern.permute.xlu0 1
  %1183 = vperm.xlu0 %1182, %v1180
  %v1184 = vpop.permute.xlu0 %1183
  %v1186 = vmul.f32 %v1147, %v1184
  %v1187 = vmul.f32 %v1148, %v1184
  %v1188 = vmul.f32 %v1149, %v1184
  %v1189 = vmul.f32 %v1150, %v1184
  %v1190 = vmul.f32 %v1160, %v1180
  %1192 = vrot.lane.b32.xlu0 %v1190, 1
  %v1193 = vpop.permute.xlu0 %1192
  %v1195 = vsub.f32 %v53, %v1193
  %1197 = vset.pattern.permute.xlu0 2
  %1198 = vperm.xlu0 %1197, %v1195
  %v1199 = vpop.permute.xlu0 %1198
  %v1201 = vadd.f32 %v1186, %v1199
  %v1202 = vadd.f32 %v1187, %v1199
  %v1203 = vadd.f32 %v1188, %v1199
  %v1204 = vadd.f32 %v1189, %v1199
  %vm1205 = vcmp.ge.f32.partialorder %v1201, 0.0
  %vm1206 = vcmp.ge.f32.partialorder %v1202, 0.0
  %vm1207 = vcmp.ge.f32.partialorder %v1203, 0.0
  %vm1208 = vcmp.ge.f32.partialorder %v1204, 0.0
  %v1209 = vmul.f32 %v1201, 0.01
  %v1210 = vmul.f32 %v1202, 0.01
  %v1211 = vmul.f32 %v1203, 0.01
  %v1212 = vmul.f32 %v1204, 0.01
  %v1213 = vsel %vm1205, %v1201, %v1209
  %v1214 = vsel %vm1206, %v1202, %v1210
  %v1215 = vsel %vm1207, %v1203, %v1211
  %v1216 = vsel %vm1208, %v1204, %v1212
  %1217 = vrot.lane.b32.xlu0 %v1213, 127
  %v1218 = vpop.permute.xlu0 %1217
  %1219 = vrot.lane.b32.xlu0 %v1214, 127
  %v1220 = vpop.permute.xlu0 %1219
  %1221 = vrot.lane.b32.xlu0 %v1215, 127
  %v1222 = vpop.permute.xlu0 %1221
  %1223 = vrot.lane.b32.xlu0 %v1216, 127
  %v1224 = vpop.permute.xlu0 %1223
  %v1225 = vsel %vm970, %v1222, %v1224
  %v1226 = vsel %vm970, %v1220, %v1222
  %v1227 = vsel %vm970, %v1218, %v1220
  %v1228 = vsel %vm970, %v1224, %v1218
  %1229 = vrot.lane.b32.xlu0 %v1213, 1
  %v1230 = vpop.permute.xlu0 %1229
  %1231 = vrot.lane.b32.xlu0 %v1214, 1
  %v1232 = vpop.permute.xlu0 %1231
  %1233 = vrot.lane.b32.xlu0 %v1215, 1
  %v1234 = vpop.permute.xlu0 %1233
  %1235 = vrot.lane.b32.xlu0 %v1216, 1
  %v1236 = vpop.permute.xlu0 %1235
  %v1237 = vsel %vm913, %v1234, %v1236
  %v1238 = vsel %vm913, %v1232, %v1234
  %v1239 = vsel %vm913, %v1230, %v1232
  %v1240 = vsel %vm913, %v1236, %v1230
  %v1241 = vlaneseq
  %v1242 = vshrl.u32 %v1241, 7
  %v1243 = vsub.s32 2, %v1242
  %v1244 = vrot.slane %v47, %v1243
  %v1245 = vlaneseq
  %v1246 = vshrl.u32 %v1245, 7
  %v1247 = vsub.s32 2, %v1246
  %v1248 = vrot.slane %v48, %v1247
  %v1249 = vlaneseq
  %v1250 = vshrl.u32 %v1249, 7
  %v1251 = vsub.s32 2, %v1250
  %v1252 = vrot.slane %v49, %v1251
  %v1253 = vlaneseq
  %v1254 = vshrl.u32 %v1253, 7
  %v1255 = vsub.s32 2, %v1254
  %v1256 = vrot.slane %v50, %v1255
  %v1257 = vmul.f32 %v1244, %v1227
  %v1258 = vmul.f32 %v1248, %v1226
  %v1259 = vmul.f32 %v1252, %v1225
  %v1260 = vmul.f32 %v1256, %v1228
  %v1261 = vsub.f32 1.0, %v47
  %v1262 = vsub.f32 1.0, %v48
  %v1263 = vsub.f32 1.0, %v49
  %v1264 = vsub.f32 1.0, %v50
  %v1265 = vlaneseq
  %v1266 = vshrl.u32 %v1265, 7
  %v1267 = vsub.s32 2, %v1266
  %v1268 = vrot.slane %v1261, %v1267
  %v1269 = vlaneseq
  %v1270 = vshrl.u32 %v1269, 7
  %v1271 = vsub.s32 2, %v1270
  %v1272 = vrot.slane %v1262, %v1271
  %v1273 = vlaneseq
  %v1274 = vshrl.u32 %v1273, 7
  %v1275 = vsub.s32 2, %v1274
  %v1276 = vrot.slane %v1263, %v1275
  %v1277 = vlaneseq
  %v1278 = vshrl.u32 %v1277, 7
  %v1279 = vsub.s32 2, %v1278
  %v1280 = vrot.slane %v1264, %v1279
  %v1281 = vmul.f32 %v1268, %v1240
  %v1282 = vmul.f32 %v1272, %v1239
  %v1283 = vmul.f32 %v1276, %v1238
  %v1284 = vmul.f32 %v1280, %v1237
  %v1285 = vadd.f32 %v1257, %v1281
  %v1286 = vadd.f32 %v1258, %v1282
  %v1287 = vadd.f32 %v1259, %v1283
  %v1288 = vadd.f32 %v1260, %v1284
  %v1289 = vadd.f32 %v1213, %v1285
  %v1290 = vadd.f32 %v1214, %v1286
  %v1291 = vadd.f32 %v1215, %v1287
  %v1292 = vadd.f32 %v1216, %v1288
  %v1293 = vmax.f32 %v1213, %v1285
  %v1294 = vmax.f32 %v1214, %v1286
  %v1295 = vmax.f32 %v1215, %v1287
  %v1296 = vmax.f32 %v1216, %v1288
  %1297 = vrot.lane.b32.xlu0 %v1289, 112
  %v1298 = vpop.permute.xlu0 %1297
  %1299 = vrot.lane.b32.xlu0 %v1290, 112
  %v1300 = vpop.permute.xlu0 %1299
  %1301 = vrot.lane.b32.xlu0 %v1291, 112
  %v1302 = vpop.permute.xlu0 %1301
  %1303 = vrot.lane.b32.xlu0 %v1292, 112
  %v1304 = vpop.permute.xlu0 %1303
  %v1305 = vsel %vm1060, %v1302, %v1304
  %v1306 = vsel %vm1060, %v1300, %v1302
  %v1307 = vsel %vm1060, %v1298, %v1300
  %v1308 = vsel %vm1060, %v1304, %v1298
  %1309 = vrot.lane.b32.xlu0 %v1289, 16
  %v1310 = vpop.permute.xlu0 %1309
  %1311 = vrot.lane.b32.xlu0 %v1290, 16
  %v1312 = vpop.permute.xlu0 %1311
  %1313 = vrot.lane.b32.xlu0 %v1291, 16
  %v1314 = vpop.permute.xlu0 %1313
  %1315 = vrot.lane.b32.xlu0 %v1292, 16
  %v1316 = vpop.permute.xlu0 %1315
  %v1317 = vsel %vm823, %v1314, %v1316
  %v1318 = vsel %vm823, %v1312, %v1314
  %v1319 = vsel %vm823, %v1310, %v1312
  %v1320 = vsel %vm823, %v1316, %v1310
  %v1321 = vlaneseq
  %v1322 = vshrl.u32 %v1321, 7
  %v1323 = vsub.s32 1, %v1322
  %v1324 = vrot.slane %v47, %v1323
  %v1325 = vlaneseq
  %v1326 = vshrl.u32 %v1325, 7
  %v1327 = vsub.s32 1, %v1326
  %v1328 = vrot.slane %v48, %v1327
  %v1329 = vlaneseq
  %v1330 = vshrl.u32 %v1329, 7
  %v1331 = vsub.s32 1, %v1330
  %v1332 = vrot.slane %v49, %v1331
  %v1333 = vlaneseq
  %v1334 = vshrl.u32 %v1333, 7
  %v1335 = vsub.s32 1, %v1334
  %v1336 = vrot.slane %v50, %v1335
  %v1337 = vmul.f32 %v1324, %v1307
  %v1338 = vmul.f32 %v1328, %v1306
  %v1339 = vmul.f32 %v1332, %v1305
  %v1340 = vmul.f32 %v1336, %v1308
  %v1341 = vadd.f32 %v1289, %v1337
  %v1342 = vadd.f32 %v1290, %v1338
  %v1343 = vadd.f32 %v1291, %v1339
  %v1344 = vadd.f32 %v1292, %v1340
  %v1345 = vlaneseq
  %v1346 = vshrl.u32 %v1345, 7
  %v1347 = vsub.s32 1, %v1346
  %v1348 = vrot.slane %v1261, %v1347
  %v1349 = vlaneseq
  %v1350 = vshrl.u32 %v1349, 7
  %v1351 = vsub.s32 1, %v1350
  %v1352 = vrot.slane %v1262, %v1351
  %v1353 = vlaneseq
  %v1354 = vshrl.u32 %v1353, 7
  %v1355 = vsub.s32 1, %v1354
  %v1356 = vrot.slane %v1263, %v1355
  %v1357 = vlaneseq
  %v1358 = vshrl.u32 %v1357, 7
  %v1359 = vsub.s32 1, %v1358
  %v1360 = vrot.slane %v1264, %v1359
  %v1361 = vmul.f32 %v1348, %v1320
  %v1362 = vmul.f32 %v1352, %v1319
  %v1363 = vmul.f32 %v1356, %v1318
  %v1364 = vmul.f32 %v1360, %v1317
  %v1365 = vadd.f32 %v1341, %v1361
  %v1366 = vadd.f32 %v1342, %v1362
  %v1367 = vadd.f32 %v1343, %v1363
  %v1368 = vadd.f32 %v1344, %v1364
  %v1369 = vmul.f32 %v1365, 0.25
  %v1370 = vmul.f32 %v1366, 0.25
  %v1371 = vmul.f32 %v1367, 0.25
  %v1372 = vmul.f32 %v1368, 0.25
  %1373 = vrot.lane.b32.xlu0 %v1293, 112
  %v1374 = vpop.permute.xlu0 %1373
  %1375 = vrot.lane.b32.xlu0 %v1294, 112
  %v1376 = vpop.permute.xlu0 %1375
  %1377 = vrot.lane.b32.xlu0 %v1295, 112
  %v1378 = vpop.permute.xlu0 %1377
  %1379 = vrot.lane.b32.xlu0 %v1296, 112
  %v1380 = vpop.permute.xlu0 %1379
  %v1381 = vsel %vm1060, %v1378, %v1380
  %v1382 = vsel %vm1060, %v1376, %v1378
  %v1383 = vsel %vm1060, %v1374, %v1376
  %v1384 = vsel %vm1060, %v1380, %v1374
  %1385 = vrot.lane.b32.xlu0 %v1293, 16
  %v1386 = vpop.permute.xlu0 %1385
  %1387 = vrot.lane.b32.xlu0 %v1294, 16
  %v1388 = vpop.permute.xlu0 %1387
  %1389 = vrot.lane.b32.xlu0 %v1295, 16
  %v1390 = vpop.permute.xlu0 %1389
  %1391 = vrot.lane.b32.xlu0 %v1296, 16
  %v1392 = vpop.permute.xlu0 %1391
  %v1393 = vsel %vm823, %v1390, %v1392
  %v1394 = vsel %vm823, %v1388, %v1390
  %v1395 = vsel %vm823, %v1386, %v1388
  %v1396 = vsel %vm823, %v1392, %v1386
  %v1397 = vmul.f32 %v1324, %v1383
  %v1398 = vmul.f32 %v1328, %v1382
  %v1399 = vmul.f32 %v1332, %v1381
  %v1400 = vmul.f32 %v1336, %v1384
  %v1401 = vmul.f32 %v1348, %v1396
  %v1402 = vmul.f32 %v1352, %v1395
  %v1403 = vmul.f32 %v1356, %v1394
  %v1404 = vmul.f32 %v1360, %v1393
  %v1405 = vadd.f32 %v1397, %v1401
  %v1406 = vadd.f32 %v1398, %v1402
  %v1407 = vadd.f32 %v1399, %v1403
  %v1408 = vadd.f32 %v1400, %v1404
  %v1409 = vmax.f32 %v1293, %v1405
  %v1410 = vmax.f32 %v1294, %v1406
  %v1411 = vmax.f32 %v1295, %v1407
  %v1412 = vmax.f32 %v1296, %v1408
  %v1413 = vld [vmem:[%s7] sm:$0xf]
  %1415 = vset.pattern.permute.xlu0 0
  %1416 = vperm.xlu0 %1415, %v1413
  %v1417 = vpop.permute.xlu0 %1416
  %v1419 = vlaneseq
  %v1420 = vshrl.u32 %v1419, 7
  %v1421 = vsub.s32 0, %v1420
  %v1422 = vrot.slane %v1213, %v1421
  %v1423 = vlaneseq
  %v1424 = vshrl.u32 %v1423, 7
  %v1425 = vsub.s32 0, %v1424
  %v1426 = vrot.slane %v1214, %v1425
  %v1427 = vlaneseq
  %v1428 = vshrl.u32 %v1427, 7
  %v1429 = vsub.s32 0, %v1428
  %v1430 = vrot.slane %v1215, %v1429
  %v1431 = vlaneseq
  %v1432 = vshrl.u32 %v1431, 7
  %v1433 = vsub.s32 0, %v1432
  %v1434 = vrot.slane %v1216, %v1433
  %v1435 = vmul.f32 %v1417, %v1422
  %v1436 = vmul.f32 %v1417, %v1426
  %v1437 = vmul.f32 %v1417, %v1430
  %v1438 = vmul.f32 %v1417, %v1434
  %1439 = vset.pattern.permute.xlu0 1
  %1440 = vperm.xlu0 %1439, %v1413
  %v1441 = vpop.permute.xlu0 %1440
  %v1443 = vlaneseq
  %v1444 = vshrl.u32 %v1443, 7
  %v1445 = vsub.s32 1, %v1444
  %v1446 = vrot.slane %v1213, %v1445
  %v1447 = vlaneseq
  %v1448 = vshrl.u32 %v1447, 7
  %v1449 = vsub.s32 1, %v1448
  %v1450 = vrot.slane %v1214, %v1449
  %v1451 = vlaneseq
  %v1452 = vshrl.u32 %v1451, 7
  %v1453 = vsub.s32 1, %v1452
  %v1454 = vrot.slane %v1215, %v1453
  %v1455 = vlaneseq
  %v1456 = vshrl.u32 %v1455, 7
  %v1457 = vsub.s32 1, %v1456
  %v1458 = vrot.slane %v1216, %v1457
  %v1459 = vmul.f32 %v1441, %v1446
  %v1460 = vmul.f32 %v1441, %v1450
  %v1461 = vmul.f32 %v1441, %v1454
  %v1462 = vmul.f32 %v1441, %v1458
  %v1463 = vadd.f32 %v1435, %v1459
  %v1464 = vadd.f32 %v1436, %v1460
  %v1465 = vadd.f32 %v1437, %v1461
  %v1466 = vadd.f32 %v1438, %v1462
  %1467 = vset.pattern.permute.xlu0 2
  %1468 = vperm.xlu0 %1467, %v1413
  %v1469 = vpop.permute.xlu0 %1468
  %v1471 = vlaneseq
  %v1472 = vshrl.u32 %v1471, 7
  %v1473 = vsub.s32 2, %v1472
  %v1474 = vrot.slane %v1213, %v1473
  %v1475 = vlaneseq
  %v1476 = vshrl.u32 %v1475, 7
  %v1477 = vsub.s32 2, %v1476
  %v1478 = vrot.slane %v1214, %v1477
  %v1479 = vlaneseq
  %v1480 = vshrl.u32 %v1479, 7
  %v1481 = vsub.s32 2, %v1480
  %v1482 = vrot.slane %v1215, %v1481
  %v1483 = vlaneseq
  %v1484 = vshrl.u32 %v1483, 7
  %v1485 = vsub.s32 2, %v1484
  %v1486 = vrot.slane %v1216, %v1485
  %v1487 = vmul.f32 %v1469, %v1474
  %v1488 = vmul.f32 %v1469, %v1478
  %v1489 = vmul.f32 %v1469, %v1482
  %v1490 = vmul.f32 %v1469, %v1486
  %v1491 = vadd.f32 %v1463, %v1487
  %v1492 = vadd.f32 %v1464, %v1488
  %v1493 = vadd.f32 %v1465, %v1489
  %v1494 = vadd.f32 %v1466, %v1490
  %1495 = vset.pattern.permute.xlu0 3
  %1496 = vperm.xlu0 %1495, %v1413
  %v1497 = vpop.permute.xlu0 %1496
  %v1499 = vlaneseq
  %v1500 = vshrl.u32 %v1499, 7
  %v1501 = vsub.s32 3, %v1500
  %v1502 = vrot.slane %v1213, %v1501
  %v1503 = vlaneseq
  %v1504 = vshrl.u32 %v1503, 7
  %v1505 = vsub.s32 3, %v1504
  %v1506 = vrot.slane %v1214, %v1505
  %v1507 = vlaneseq
  %v1508 = vshrl.u32 %v1507, 7
  %v1509 = vsub.s32 3, %v1508
  %v1510 = vrot.slane %v1215, %v1509
  %v1511 = vlaneseq
  %v1512 = vshrl.u32 %v1511, 7
  %v1513 = vsub.s32 3, %v1512
  %v1514 = vrot.slane %v1216, %v1513
  %v1515 = vmul.f32 %v1497, %v1502
  %v1516 = vmul.f32 %v1497, %v1506
  %v1517 = vmul.f32 %v1497, %v1510
  %v1518 = vmul.f32 %v1497, %v1514
  %v1519 = vadd.f32 %v1491, %v1515
  %v1520 = vadd.f32 %v1492, %v1516
  %v1521 = vadd.f32 %v1493, %v1517
  %v1522 = vadd.f32 %v1494, %v1518
  %1523 = vset.pattern.permute.xlu0 4
  %1524 = vperm.xlu0 %1523, %v1413
  %v1525 = vpop.permute.xlu0 %1524
  %v1527 = vlaneseq
  %v1528 = vshrl.u32 %v1527, 7
  %v1529 = vsub.s32 0, %v1528
  %v1530 = vrot.slane %v1369, %v1529
  %v1531 = vlaneseq
  %v1532 = vshrl.u32 %v1531, 7
  %v1533 = vsub.s32 0, %v1532
  %v1534 = vrot.slane %v1370, %v1533
  %v1535 = vlaneseq
  %v1536 = vshrl.u32 %v1535, 7
  %v1537 = vsub.s32 0, %v1536
  %v1538 = vrot.slane %v1371, %v1537
  %v1539 = vlaneseq
  %v1540 = vshrl.u32 %v1539, 7
  %v1541 = vsub.s32 0, %v1540
  %v1542 = vrot.slane %v1372, %v1541
  %v1543 = vmul.f32 %v1525, %v1530
  %v1544 = vmul.f32 %v1525, %v1534
  %v1545 = vmul.f32 %v1525, %v1538
  %v1546 = vmul.f32 %v1525, %v1542
  %1547 = vset.pattern.permute.xlu0 5
  %1548 = vperm.xlu0 %1547, %v1413
  %v1549 = vpop.permute.xlu0 %1548
  %v1551 = vlaneseq
  %v1552 = vshrl.u32 %v1551, 7
  %v1553 = vsub.s32 1, %v1552
  %v1554 = vrot.slane %v1369, %v1553
  %v1555 = vlaneseq
  %v1556 = vshrl.u32 %v1555, 7
  %v1557 = vsub.s32 1, %v1556
  %v1558 = vrot.slane %v1370, %v1557
  %v1559 = vlaneseq
  %v1560 = vshrl.u32 %v1559, 7
  %v1561 = vsub.s32 1, %v1560
  %v1562 = vrot.slane %v1371, %v1561
  %v1563 = vlaneseq
  %v1564 = vshrl.u32 %v1563, 7
  %v1565 = vsub.s32 1, %v1564
  %v1566 = vrot.slane %v1372, %v1565
  %v1567 = vmul.f32 %v1549, %v1554
  %v1568 = vmul.f32 %v1549, %v1558
  %v1569 = vmul.f32 %v1549, %v1562
  %v1570 = vmul.f32 %v1549, %v1566
  %v1571 = vadd.f32 %v1543, %v1567
  %v1572 = vadd.f32 %v1544, %v1568
  %v1573 = vadd.f32 %v1545, %v1569
  %v1574 = vadd.f32 %v1546, %v1570
  %1575 = vset.pattern.permute.xlu0 6
  %1576 = vperm.xlu0 %1575, %v1413
  %v1577 = vpop.permute.xlu0 %1576
  %v1579 = vlaneseq
  %v1580 = vshrl.u32 %v1579, 7
  %v1581 = vsub.s32 2, %v1580
  %v1582 = vrot.slane %v1369, %v1581
  %v1583 = vlaneseq
  %v1584 = vshrl.u32 %v1583, 7
  %v1585 = vsub.s32 2, %v1584
  %v1586 = vrot.slane %v1370, %v1585
  %v1587 = vlaneseq
  %v1588 = vshrl.u32 %v1587, 7
  %v1589 = vsub.s32 2, %v1588
  %v1590 = vrot.slane %v1371, %v1589
  %v1591 = vlaneseq
  %v1592 = vshrl.u32 %v1591, 7
  %v1593 = vsub.s32 2, %v1592
  %v1594 = vrot.slane %v1372, %v1593
  %v1595 = vmul.f32 %v1577, %v1582
  %v1596 = vmul.f32 %v1577, %v1586
  %v1597 = vmul.f32 %v1577, %v1590
  %v1598 = vmul.f32 %v1577, %v1594
  %v1599 = vadd.f32 %v1571, %v1595
  %v1600 = vadd.f32 %v1572, %v1596
  %v1601 = vadd.f32 %v1573, %v1597
  %v1602 = vadd.f32 %v1574, %v1598
  %1603 = vset.pattern.permute.xlu0 7
  %1604 = vperm.xlu0 %1603, %v1413
  %v1605 = vpop.permute.xlu0 %1604
  %v1607 = vlaneseq
  %v1608 = vshrl.u32 %v1607, 7
  %v1609 = vsub.s32 3, %v1608
  %v1610 = vrot.slane %v1369, %v1609
  %v1611 = vlaneseq
  %v1612 = vshrl.u32 %v1611, 7
  %v1613 = vsub.s32 3, %v1612
  %v1614 = vrot.slane %v1370, %v1613
  %v1615 = vlaneseq
  %v1616 = vshrl.u32 %v1615, 7
  %v1617 = vsub.s32 3, %v1616
  %v1618 = vrot.slane %v1371, %v1617
  %v1619 = vlaneseq
  %v1620 = vshrl.u32 %v1619, 7
  %v1621 = vsub.s32 3, %v1620
  %v1622 = vrot.slane %v1372, %v1621
  %v1623 = vmul.f32 %v1605, %v1610
  %v1624 = vmul.f32 %v1605, %v1614
  %v1625 = vmul.f32 %v1605, %v1618
  %v1626 = vmul.f32 %v1605, %v1622
  %v1627 = vadd.f32 %v1599, %v1623
  %v1628 = vadd.f32 %v1600, %v1624
  %v1629 = vadd.f32 %v1601, %v1625
  %v1630 = vadd.f32 %v1602, %v1626
  %v1631 = vadd.f32 %v1519, %v1627
  %v1632 = vadd.f32 %v1520, %v1628
  %v1633 = vadd.f32 %v1521, %v1629
  %v1634 = vadd.f32 %v1522, %v1630
  %1635 = vset.pattern.permute.xlu0 8
  %1636 = vperm.xlu0 %1635, %v1413
  %v1637 = vpop.permute.xlu0 %1636
  %v1639 = vlaneseq
  %v1640 = vshrl.u32 %v1639, 7
  %v1641 = vsub.s32 0, %v1640
  %v1642 = vrot.slane %v1409, %v1641
  %v1643 = vlaneseq
  %v1644 = vshrl.u32 %v1643, 7
  %v1645 = vsub.s32 0, %v1644
  %v1646 = vrot.slane %v1410, %v1645
  %v1647 = vlaneseq
  %v1648 = vshrl.u32 %v1647, 7
  %v1649 = vsub.s32 0, %v1648
  %v1650 = vrot.slane %v1411, %v1649
  %v1651 = vlaneseq
  %v1652 = vshrl.u32 %v1651, 7
  %v1653 = vsub.s32 0, %v1652
  %v1654 = vrot.slane %v1412, %v1653
  %v1655 = vmul.f32 %v1637, %v1642
  %v1656 = vmul.f32 %v1637, %v1646
  %v1657 = vmul.f32 %v1637, %v1650
  %v1658 = vmul.f32 %v1637, %v1654
  %1659 = vset.pattern.permute.xlu0 9
  %1660 = vperm.xlu0 %1659, %v1413
  %v1661 = vpop.permute.xlu0 %1660
  %v1663 = vlaneseq
  %v1664 = vshrl.u32 %v1663, 7
  %v1665 = vsub.s32 1, %v1664
  %v1666 = vrot.slane %v1409, %v1665
  %v1667 = vlaneseq
  %v1668 = vshrl.u32 %v1667, 7
  %v1669 = vsub.s32 1, %v1668
  %v1670 = vrot.slane %v1410, %v1669
  %v1671 = vlaneseq
  %v1672 = vshrl.u32 %v1671, 7
  %v1673 = vsub.s32 1, %v1672
  %v1674 = vrot.slane %v1411, %v1673
  %v1675 = vlaneseq
  %v1676 = vshrl.u32 %v1675, 7
  %v1677 = vsub.s32 1, %v1676
  %v1678 = vrot.slane %v1412, %v1677
  %v1679 = vmul.f32 %v1661, %v1666
  %v1680 = vmul.f32 %v1661, %v1670
  %v1681 = vmul.f32 %v1661, %v1674
  %v1682 = vmul.f32 %v1661, %v1678
  %v1683 = vadd.f32 %v1655, %v1679
  %v1684 = vadd.f32 %v1656, %v1680
  %v1685 = vadd.f32 %v1657, %v1681
  %v1686 = vadd.f32 %v1658, %v1682
  %1687 = vset.pattern.permute.xlu0 10
  %1688 = vperm.xlu0 %1687, %v1413
  %v1689 = vpop.permute.xlu0 %1688
  %v1691 = vlaneseq
  %v1692 = vshrl.u32 %v1691, 7
  %v1693 = vsub.s32 2, %v1692
  %v1694 = vrot.slane %v1409, %v1693
  %v1695 = vlaneseq
  %v1696 = vshrl.u32 %v1695, 7
  %v1697 = vsub.s32 2, %v1696
  %v1698 = vrot.slane %v1410, %v1697
  %v1699 = vlaneseq
  %v1700 = vshrl.u32 %v1699, 7
  %v1701 = vsub.s32 2, %v1700
  %v1702 = vrot.slane %v1411, %v1701
  %v1703 = vlaneseq
  %v1704 = vshrl.u32 %v1703, 7
  %v1705 = vsub.s32 2, %v1704
  %v1706 = vrot.slane %v1412, %v1705
  %v1707 = vmul.f32 %v1689, %v1694
  %v1708 = vmul.f32 %v1689, %v1698
  %v1709 = vmul.f32 %v1689, %v1702
  %v1710 = vmul.f32 %v1689, %v1706
  %v1711 = vadd.f32 %v1683, %v1707
  %v1712 = vadd.f32 %v1684, %v1708
  %v1713 = vadd.f32 %v1685, %v1709
  %v1714 = vadd.f32 %v1686, %v1710
  %1715 = vset.pattern.permute.xlu0 11
  %1716 = vperm.xlu0 %1715, %v1413
  %v1717 = vpop.permute.xlu0 %1716
  %v1719 = vlaneseq
  %v1720 = vshrl.u32 %v1719, 7
  %v1721 = vsub.s32 3, %v1720
  %v1722 = vrot.slane %v1409, %v1721
  %v1723 = vlaneseq
  %v1724 = vshrl.u32 %v1723, 7
  %v1725 = vsub.s32 3, %v1724
  %v1726 = vrot.slane %v1410, %v1725
  %v1727 = vlaneseq
  %v1728 = vshrl.u32 %v1727, 7
  %v1729 = vsub.s32 3, %v1728
  %v1730 = vrot.slane %v1411, %v1729
  %v1731 = vlaneseq
  %v1732 = vshrl.u32 %v1731, 7
  %v1733 = vsub.s32 3, %v1732
  %v1734 = vrot.slane %v1412, %v1733
  %v1735 = vmul.f32 %v1717, %v1722
  %v1736 = vmul.f32 %v1717, %v1726
  %v1737 = vmul.f32 %v1717, %v1730
  %v1738 = vmul.f32 %v1717, %v1734
  %v1739 = vadd.f32 %v1711, %v1735
  %v1740 = vadd.f32 %v1712, %v1736
  %v1741 = vadd.f32 %v1713, %v1737
  %v1742 = vadd.f32 %v1714, %v1738
  %v1743 = vadd.f32 %v1631, %v1739
  %v1744 = vadd.f32 %v1632, %v1740
  %v1745 = vadd.f32 %v1633, %v1741
  %v1746 = vadd.f32 %v1634, %v1742
  %1747 = vset.pattern.permute.xlu0 3
  %1748 = vperm.xlu0 %1747, %v53
  %v1749 = vpop.permute.xlu0 %1748
  %v1751 = vadd.f32 %v1743, %v1749
  %v1752 = vadd.f32 %v1744, %v1749
  %v1753 = vadd.f32 %v1745, %v1749
  %v1754 = vadd.f32 %v1746, %v1749
  %v1755 = vsel %vm316, %v1751, 0.0
  %v1756 = vsel %vm316, %v1752, 0.0
  %v1757 = vadd.f32 %v1755, %v1756
  %v1758 = vsel %vm316, %v1753, 0.0
  %v1759 = vadd.f32 %v1757, %v1758
  %v1760 = vsel %vm316, %v1754, 0.0
  %v1761 = vadd.f32 %v1759, %v1760
  %1762 = vadd.xlane.f32.xlu0 %v1761
  %v1763 = vpop.xlane.xlu0 %1762
  %v1764 = vmul.f32 %v1763, 0.001953125
  %v1765 = vmul.f32 %v1751, %v1751
  %v1766 = vmul.f32 %v1752, %v1752
  %v1767 = vmul.f32 %v1753, %v1753
  %v1768 = vmul.f32 %v1754, %v1754
  %v1769 = vsel %vm316, %v1765, 0.0
  %v1770 = vsel %vm316, %v1766, 0.0
  %v1771 = vadd.f32 %v1769, %v1770
  %v1772 = vsel %vm316, %v1767, 0.0
  %v1773 = vadd.f32 %v1771, %v1772
  %v1774 = vsel %vm316, %v1768, 0.0
  %v1775 = vadd.f32 %v1773, %v1774
  %1776 = vadd.xlane.f32.xlu0 %v1775
  %v1777 = vpop.xlane.xlu0 %1776
  %v1778 = vmul.f32 %v1777, 0.001953125
  %v1779 = vmul.f32 %v1764, %v1764
  %v1780 = vsub.f32 %v1778, %v1779
  %v1781 = vmax.f32 %v1780, 0.0
  %v1782 = vadd.f32 %v1781, 1e-05
  %v1783 = vrsqrt.pop %v1782
  %v1784 = vmul.f32 %v53, %v1783
  %1786 = vset.pattern.permute.xlu0 4
  %1787 = vperm.xlu0 %1786, %v1784
  %v1788 = vpop.permute.xlu0 %1787
  %v1790 = vmul.f32 %v1751, %v1788
  %v1791 = vmul.f32 %v1752, %v1788
  %v1792 = vmul.f32 %v1753, %v1788
  %v1793 = vmul.f32 %v1754, %v1788
  %v1794 = vmul.f32 %v1764, %v1784
  %1796 = vrot.lane.b32.xlu0 %v1794, 1
  %v1797 = vpop.permute.xlu0 %1796
  %v1799 = vsub.f32 %v53, %v1797
  %1801 = vset.pattern.permute.xlu0 5
  %1802 = vperm.xlu0 %1801, %v1799
  %v1803 = vpop.permute.xlu0 %1802
  %v1805 = vadd.f32 %v1790, %v1803
  %v1806 = vadd.f32 %v1791, %v1803
  %v1807 = vadd.f32 %v1792, %v1803
  %v1808 = vadd.f32 %v1793, %v1803
  %vm1809 = vcmp.ge.f32.partialorder %v1805, 0.0
  %vm1810 = vcmp.ge.f32.partialorder %v1806, 0.0
  %vm1811 = vcmp.ge.f32.partialorder %v1807, 0.0
  %vm1812 = vcmp.ge.f32.partialorder %v1808, 0.0
  %v1813 = vmul.f32 %v1805, 0.01
  %v1814 = vmul.f32 %v1806, 0.01
  %v1815 = vmul.f32 %v1807, 0.01
  %v1816 = vmul.f32 %v1808, 0.01
  %v1817 = vsel %vm1809, %v1805, %v1813
  %v1818 = vsel %vm1810, %v1806, %v1814
  %v1819 = vsel %vm1811, %v1807, %v1815
  %v1820 = vsel %vm1812, %v1808, %v1816
  %v1821 = vcombine.high %v41, %v41
  %v1822 = vcombine.high %v42, %v42
  %v1825 = vadd.f32 %v1817, %v41
  %v1826 = vadd.f32 %v1818, %v1821
  %v1827 = vadd.f32 %v1819, %v42
  %v1828 = vadd.f32 %v1820, %v1822
  %v1829 = vsel %vm316, %v1825, 0.0
  %v1830 = vsel %vm316, %v1826, 0.0
  %v1831 = vadd.f32 %v1829, %v1830
  %v1832 = vsel %vm316, %v1827, 0.0
  %v1833 = vadd.f32 %v1831, %v1832
  %v1834 = vsel %vm316, %v1828, 0.0
  %v1835 = vadd.f32 %v1833, %v1834
  %1836 = vadd.xlane.f32.xlu0 %v1835
  %v1837 = vpop.xlane.xlu0 %1836
  %v1838 = vmul.f32 %v1837, 0.001953125
  %v1839 = vmul.f32 %v1825, %v1825
  %v1840 = vmul.f32 %v1826, %v1826
  %v1841 = vmul.f32 %v1827, %v1827
  %v1842 = vmul.f32 %v1828, %v1828
  %v1843 = vsel %vm316, %v1839, 0.0
  %v1844 = vsel %vm316, %v1840, 0.0
  %v1845 = vadd.f32 %v1843, %v1844
  %v1846 = vsel %vm316, %v1841, 0.0
  %v1847 = vadd.f32 %v1845, %v1846
  %v1848 = vsel %vm316, %v1842, 0.0
  %v1849 = vadd.f32 %v1847, %v1848
  %1850 = vadd.xlane.f32.xlu0 %v1849
  %v1851 = vpop.xlane.xlu0 %1850
  %v1852 = vmul.f32 %v1851, 0.001953125
  %v1853 = vmul.f32 %v1838, %v1838
  %v1854 = vsub.f32 %v1852, %v1853
  %v1855 = vmax.f32 %v1854, 0.0
  %v1856 = vadd.f32 %v1855, 1e-05
  %v1857 = vrsqrt.pop %v1856
  %v1858 = vmul.f32 %v53, %v1857
  %1860 = vset.pattern.permute.xlu0 6
  %1861 = vperm.xlu0 %1860, %v1858
  %v1862 = vpop.permute.xlu0 %1861
  %v1864 = vmul.f32 %v1825, %v1862
  %v1865 = vmul.f32 %v1826, %v1862
  %v1866 = vmul.f32 %v1827, %v1862
  %v1867 = vmul.f32 %v1828, %v1862
  %v1868 = vmul.f32 %v1838, %v1858
  %1870 = vrot.lane.b32.xlu0 %v1868, 1
  %v1871 = vpop.permute.xlu0 %1870
  %v1873 = vsub.f32 %v53, %v1871
  %1875 = vset.pattern.permute.xlu0 7
  %1876 = vperm.xlu0 %1875, %v1873
  %v1877 = vpop.permute.xlu0 %1876
  %v1879 = vadd.f32 %v1864, %v1877
  %v1880 = vadd.f32 %v1865, %v1877
  %v1881 = vadd.f32 %v1866, %v1877
  %v1882 = vadd.f32 %v1867, %v1877
  %v1883 = vld [vmem:[%s8] sm:$0xff]
  %1885 = vset.pattern.permute.xlu0 0
  %1886 = vperm.xlu0 %1885, %v1883
  %v1887 = vpop.permute.xlu0 %1886
  %v1889 = vlaneseq
  %v1890 = vshrl.u32 %v1889, 7
  %v1891 = vsub.s32 0, %v1890
  %v1892 = vrot.slane %v1879, %v1891
  %v1893 = vlaneseq
  %v1894 = vshrl.u32 %v1893, 7
  %v1895 = vsub.s32 0, %v1894
  %v1896 = vrot.slane %v1880, %v1895
  %v1897 = vlaneseq
  %v1898 = vshrl.u32 %v1897, 7
  %v1899 = vsub.s32 0, %v1898
  %v1900 = vrot.slane %v1881, %v1899
  %v1901 = vlaneseq
  %v1902 = vshrl.u32 %v1901, 7
  %v1903 = vsub.s32 0, %v1902
  %v1904 = vrot.slane %v1882, %v1903
  %v1905 = vmul.f32 %v1887, %v1892
  %v1906 = vmul.f32 %v1887, %v1896
  %v1907 = vmul.f32 %v1887, %v1900
  %v1908 = vmul.f32 %v1887, %v1904
  %1909 = vset.pattern.permute.xlu0 1
  %1910 = vperm.xlu0 %1909, %v1883
  %v1911 = vpop.permute.xlu0 %1910
  %v1913 = vlaneseq
  %v1914 = vshrl.u32 %v1913, 7
  %v1915 = vsub.s32 1, %v1914
  %v1916 = vrot.slane %v1879, %v1915
  %v1917 = vlaneseq
  %v1918 = vshrl.u32 %v1917, 7
  %v1919 = vsub.s32 1, %v1918
  %v1920 = vrot.slane %v1880, %v1919
  %v1921 = vlaneseq
  %v1922 = vshrl.u32 %v1921, 7
  %v1923 = vsub.s32 1, %v1922
  %v1924 = vrot.slane %v1881, %v1923
  %v1925 = vlaneseq
  %v1926 = vshrl.u32 %v1925, 7
  %v1927 = vsub.s32 1, %v1926
  %v1928 = vrot.slane %v1882, %v1927
  %v1929 = vmul.f32 %v1911, %v1916
  %v1930 = vmul.f32 %v1911, %v1920
  %v1931 = vmul.f32 %v1911, %v1924
  %v1932 = vmul.f32 %v1911, %v1928
  %v1933 = vadd.f32 %v1905, %v1929
  %v1934 = vadd.f32 %v1906, %v1930
  %v1935 = vadd.f32 %v1907, %v1931
  %v1936 = vadd.f32 %v1908, %v1932
  %1937 = vset.pattern.permute.xlu0 2
  %1938 = vperm.xlu0 %1937, %v1883
  %v1939 = vpop.permute.xlu0 %1938
  %v1941 = vlaneseq
  %v1942 = vshrl.u32 %v1941, 7
  %v1943 = vsub.s32 2, %v1942
  %v1944 = vrot.slane %v1879, %v1943
  %v1945 = vlaneseq
  %v1946 = vshrl.u32 %v1945, 7
  %v1947 = vsub.s32 2, %v1946
  %v1948 = vrot.slane %v1880, %v1947
  %v1949 = vlaneseq
  %v1950 = vshrl.u32 %v1949, 7
  %v1951 = vsub.s32 2, %v1950
  %v1952 = vrot.slane %v1881, %v1951
  %v1953 = vlaneseq
  %v1954 = vshrl.u32 %v1953, 7
  %v1955 = vsub.s32 2, %v1954
  %v1956 = vrot.slane %v1882, %v1955
  %v1957 = vmul.f32 %v1939, %v1944
  %v1958 = vmul.f32 %v1939, %v1948
  %v1959 = vmul.f32 %v1939, %v1952
  %v1960 = vmul.f32 %v1939, %v1956
  %v1961 = vadd.f32 %v1933, %v1957
  %v1962 = vadd.f32 %v1934, %v1958
  %v1963 = vadd.f32 %v1935, %v1959
  %v1964 = vadd.f32 %v1936, %v1960
  %1965 = vset.pattern.permute.xlu0 3
  %1966 = vperm.xlu0 %1965, %v1883
  %v1967 = vpop.permute.xlu0 %1966
  %v1969 = vlaneseq
  %v1970 = vshrl.u32 %v1969, 7
  %v1971 = vsub.s32 3, %v1970
  %v1972 = vrot.slane %v1879, %v1971
  %v1973 = vlaneseq
  %v1974 = vshrl.u32 %v1973, 7
  %v1975 = vsub.s32 3, %v1974
  %v1976 = vrot.slane %v1880, %v1975
  %v1977 = vlaneseq
  %v1978 = vshrl.u32 %v1977, 7
  %v1979 = vsub.s32 3, %v1978
  %v1980 = vrot.slane %v1881, %v1979
  %v1981 = vlaneseq
  %v1982 = vshrl.u32 %v1981, 7
  %v1983 = vsub.s32 3, %v1982
  %v1984 = vrot.slane %v1882, %v1983
  %v1985 = vmul.f32 %v1967, %v1972
  %v1986 = vmul.f32 %v1967, %v1976
  %v1987 = vmul.f32 %v1967, %v1980
  %v1988 = vmul.f32 %v1967, %v1984
  %v1989 = vadd.f32 %v1961, %v1985
  %v1990 = vadd.f32 %v1962, %v1986
  %v1991 = vadd.f32 %v1963, %v1987
  %v1992 = vadd.f32 %v1964, %v1988
  %1994 = vset.pattern.permute.xlu0 0
  %1995 = vperm.xlu0 %1994, %v54
  %v1996 = vpop.permute.xlu0 %1995
  %v1998 = vadd.f32 %v1989, %v1996
  %v1999 = vadd.f32 %v1990, %v1996
  %v2000 = vadd.f32 %v1991, %v1996
  %v2001 = vadd.f32 %v1992, %v1996
  %v2002 = vadd.f32 %v1998, %v1999
  %v2003 = vadd.f32 %v2002, %v2000
  %v2004 = vadd.f32 %v2003, %v2001
  %2005 = vadd.xlane.f32.xlu0 %v2004
  %v2006 = vpop.xlane.xlu0 %2005
  %v2007 = vmul.f32 %v2006, 0.001953125
  %v2008 = vmul.f32 %v1998, %v1998
  %v2009 = vmul.f32 %v1999, %v1999
  %v2010 = vmul.f32 %v2000, %v2000
  %v2011 = vmul.f32 %v2001, %v2001
  %v2012 = vadd.f32 %v2008, %v2009
  %v2013 = vadd.f32 %v2012, %v2010
  %v2014 = vadd.f32 %v2013, %v2011
  %2015 = vadd.xlane.f32.xlu0 %v2014
  %v2016 = vpop.xlane.xlu0 %2015
  %v2017 = vmul.f32 %v2016, 0.001953125
  %v2018 = vmul.f32 %v2007, %v2007
  %v2019 = vsub.f32 %v2017, %v2018
  %v2020 = vmax.f32 %v2019, 0.0
  %v2021 = vadd.f32 %v2020, 1e-05
  %v2022 = vrsqrt.pop %v2021
  %v2023 = vmul.f32 %v54, %v2022
  %2025 = vset.pattern.permute.xlu0 1
  %2026 = vperm.xlu0 %2025, %v2023
  %v2027 = vpop.permute.xlu0 %2026
  %v2029 = vmul.f32 %v1998, %v2027
  %v2030 = vmul.f32 %v1999, %v2027
  %v2031 = vmul.f32 %v2000, %v2027
  %v2032 = vmul.f32 %v2001, %v2027
  %v2033 = vmul.f32 %v2007, %v2023
  %2035 = vrot.lane.b32.xlu0 %v2033, 1
  %v2036 = vpop.permute.xlu0 %2035
  %v2038 = vsub.f32 %v54, %v2036
  %2040 = vset.pattern.permute.xlu0 2
  %2041 = vperm.xlu0 %2040, %v2038
  %v2042 = vpop.permute.xlu0 %2041
  %v2044 = vadd.f32 %v2029, %v2042
  %v2045 = vadd.f32 %v2030, %v2042
  %v2046 = vadd.f32 %v2031, %v2042
  %v2047 = vadd.f32 %v2032, %v2042
  %vm2048 = vcmp.ge.f32.partialorder %v2044, 0.0
  %vm2049 = vcmp.ge.f32.partialorder %v2045, 0.0
  %vm2050 = vcmp.ge.f32.partialorder %v2046, 0.0
  %vm2051 = vcmp.ge.f32.partialorder %v2047, 0.0
  %v2052 = vmul.f32 %v2044, 0.01
  %v2053 = vmul.f32 %v2045, 0.01
  %v2054 = vmul.f32 %v2046, 0.01
  %v2055 = vmul.f32 %v2047, 0.01
  %v2056 = vsel %vm2048, %v2044, %v2052
  %v2057 = vsel %vm2049, %v2045, %v2053
  %v2058 = vsel %vm2050, %v2046, %v2054
  %v2059 = vsel %vm2051, %v2047, %v2055
  %v2060 = vld [vmem:[%s10] sm:$0x1]
  %v2061 = vld [vmem:[%s11] sm:$0xff]
  %v2062 = vadd.f32 %v2056, %v2057
  %2063 = vadd.xlane.f32.xlu0 %v2062
  %v2064 = vpop.xlane.xlu0 %2063
  %v2065 = vmul.f32 %v2056, %v2056
  %v2066 = vmul.f32 %v2057, %v2057
  %v2067 = vadd.f32 %v2065, %v2066
  %2068 = vadd.xlane.f32.xlu0 %v2067
  %v2069 = vpop.xlane.xlu0 %2068
  %v2070 = vmul.f32 %v2064, 0.00390625
  %v2071 = vmul.f32 %v2060, %v2070
  %v2073 = vlaneseq
  %v2074 = vshrl.u32 %v2073, 7
  %v2075 = vsub.s32 1, %v2074
  %v2076 = vrot.slane %v2070, %v2075
  %v2078 = vmul.f32 %v2060, %v2076
  %2080 = vrot.lane.b32.xlu0 %v2078, 127
  %v2081 = vpop.permute.xlu0 %2080
  %v2083 = vadd.f32 %v2071, %v2081
  %v2084 = vlaneseq
  %v2085 = vshrl.u32 %v2084, 7
  %v2086 = vsub.s32 2, %v2085
  %v2087 = vrot.slane %v2070, %v2086
  %v2089 = vmul.f32 %v2060, %v2087
  %2091 = vrot.lane.b32.xlu0 %v2089, 126
  %v2092 = vpop.permute.xlu0 %2091
  %v2094 = vadd.f32 %v2083, %v2092
  %v2095 = vlaneseq
  %v2096 = vshrl.u32 %v2095, 7
  %v2097 = vsub.s32 3, %v2096
  %v2098 = vrot.slane %v2070, %v2097
  %v2100 = vmul.f32 %v2060, %v2098
  %2102 = vrot.lane.b32.xlu0 %v2100, 125
  %v2103 = vpop.permute.xlu0 %2102
  %v2105 = vadd.f32 %v2094, %v2103
  %v2106 = vlaneseq
  %v2107 = vshrl.u32 %v2106, 7
  %v2108 = vsub.s32 4, %v2107
  %v2109 = vrot.slane %v2070, %v2108
  %v2111 = vmul.f32 %v2060, %v2109
  %2113 = vrot.lane.b32.xlu0 %v2111, 124
  %v2114 = vpop.permute.xlu0 %2113
  %v2116 = vadd.f32 %v2105, %v2114
  %v2117 = vlaneseq
  %v2118 = vshrl.u32 %v2117, 7
  %v2119 = vsub.s32 5, %v2118
  %v2120 = vrot.slane %v2070, %v2119
  %v2122 = vmul.f32 %v2060, %v2120
  %2124 = vrot.lane.b32.xlu0 %v2122, 123
  %v2125 = vpop.permute.xlu0 %2124
  %v2127 = vadd.f32 %v2116, %v2125
  %v2128 = vlaneseq
  %v2129 = vshrl.u32 %v2128, 7
  %v2130 = vsub.s32 6, %v2129
  %v2131 = vrot.slane %v2070, %v2130
  %v2133 = vmul.f32 %v2060, %v2131
  %2135 = vrot.lane.b32.xlu0 %v2133, 122
  %v2136 = vpop.permute.xlu0 %2135
  %v2138 = vadd.f32 %v2127, %v2136
  %v2139 = vlaneseq
  %v2140 = vshrl.u32 %v2139, 7
  %v2141 = vsub.s32 7, %v2140
  %v2142 = vrot.slane %v2070, %v2141
  %v2144 = vmul.f32 %v2060, %v2142
  %2146 = vrot.lane.b32.xlu0 %v2144, 121
  %v2147 = vpop.permute.xlu0 %2146
  %v2149 = vadd.f32 %v2138, %v2147
  %2151 = vrot.lane.b32.xlu0 %v2060, 120
  %v2152 = vpop.permute.xlu0 %2151
  %v2154 = vadd.f32 %v2149, %v2152
  %vm2155 = vcmp.ge.f32.partialorder %v2154, 0.0
  %v2156 = vmul.f32 %v2154, 0.01
  %v2157 = vsel %vm2155, %v2154, %v2156
  %v2159 = vlaneseq
  %v2160 = vshrl.u32 %v2159, 7
  %v2161 = vsub.s32 0, %v2160
  %v2162 = vrot.slane %v2157, %v2161
  %v2164 = vmul.f32 %v2061, %v2162
  %2165 = vrot.lane.b32.xlu0 %v54, 125
  %v2166 = vpop.permute.xlu0 %2165
  %v2168 = vadd.f32 %v2164, %v2166
  %v2169 = vsub.f32 0.0, %v2168
  %v2170 = vmul.f32 %v2169, 1.442695
  %v2171 = vpow.pop %v2170
  %v2172 = vadd.f32 %v2171, 1.0
  %v2173 = vrcp.pop %v2172
  %v2174 = vmul.f32 1.0, %v2173
  %v2175 = vmul.f32 %v2174, %v2064
  %v2176 = vadd.f32 %v2175, 0.0
  %v2177 = vmul.f32 %v2174, %v2174
  %v2178 = vmul.f32 %v2177, %v2069
  %v2179 = vadd.f32 %v2178, 0.0
  %v2180 = vadd.f32 %v2058, %v2059
  %2181 = vadd.xlane.f32.xlu0 %v2180
  %v2182 = vpop.xlane.xlu0 %2181
  %v2183 = vmul.f32 %v2058, %v2058
  %v2184 = vmul.f32 %v2059, %v2059
  %v2185 = vadd.f32 %v2183, %v2184
  %2186 = vadd.xlane.f32.xlu0 %v2185
  %v2187 = vpop.xlane.xlu0 %2186
  %v2188 = vmul.f32 %v2182, 0.00390625
  %v2189 = vmul.f32 %v2060, %v2188
  %v2191 = vlaneseq
  %v2192 = vshrl.u32 %v2191, 7
  %v2193 = vsub.s32 1, %v2192
  %v2194 = vrot.slane %v2188, %v2193
  %v2196 = vmul.f32 %v2060, %v2194
  %2198 = vrot.lane.b32.xlu0 %v2196, 127
  %v2199 = vpop.permute.xlu0 %2198
  %v2201 = vadd.f32 %v2189, %v2199
  %v2202 = vlaneseq
  %v2203 = vshrl.u32 %v2202, 7
  %v2204 = vsub.s32 2, %v2203
  %v2205 = vrot.slane %v2188, %v2204
  %v2207 = vmul.f32 %v2060, %v2205
  %2209 = vrot.lane.b32.xlu0 %v2207, 126
  %v2210 = vpop.permute.xlu0 %2209
  %v2212 = vadd.f32 %v2201, %v2210
  %v2213 = vlaneseq
  %v2214 = vshrl.u32 %v2213, 7
  %v2215 = vsub.s32 3, %v2214
  %v2216 = vrot.slane %v2188, %v2215
  %v2218 = vmul.f32 %v2060, %v2216
  %2220 = vrot.lane.b32.xlu0 %v2218, 125
  %v2221 = vpop.permute.xlu0 %2220
  %v2223 = vadd.f32 %v2212, %v2221
  %v2224 = vlaneseq
  %v2225 = vshrl.u32 %v2224, 7
  %v2226 = vsub.s32 4, %v2225
  %v2227 = vrot.slane %v2188, %v2226
  %v2229 = vmul.f32 %v2060, %v2227
  %2231 = vrot.lane.b32.xlu0 %v2229, 124
  %v2232 = vpop.permute.xlu0 %2231
  %v2234 = vadd.f32 %v2223, %v2232
  %v2235 = vlaneseq
  %v2236 = vshrl.u32 %v2235, 7
  %v2237 = vsub.s32 5, %v2236
  %v2238 = vrot.slane %v2188, %v2237
  %v2240 = vmul.f32 %v2060, %v2238
  %2242 = vrot.lane.b32.xlu0 %v2240, 123
  %v2243 = vpop.permute.xlu0 %2242
  %v2245 = vadd.f32 %v2234, %v2243
  %v2246 = vlaneseq
  %v2247 = vshrl.u32 %v2246, 7
  %v2248 = vsub.s32 6, %v2247
  %v2249 = vrot.slane %v2188, %v2248
  %v2251 = vmul.f32 %v2060, %v2249
  %2253 = vrot.lane.b32.xlu0 %v2251, 122
  %v2254 = vpop.permute.xlu0 %2253
  %v2256 = vadd.f32 %v2245, %v2254
  %v2257 = vlaneseq
  %v2258 = vshrl.u32 %v2257, 7
  %v2259 = vsub.s32 7, %v2258
  %v2260 = vrot.slane %v2188, %v2259
  %v2262 = vmul.f32 %v2060, %v2260
  %2264 = vrot.lane.b32.xlu0 %v2262, 121
  %v2265 = vpop.permute.xlu0 %2264
  %v2267 = vadd.f32 %v2256, %v2265
  %v2268 = vadd.f32 %v2267, %v2152
  %vm2269 = vcmp.ge.f32.partialorder %v2268, 0.0
  %v2270 = vmul.f32 %v2268, 0.01
  %v2271 = vsel %vm2269, %v2268, %v2270
  %v2273 = vlaneseq
  %v2274 = vshrl.u32 %v2273, 7
  %v2275 = vsub.s32 0, %v2274
  %v2276 = vrot.slane %v2271, %v2275
  %v2278 = vmul.f32 %v2061, %v2276
  %v2279 = vadd.f32 %v2278, %v2166
  %v2280 = vsub.f32 0.0, %v2279
  %v2281 = vmul.f32 %v2280, 1.442695
  %v2282 = vpow.pop %v2281
  %v2283 = vadd.f32 %v2282, 1.0
  %v2284 = vrcp.pop %v2283
  %v2285 = vmul.f32 1.0, %v2284
  %v2286 = vmul.f32 %v2285, %v2182
  %v2287 = vadd.f32 %v2176, %v2286
  %v2288 = vmul.f32 %v2285, %v2285
  %v2289 = vmul.f32 %v2288, %v2187
  %v2290 = vadd.f32 %v2179, %v2289
  %v2291 = vmul.f32 %v2287, 0.001953125
  %v2292 = vmul.f32 %v2290, 0.001953125
  %v2293 = vmul.f32 %v2291, %v2291
  %v2294 = vsub.f32 %v2292, %v2293
  %v2295 = vmax.f32 %v2294, 0.0
  %v2296 = vadd.f32 %v2295, 1e-05
  %v2297 = vrsqrt.pop %v2296
  %2299 = vrot.lane.b32.xlu0 %v2297, 4
  %v2300 = vpop.permute.xlu0 %2299
  %v2302 = vmul.f32 %v54, %v2300
  %2304 = vrot.lane.b32.xlu0 %v2302, 124
  %v2305 = vpop.permute.xlu0 %2304
  %v2307 = vmul.f32 %v2291, %v2305
  %2309 = vrot.lane.b32.xlu0 %v2307, 5
  %v2310 = vpop.permute.xlu0 %2309
  %v2312 = vsub.f32 %v54, %v2310
  %v2313 = vmul.f32 %v2174, %v2305
  %2315 = vset.pattern.permute.xlu0 0
  %2316 = vperm.xlu0 %2315, %v2313
  %v2317 = vpop.permute.xlu0 %2316
  %v2319 = vmul.f32 %v2056, %v2317
  %v2320 = vmul.f32 %v2057, %v2317
  %2322 = vset.pattern.permute.xlu0 5
  %2323 = vperm.xlu0 %2322, %v2312
  %v2324 = vpop.permute.xlu0 %2323
  %v2326 = vadd.f32 %v2319, %v2324
  %v2327 = vadd.f32 %v2320, %v2324
  %vm2328 = vcmp.ge.f32.partialorder %v2326, 0.0
  %vm2329 = vcmp.ge.f32.partialorder %v2327, 0.0
  %v2330 = vmul.f32 %v2326, 0.01
  %v2331 = vmul.f32 %v2327, 0.01
  %v2332 = vsel %vm2328, %v2326, %v2330
  %v2333 = vsel %vm2329, %v2327, %v2331
  %2334 = vst [vmem:[%s12] sm:$0xff] %v2332
  %2335 = vst [vmem:[%s12 + $0x8] sm:$0xff] %v2333
  %v2336 = vmul.f32 %v2285, %v2305
  %2338 = vset.pattern.permute.xlu0 0
  %2339 = vperm.xlu0 %2338, %v2336
  %v2340 = vpop.permute.xlu0 %2339
  %v2342 = vmul.f32 %v2058, %v2340
  %v2343 = vmul.f32 %v2059, %v2340
  %v2344 = vadd.f32 %v2342, %v2324
  %v2345 = vadd.f32 %v2343, %v2324
  %vm2346 = vcmp.ge.f32.partialorder %v2344, 0.0
  %vm2347 = vcmp.ge.f32.partialorder %v2345, 0.0
  %v2348 = vmul.f32 %v2344, 0.01
  %v2349 = vmul.f32 %v2345, 0.01
  %v2350 = vsel %vm2346, %v2344, %v2348
  %v2351 = vsel %vm2347, %v2345, %v2349
  %2352 = vst [vmem:[%s12 + $0x10] sm:$0xff] %v2350
  %2353 = vst [vmem:[%s12 + $0x18] sm:$0xff] %v2351
  // Predicated region
  $region50: #{pcblock_forward.1} parent=0 // pred_check
    _
  $region51: #{pcblock_forward.1} parent=0 // pred_check_branch
    %2355 = sbr.rel (0) target = $region53
  $region52: #{pcblock_forward.1} parent=0 // pred_region
    _
  $region53: #{pcblock_forward.1} parent=0 // pred_fallthru
    _
  // Predicated region
  $region54: #{pcblock_forward.1} parent=0 // pred_check
    _
  $region55: #{pcblock_forward.1} parent=0 // pred_check_branch
    %2357 = sbr.rel (0) target = $region57
  $region56: #{pcblock_forward.1} parent=0 // pred_region
    _
  $region57: #{pcblock_forward.1} parent=0 // pred_fallthru
    _

</llo_original>
